<compile_context>
chip_gen: v7x
topology: tpu7x:2x2x1
jax: 0.10.0
libtpu: 0.0.40
codegen_flags: <defaults>
</compile_context>

<pallas_src>
import numpy as np
import jax
import jax.numpy as jnp
from jax.experimental import pallas as pl
from jax.experimental.pallas import tpu as pltpu


def _dot_interact_kernel(dense_ref, sparse_ref, out_ref):
    # dense_ref : [TB, D]
    # sparse_ref: [TB, S, D]
    # out_ref   : [TB, D + (S+1)(S+2)/2]   == cat(dense, triu(gram)) row-major
    dense = dense_ref[...]
    sparse = sparse_ref[...]
    D = dense.shape[-1]
    S = sparse.shape[1]
    f32 = jnp.float32
    od = out_ref.dtype

    dense_f = dense.astype(f32)

    # gram[0, 0] : dense . dense  (VPU multiply + XLU lane reduce)
    dd = jnp.sum(dense_f * dense_f, axis=-1, keepdims=True)            # [TB, 1]

    # gram[0, 1:] : dense . sparse_j  (VPU multiply + XLU lane reduce; keeps the
    # MXU free for the ss block and avoids per-example MXU weight reloads)
    ds = jnp.sum(dense_f[:, None, :] * sparse.astype(f32), axis=-1)    # [TB, S]

    # gram[1:, 1:] : sparse @ sparse^T  (batched MXU matmul, contraction on the
    # lane axis, native input dtype, f32 accumulation)
    ss = jax.lax.dot_general(
        sparse, sparse,
        dimension_numbers=(((2,), (2,)), ((0,), (0,))),
        preferred_element_type=f32)                                     # [TB, S, S]

    # Fused final concat: dense passthrough in lanes [0, D)
    out_ref[:, :D] = dense.astype(od)
    # Row 0 of the upper triangle: (0,0), (0,1), ..., (0,S)
    out_ref[:, D:D + 1] = dd.astype(od)
    out_ref[:, D + 1:D + 1 + S] = ds.astype(od)
    # Rows 1..S of the upper triangle: (r, r), ..., (r, S)  -> ss[r-1, r-1:]
    off = D + 1 + S
    for r in range(S):                      # static, row-major triu gather
        w = S - r
        out_ref[:, off:off + w] = ss[:, r, r:].astype(od)
        off += w


def _pick_batch_tile(B, S, D, W, dtype, vmem_limit_bytes, cap=1024):
    """Largest sublane-aligned divisor of B whose tile footprint fits VMEM."""
    sublane = 16 if jnp.dtype(dtype) == jnp.dtype(jnp.bfloat16) else 8
    item = jnp.dtype(dtype).itemsize
    # Per-row VMEM footprint: double-buffered in/out tiles + f32 intermediates.
    per_row = 2 * (D + S * D + W) * item + 4 * (S * S + S + 1 + D)
    budget = vmem_limit_bytes // 2
    cap = min(cap, max(sublane, budget // max(per_row, 1)))
    cap -= cap % sublane
    cap = max(cap, sublane)
    if B <= cap:
        return B
    t = cap
    while t >= sublane:
        if B % t == 0:
            return t
        t -= sublane
    return B


def dot_interact(dense_features, sparse_features, *, batch_tile=None,
                 vmem_limit_bytes=48 * 1024 * 1024):
    """JAX/Pallas equivalent of DotInteract.forward."""
    B, D = dense_features.shape
    B2, S, D2 = sparse_features.shape
    assert B == B2 and D == D2
    F = S + 1
    W = D + F * (F + 1) // 2
    out_dtype = dense_features.dtype
    sublane = 16 if jnp.dtype(out_dtype) == jnp.dtype(jnp.bfloat16) else 8

    if batch_tile is None:
        batch_tile = _pick_batch_tile(B, S, D, W, out_dtype, vmem_limit_bytes)
    if B % batch_tile != 0:
        raise ValueError(f"batch_tile={batch_tile} must divide B={B}")
    if batch_tile != B and batch_tile % sublane != 0:
        raise ValueError(
            f"batch_tile must be a multiple of {sublane} for dtype {out_dtype}"
            " or equal B")

    itemsize = jnp.dtype(out_dtype).itemsize
    cost = pl.CostEstimate(
        flops=2 * B * D * (S * S + S + 1),
        transcendentals=0,
        bytes_accessed=(B * D + B * S * D + B * W) * itemsize)

    return pl.pallas_call(
        _dot_interact_kernel,
        out_shape=jax.ShapeDtypeStruct((B, W), out_dtype),
        grid=(B // batch_tile,),
        in_specs=[
            pl.BlockSpec((batch_tile, D), lambda i: (i, 0)),
            pl.BlockSpec((batch_tile, S, D), lambda i: (i, 0, 0)),
        ],
        out_specs=pl.BlockSpec((batch_tile, W), lambda i: (i, 0)),
        compiler_params=pltpu.CompilerParams(
            dimension_semantics=("parallel",),
            vmem_limit_bytes=vmem_limit_bytes,
        ),
        cost_estimate=cost,
    )(dense_features, sparse_features)


def _reference(dense, sparse):
    combined = jnp.concatenate([dense[:, None, :].astype(jnp.float32),
                                sparse.astype(jnp.float32)], axis=1)
    gram = jnp.einsum("bfd,bgd->bfg", combined, combined,
                      precision=jax.lax.Precision.HIGHEST)
    F = combined.shape[1]
    tri_r, tri_c = np.triu_indices(F)
    return jnp.concatenate([dense.astype(jnp.float32), gram[:, tri_r, tri_c]],
                           axis=1)


if __name__ == "__main__":
    # Small shapes consistent with the module: B=32, num_sparse_features=7, D=16.
    B, S, D = 32, 7, 16
    key = jax.random.PRNGKey(0)
    k1, k2 = jax.random.split(key)
    dense = jax.random.normal(k1, (B, D), dtype=jnp.float32)
    sparse = jax.random.normal(k2, (B, S, D), dtype=jnp.float32)

    ref = jax.block_until_ready(_reference(dense, sparse))
    W = D + (S + 1) * (S + 2) // 2

    # Default tiling (single grid step for this small B).
    out1 = jax.block_until_ready(dot_interact(dense, sparse))
    assert out1.shape == (B, W), out1.shape
    np.testing.assert_allclose(np.asarray(out1), np.asarray(ref),
                               rtol=1e-4, atol=1e-4)

    # Multi-tile grid path (grid = 4, exercises megacore-parallel batch tiling).
    out2 = jax.block_until_ready(dot_interact(dense, sparse, batch_tile=8))
    np.testing.assert_allclose(np.asarray(out2), np.asarray(ref),
                               rtol=1e-4, atol=1e-4)

    # bf16 fast path (native-dtype MXU matmul, f32 accumulation).
    out3 = jax.block_until_ready(
        dot_interact(dense.astype(jnp.bfloat16), sparse.astype(jnp.bfloat16)))
    np.testing.assert_allclose(np.asarray(out3, dtype=np.float32),
                               np.asarray(ref), rtol=5e-2, atol=5e-2)

    print("KERNEL_OK")
</pallas_src>

<mosaic_0001>
module attributes {stable_mosaic.version = 11 : i64} {
  func.func @_dot_interact_kernel(%arg0: i32, %arg1: memref<32x16xf32, #tpu.memory_space<vmem>>, %arg2: memref<32x7x16xf32, #tpu.memory_space<vmem>>, %arg3: memref<32x52xf32, #tpu.memory_space<vmem>>) attributes {dimension_semantics = [#tpu.dimension_semantics<parallel>], iteration_bounds = array<i64: 1>, scalar_prefetch = 0 : i64, scratch_operands = 0 : i64, tpu.core_type = #tpu.core_type<tc>, window_params = [{transform_indices = @transform_0, window_bounds = array<i64: 32, 16>}, {transform_indices = @transform_1, window_bounds = array<i64: 32, 7, 16>}, {transform_indices = @transform_2, window_bounds = array<i64: 32, 52>}]} {
    %c0 = arith.constant 0 : index
    %c0_0 = arith.constant 0 : index
    %0 = vector.load %arg1[%c0, %c0_0] : memref<32x16xf32, #tpu.memory_space<vmem>>, vector<32x16xf32>
    %c0_1 = arith.constant 0 : index
    %c0_2 = arith.constant 0 : index
    %c0_3 = arith.constant 0 : index
    %1 = vector.load %arg2[%c0_1, %c0_2, %c0_3] : memref<32x7x16xf32, #tpu.memory_space<vmem>>, vector<32x7x16xf32>
    %2 = arith.mulf %0, %0 : vector<32x16xf32>
    %cst = arith.constant dense<0.000000e+00> : vector<32xf32>
    %3 = vector.multi_reduction <add>, %2, %cst [1] : vector<32x16xf32> to vector<32xf32>
    %4 = vector.shape_cast %3 : vector<32xf32> to vector<32x1xf32>
    %5 = vector.shape_cast %0 : vector<32x16xf32> to vector<32x1x16xf32>
    %6 = vector.broadcast %5 : vector<32x1x16xf32> to vector<32x7x16xf32>
    %7 = arith.mulf %6, %1 : vector<32x7x16xf32>
    %cst_4 = arith.constant dense<0.000000e+00> : vector<32x7xf32>
    %8 = vector.multi_reduction <add>, %7, %cst_4 [2] : vector<32x7x16xf32> to vector<32x7xf32>
    %cst_5 = arith.constant dense<0.000000e+00> : vector<32x7x7xf32>
    %9 = tpu.matmul %1, %1, %cst_5 {dimension_numbers = #tpu.dot_dimension_numbers<[2], [2], [1], [1], [0, 0, 0, 1, 1, 1], [0], [0]>} : vector<32x7x16xf32>, vector<32x7x16xf32>, vector<32x7x7xf32> -> vector<32x7x7xf32>
    %c0_6 = arith.constant 0 : index
    %c0_7 = arith.constant 0 : index
    %10 = vector.load %arg3[%c0_6, %c0_7] : memref<32x52xf32, #tpu.memory_space<vmem>>, vector<32x16xf32>
    tpu.vector_store %arg3[%c0_6, %c0_7], %0 {strides = array<i32>} : memref<32x52xf32, #tpu.memory_space<vmem>>, vector<32x16xf32>,
    %c0_8 = arith.constant 0 : index
    %c16 = arith.constant 16 : index
    %11 = vector.load %arg3[%c0_8, %c16] : memref<32x52xf32, #tpu.memory_space<vmem>>, vector<32x1xf32>
    tpu.vector_store %arg3[%c0_8, %c16], %4 {strides = array<i32>} : memref<32x52xf32, #tpu.memory_space<vmem>>, vector<32x1xf32>,
    %c0_9 = arith.constant 0 : index
    %c17 = arith.constant 17 : index
    %12 = vector.load %arg3[%c0_9, %c17] : memref<32x52xf32, #tpu.memory_space<vmem>>, vector<32x7xf32>
    tpu.vector_store %arg3[%c0_9, %c17], %8 {strides = array<i32>} : memref<32x52xf32, #tpu.memory_space<vmem>>, vector<32x7xf32>,
    %13 = vector.extract_strided_slice %9 {offsets = [0, 0, 0], sizes = [32, 1, 7], strides = [1, 1, 1]} : vector<32x7x7xf32> to vector<32x1x7xf32>
    %14 = vector.shape_cast %13 : vector<32x1x7xf32> to vector<32x7xf32>
    %c0_10 = arith.constant 0 : index
    %c24 = arith.constant 24 : index
    %15 = vector.load %arg3[%c0_10, %c24] : memref<32x52xf32, #tpu.memory_space<vmem>>, vector<32x7xf32>
    tpu.vector_store %arg3[%c0_10, %c24], %14 {strides = array<i32>} : memref<32x52xf32, #tpu.memory_space<vmem>>, vector<32x7xf32>,
    %16 = vector.extract_strided_slice %9 {offsets = [0, 1, 1], sizes = [32, 1, 6], strides = [1, 1, 1]} : vector<32x7x7xf32> to vector<32x1x6xf32>
    %17 = vector.shape_cast %16 : vector<32x1x6xf32> to vector<32x6xf32>
    %c0_11 = arith.constant 0 : index
    %c31 = arith.constant 31 : index
    %18 = vector.load %arg3[%c0_11, %c31] : memref<32x52xf32, #tpu.memory_space<vmem>>, vector<32x6xf32>
    tpu.vector_store %arg3[%c0_11, %c31], %17 {strides = array<i32>} : memref<32x52xf32, #tpu.memory_space<vmem>>, vector<32x6xf32>,
    %19 = vector.extract_strided_slice %9 {offsets = [0, 2, 2], sizes = [32, 1, 5], strides = [1, 1, 1]} : vector<32x7x7xf32> to vector<32x1x5xf32>
    %20 = vector.shape_cast %19 : vector<32x1x5xf32> to vector<32x5xf32>
    %c0_12 = arith.constant 0 : index
    %c37 = arith.constant 37 : index
    %21 = vector.load %arg3[%c0_12, %c37] : memref<32x52xf32, #tpu.memory_space<vmem>>, vector<32x5xf32>
    tpu.vector_store %arg3[%c0_12, %c37], %20 {strides = array<i32>} : memref<32x52xf32, #tpu.memory_space<vmem>>, vector<32x5xf32>,
    %22 = vector.extract_strided_slice %9 {offsets = [0, 3, 3], sizes = [32, 1, 4], strides = [1, 1, 1]} : vector<32x7x7xf32> to vector<32x1x4xf32>
    %23 = vector.shape_cast %22 : vector<32x1x4xf32> to vector<32x4xf32>
    %c0_13 = arith.constant 0 : index
    %c42 = arith.constant 42 : index
    %24 = vector.load %arg3[%c0_13, %c42] : memref<32x52xf32, #tpu.memory_space<vmem>>, vector<32x4xf32>
    tpu.vector_store %arg3[%c0_13, %c42], %23 {strides = array<i32>} : memref<32x52xf32, #tpu.memory_space<vmem>>, vector<32x4xf32>,
    %25 = vector.extract_strided_slice %9 {offsets = [0, 4, 4], sizes = [32, 1, 3], strides = [1, 1, 1]} : vector<32x7x7xf32> to vector<32x1x3xf32>
    %26 = vector.shape_cast %25 : vector<32x1x3xf32> to vector<32x3xf32>
    %c0_14 = arith.constant 0 : index
    %c46 = arith.constant 46 : index
    %27 = vector.load %arg3[%c0_14, %c46] : memref<32x52xf32, #tpu.memory_space<vmem>>, vector<32x3xf32>
    tpu.vector_store %arg3[%c0_14, %c46], %26 {strides = array<i32>} : memref<32x52xf32, #tpu.memory_space<vmem>>, vector<32x3xf32>,
    %28 = vector.extract_strided_slice %9 {offsets = [0, 5, 5], sizes = [32, 1, 2], strides = [1, 1, 1]} : vector<32x7x7xf32> to vector<32x1x2xf32>
    %29 = vector.shape_cast %28 : vector<32x1x2xf32> to vector<32x2xf32>
    %c0_15 = arith.constant 0 : index
    %c49 = arith.constant 49 : index
    %30 = vector.load %arg3[%c0_15, %c49] : memref<32x52xf32, #tpu.memory_space<vmem>>, vector<32x2xf32>
    tpu.vector_store %arg3[%c0_15, %c49], %29 {strides = array<i32>} : memref<32x52xf32, #tpu.memory_space<vmem>>, vector<32x2xf32>,
    %31 = vector.extract_strided_slice %9 {offsets = [0, 6, 6], sizes = [32, 1, 1], strides = [1, 1, 1]} : vector<32x7x7xf32> to vector<32x1x1xf32>
    %32 = vector.shape_cast %31 : vector<32x1x1xf32> to vector<32x1xf32>
    %c0_16 = arith.constant 0 : index
    %c51 = arith.constant 51 : index
    %33 = vector.load %arg3[%c0_16, %c51] : memref<32x52xf32, #tpu.memory_space<vmem>>, vector<32x1xf32>
    tpu.vector_store %arg3[%c0_16, %c51], %32 {strides = array<i32>} : memref<32x52xf32, #tpu.memory_space<vmem>>, vector<32x1xf32>,
    return
  }
  func.func @transform_0(%arg0: i32) -> (i32, i32) {
    %c0_i32 = arith.constant 0 : i32
    %c0_i32_0 = arith.constant 0 : i32
    return %arg0, %c0_i32 : i32, i32
  }
  func.func @transform_1(%arg0: i32) -> (i32, i32, i32) {
    %c0_i32 = arith.constant 0 : i32
    %c0_i32_0 = arith.constant 0 : i32
    %c0_i32_1 = arith.constant 0 : i32
    return %arg0, %c0_i32, %c0_i32_0 : i32, i32, i32
  }
  func.func @transform_2(%arg0: i32) -> (i32, i32) {
    %c0_i32 = arith.constant 0 : i32
    %c0_i32_0 = arith.constant 0 : i32
    return %arg0, %c0_i32 : i32, i32
  }
}

</mosaic_0001>

<llo_original>
// kernel: tpu_custom_call.1
$region0: #{tpu_custom_call.1}
  #allocation0 [shape = 'u32[]', space=smem, size = 0x4, offset = 0x4, fixed_abs, tag = 'smem constant byte address 0x4 - core index']
  #allocation1 [shape = 'u32[144,128]{1,0:T(1,128)}', space=vmem, size = 0x12000, scoped, tag = 'internal scratch']
  %s0 = inlined_call_operand.vmem [shape: f32[32,16], index: 0, kind: input, shape index: {}]
  %s1 = inlined_call_operand.vmem [shape: f32[32,7,16], index: 1, kind: input, shape index: {}]
  %s2 = inlined_call_operand.hbm [shape: f32[32,52], index: 2, kind: output, shape index: {}]
  %s3 = sld [smem:[#allocation0]]
  $region18: #{tpu_custom_call.1} parent=0
    _
  %s5 = ssub.s32 1, %s3
  %s6 = scalar_select 0, %s5, %s3
  $region1: #{tpu_custom_call.1} parent=0
    #allocation2 [shape = 'u8[16384]{0}', space=vmem, size = 0x4000, scoped, tag = 'output window, operand 0, single buffered']
    #allocation3 [shape = 's32[1]{0}', space=sflag, size = 0x4, scoped, tag = 'scoped memory for tpu_custom_call.1']
    %7 = vsyncpa [#allocation3], 0
    // Predicated region
    $region2: #{tpu_custom_call.1} parent=1 // pred_check
      _
    $region3: #{tpu_custom_call.1} parent=1 // pred_check_branch
      %9 = sbr.rel (0) target = $region5
    $region4: #{tpu_custom_call.1} parent=1 // pred_region
      _
    $region5: #{tpu_custom_call.1} parent=1 // pred_fallthru
      _
    // Predicated region
    $region6: #{tpu_custom_call.1} parent=1 // pred_check
      _
    $region7: #{tpu_custom_call.1} parent=1 // pred_check_branch
      %11 = sbr.rel (0) target = $region9
    $region8: #{tpu_custom_call.1} parent=1 // pred_region
      _
    $region9: #{tpu_custom_call.1} parent=1 // pred_fallthru
      _
    %v12 = vld [vmem:[%s0] sm:$0xff]
    %v13 = vld [vmem:[%s0 + $0x8] sm:$0xff]
    %v14 = vld [vmem:[%s0 + $0x10] sm:$0xff]
    %v15 = vld [vmem:[%s0 + $0x18] sm:$0xff]
    %v16 = vld [vmem:[%s1] sm:$0x7f]
    %v17 = vld [vmem:[%s1 + $0x8] sm:$0x7f]
    %v18 = vld [vmem:[%s1 + $0x10] sm:$0x7f]
    %v19 = vld [vmem:[%s1 + $0x18] sm:$0x7f]
    %v20 = vld [vmem:[%s1 + $0x20] sm:$0x7f]
    %v21 = vld [vmem:[%s1 + $0x28] sm:$0x7f]
    %v22 = vld [vmem:[%s1 + $0x30] sm:$0x7f]
    %v23 = vld [vmem:[%s1 + $0x38] sm:$0x7f]
    %v24 = vld [vmem:[%s1 + $0x40] sm:$0x7f]
    %v25 = vld [vmem:[%s1 + $0x48] sm:$0x7f]
    %v26 = vld [vmem:[%s1 + $0x50] sm:$0x7f]
    %v27 = vld [vmem:[%s1 + $0x58] sm:$0x7f]
    %v28 = vld [vmem:[%s1 + $0x60] sm:$0x7f]
    %v29 = vld [vmem:[%s1 + $0x68] sm:$0x7f]
    %v30 = vld [vmem:[%s1 + $0x70] sm:$0x7f]
    %v31 = vld [vmem:[%s1 + $0x78] sm:$0x7f]
    %v32 = vld [vmem:[%s1 + $0x80] sm:$0x7f]
    %v33 = vld [vmem:[%s1 + $0x88] sm:$0x7f]
    %v34 = vld [vmem:[%s1 + $0x90] sm:$0x7f]
    %v35 = vld [vmem:[%s1 + $0x98] sm:$0x7f]
    %v36 = vld [vmem:[%s1 + $0xa0] sm:$0x7f]
    %v37 = vld [vmem:[%s1 + $0xa8] sm:$0x7f]
    %v38 = vld [vmem:[%s1 + $0xb0] sm:$0x7f]
    %v39 = vld [vmem:[%s1 + $0xb8] sm:$0x7f]
    %v40 = vld [vmem:[%s1 + $0xc0] sm:$0x7f]
    %v41 = vld [vmem:[%s1 + $0xc8] sm:$0x7f]
    %v42 = vld [vmem:[%s1 + $0xd0] sm:$0x7f]
    %v43 = vld [vmem:[%s1 + $0xd8] sm:$0x7f]
    %v44 = vld [vmem:[%s1 + $0xe0] sm:$0x7f]
    %v45 = vld [vmem:[%s1 + $0xe8] sm:$0x7f]
    %v46 = vld [vmem:[%s1 + $0xf0] sm:$0x7f]
    %v47 = vld [vmem:[%s1 + $0xf8] sm:$0x7f]
    %v48 = vmul.f32 %v12, %v12
    %v49 = vmul.f32 %v13, %v13
    %v50 = vmul.f32 %v14, %v14
    %v51 = vmul.f32 %v15, %v15
    %vm52 = vcmask 130048
    %v53 = vsel %vm52, %v48, 0.0
    %54 = vadd.xlane.f32.xlu0 %v53
    %v55 = vpop.xlane.xlu0 %54
    %v56 = vsel %vm52, %v49, 0.0
    %57 = vadd.xlane.f32.xlu0 %v56
    %v58 = vpop.xlane.xlu0 %57
    %v59 = vsel %vm52, %v50, 0.0
    %60 = vadd.xlane.f32.xlu0 %v59
    %v61 = vpop.xlane.xlu0 %60
    %v62 = vsel %vm52, %v51, 0.0
    %63 = vadd.xlane.f32.xlu0 %v62
    %v64 = vpop.xlane.xlu0 %63
    %v69 = vcombine.high %v12, %v12
    %v71 = vunpack.c.l.s4 1966171168
    %v72 = vunpack.c.0.s8 %v71
    %v73 = vlaneseq
    %v74 = vshrl.u32 %v73, 7
    %v75 = vsub.s32 %v72, %v74
    %v76 = vrot.slane %v12, %v75
    %v78 = vunpack.c.l.s4 1966171168
    %v79 = vunpack.c.0.s8 %v78
    %v80 = vlaneseq
    %v81 = vshrl.u32 %v80, 7
    %v82 = vsub.s32 %v79, %v81
    %v83 = vrot.slane %v69, %v82
    %v84 = vcombine.high %v76, %v76
    %v85 = vcombine.high %v83, %v83
    %v87 = vunpack.c.l.s4 1966171168
    %v88 = vunpack.c.0.s8 %v87
    %v89 = vlaneseq
    %v90 = vshrl.u32 %v89, 7
    %v91 = vsub.s32 %v88, %v90
    %v92 = vrot.slane %v76, %v91
    %v94 = vunpack.c.l.s4 1966171168
    %v95 = vunpack.c.0.s8 %v94
    %v96 = vlaneseq
    %v97 = vshrl.u32 %v96, 7
    %v98 = vsub.s32 %v95, %v97
    %v99 = vrot.slane %v83, %v98
    %v101 = vunpack.c.l.s4 1966171168
    %v102 = vunpack.c.0.s8 %v101
    %v103 = vlaneseq
    %v104 = vshrl.u32 %v103, 7
    %v105 = vsub.s32 %v102, %v104
    %v106 = vrot.slane %v84, %v105
    %v108 = vunpack.c.l.s4 1966171168
    %v109 = vunpack.c.0.s8 %v108
    %v110 = vlaneseq
    %v111 = vshrl.u32 %v110, 7
    %v112 = vsub.s32 %v109, %v111
    %v113 = vrot.slane %v85, %v112
    %v114 = vcombine.high %v92, %v92
    %v115 = vcombine.high %v99, %v99
    %v116 = vcombine.high %v106, %v106
    %v117 = vcombine.high %v113, %v113
    %v118 = vcombine.high %v13, %v13
    %v120 = vunpack.c.l.s4 1966171168
    %v121 = vunpack.c.0.s8 %v120
    %v122 = vlaneseq
    %v123 = vshrl.u32 %v122, 7
    %v124 = vsub.s32 %v121, %v123
    %v125 = vrot.slane %v13, %v124
    %v127 = vunpack.c.l.s4 1966171168
    %v128 = vunpack.c.0.s8 %v127
    %v129 = vlaneseq
    %v130 = vshrl.u32 %v129, 7
    %v131 = vsub.s32 %v128, %v130
    %v132 = vrot.slane %v118, %v131
    %v133 = vcombine.high %v125, %v125
    %v134 = vcombine.high %v132, %v132
    %v136 = vunpack.c.l.s4 1966171168
    %v137 = vunpack.c.0.s8 %v136
    %v138 = vlaneseq
    %v139 = vshrl.u32 %v138, 7
    %v140 = vsub.s32 %v137, %v139
    %v141 = vrot.slane %v125, %v140
    %v143 = vunpack.c.l.s4 1966171168
    %v144 = vunpack.c.0.s8 %v143
    %v145 = vlaneseq
    %v146 = vshrl.u32 %v145, 7
    %v147 = vsub.s32 %v144, %v146
    %v148 = vrot.slane %v132, %v147
    %v150 = vunpack.c.l.s4 1966171168
    %v151 = vunpack.c.0.s8 %v150
    %v152 = vlaneseq
    %v153 = vshrl.u32 %v152, 7
    %v154 = vsub.s32 %v151, %v153
    %v155 = vrot.slane %v133, %v154
    %v157 = vunpack.c.l.s4 1966171168
    %v158 = vunpack.c.0.s8 %v157
    %v159 = vlaneseq
    %v160 = vshrl.u32 %v159, 7
    %v161 = vsub.s32 %v158, %v160
    %v162 = vrot.slane %v134, %v161
    %v163 = vcombine.high %v141, %v141
    %v164 = vcombine.high %v148, %v148
    %v165 = vcombine.high %v155, %v155
    %v166 = vcombine.high %v162, %v162
    %v167 = vcombine.high %v14, %v14
    %v169 = vunpack.c.l.s4 1966171168
    %v170 = vunpack.c.0.s8 %v169
    %v171 = vlaneseq
    %v172 = vshrl.u32 %v171, 7
    %v173 = vsub.s32 %v170, %v172
    %v174 = vrot.slane %v14, %v173
    %v176 = vunpack.c.l.s4 1966171168
    %v177 = vunpack.c.0.s8 %v176
    %v178 = vlaneseq
    %v179 = vshrl.u32 %v178, 7
    %v180 = vsub.s32 %v177, %v179
    %v181 = vrot.slane %v167, %v180
    %v182 = vcombine.high %v174, %v174
    %v183 = vcombine.high %v181, %v181
    %v185 = vunpack.c.l.s4 1966171168
    %v186 = vunpack.c.0.s8 %v185
    %v187 = vlaneseq
    %v188 = vshrl.u32 %v187, 7
    %v189 = vsub.s32 %v186, %v188
    %v190 = vrot.slane %v174, %v189
    %v192 = vunpack.c.l.s4 1966171168
    %v193 = vunpack.c.0.s8 %v192
    %v194 = vlaneseq
    %v195 = vshrl.u32 %v194, 7
    %v196 = vsub.s32 %v193, %v195
    %v197 = vrot.slane %v181, %v196
    %v199 = vunpack.c.l.s4 1966171168
    %v200 = vunpack.c.0.s8 %v199
    %v201 = vlaneseq
    %v202 = vshrl.u32 %v201, 7
    %v203 = vsub.s32 %v200, %v202
    %v204 = vrot.slane %v182, %v203
    %v206 = vunpack.c.l.s4 1966171168
    %v207 = vunpack.c.0.s8 %v206
    %v208 = vlaneseq
    %v209 = vshrl.u32 %v208, 7
    %v210 = vsub.s32 %v207, %v209
    %v211 = vrot.slane %v183, %v210
    %v212 = vcombine.high %v190, %v190
    %v213 = vcombine.high %v197, %v197
    %v214 = vcombine.high %v204, %v204
    %v215 = vcombine.high %v211, %v211
    %v216 = vcombine.high %v15, %v15
    %v218 = vunpack.c.l.s4 1966171168
    %v219 = vunpack.c.0.s8 %v218
    %v220 = vlaneseq
    %v221 = vshrl.u32 %v220, 7
    %v222 = vsub.s32 %v219, %v221
    %v223 = vrot.slane %v15, %v222
    %v225 = vunpack.c.l.s4 1966171168
    %v226 = vunpack.c.0.s8 %v225
    %v227 = vlaneseq
    %v228 = vshrl.u32 %v227, 7
    %v229 = vsub.s32 %v226, %v228
    %v230 = vrot.slane %v216, %v229
    %v231 = vcombine.high %v223, %v223
    %v232 = vcombine.high %v230, %v230
    %v234 = vunpack.c.l.s4 1966171168
    %v235 = vunpack.c.0.s8 %v234
    %v236 = vlaneseq
    %v237 = vshrl.u32 %v236, 7
    %v238 = vsub.s32 %v235, %v237
    %v239 = vrot.slane %v223, %v238
    %v241 = vunpack.c.l.s4 1966171168
    %v242 = vunpack.c.0.s8 %v241
    %v243 = vlaneseq
    %v244 = vshrl.u32 %v243, 7
    %v245 = vsub.s32 %v242, %v244
    %v246 = vrot.slane %v230, %v245
    %v248 = vunpack.c.l.s4 1966171168
    %v249 = vunpack.c.0.s8 %v248
    %v250 = vlaneseq
    %v251 = vshrl.u32 %v250, 7
    %v252 = vsub.s32 %v249, %v251
    %v253 = vrot.slane %v231, %v252
    %v255 = vunpack.c.l.s4 1966171168
    %v256 = vunpack.c.0.s8 %v255
    %v257 = vlaneseq
    %v258 = vshrl.u32 %v257, 7
    %v259 = vsub.s32 %v256, %v258
    %v260 = vrot.slane %v232, %v259
    %v261 = vcombine.high %v239, %v239
    %v262 = vcombine.high %v246, %v246
    %v263 = vcombine.high %v253, %v253
    %v264 = vcombine.high %v260, %v260
    %v265 = vlaneseq
    %v266 = vshrl.u32 %v265, 7
    %v267 = vsub.s32 0, %v266
    %v268 = vrot.slane %v92, %v267
    %v269 = vlaneseq
    %v270 = vshrl.u32 %v269, 7
    %v271 = vsub.s32 0, %v270
    %v272 = vrot.slane %v106, %v271
    %v273 = vlaneseq
    %v274 = vshrl.u32 %v273, 7
    %v275 = vsub.s32 0, %v274
    %v276 = vrot.slane %v114, %v275
    %v277 = vlaneseq
    %v278 = vshrl.u32 %v277, 7
    %v279 = vsub.s32 0, %v278
    %v280 = vrot.slane %v116, %v279
    %v281 = vlaneseq
    %v282 = vshrl.u32 %v281, 7
    %v283 = vsub.s32 0, %v282
    %v284 = vrot.slane %v99, %v283
    %v285 = vlaneseq
    %v286 = vshrl.u32 %v285, 7
    %v287 = vsub.s32 0, %v286
    %v288 = vrot.slane %v113, %v287
    %v289 = vlaneseq
    %v290 = vshrl.u32 %v289, 7
    %v291 = vsub.s32 0, %v290
    %v292 = vrot.slane %v115, %v291
    %v293 = vlaneseq
    %v294 = vshrl.u32 %v293, 7
    %v295 = vsub.s32 0, %v294
    %v296 = vrot.slane %v117, %v295
    %v297 = vlaneseq
    %v298 = vshrl.u32 %v297, 7
    %v299 = vsub.s32 0, %v298
    %v300 = vrot.slane %v141, %v299
    %v301 = vlaneseq
    %v302 = vshrl.u32 %v301, 7
    %v303 = vsub.s32 0, %v302
    %v304 = vrot.slane %v155, %v303
    %v305 = vlaneseq
    %v306 = vshrl.u32 %v305, 7
    %v307 = vsub.s32 0, %v306
    %v308 = vrot.slane %v163, %v307
    %v309 = vlaneseq
    %v310 = vshrl.u32 %v309, 7
    %v311 = vsub.s32 0, %v310
    %v312 = vrot.slane %v165, %v311
    %v313 = vlaneseq
    %v314 = vshrl.u32 %v313, 7
    %v315 = vsub.s32 0, %v314
    %v316 = vrot.slane %v148, %v315
    %v317 = vlaneseq
    %v318 = vshrl.u32 %v317, 7
    %v319 = vsub.s32 0, %v318
    %v320 = vrot.slane %v162, %v319
    %v321 = vlaneseq
    %v322 = vshrl.u32 %v321, 7
    %v323 = vsub.s32 0, %v322
    %v324 = vrot.slane %v164, %v323
    %v325 = vlaneseq
    %v326 = vshrl.u32 %v325, 7
    %v327 = vsub.s32 0, %v326
    %v328 = vrot.slane %v166, %v327
    %v329 = vlaneseq
    %v330 = vshrl.u32 %v329, 7
    %v331 = vsub.s32 0, %v330
    %v332 = vrot.slane %v190, %v331
    %v333 = vlaneseq
    %v334 = vshrl.u32 %v333, 7
    %v335 = vsub.s32 0, %v334
    %v336 = vrot.slane %v204, %v335
    %v337 = vlaneseq
    %v338 = vshrl.u32 %v337, 7
    %v339 = vsub.s32 0, %v338
    %v340 = vrot.slane %v212, %v339
    %v341 = vlaneseq
    %v342 = vshrl.u32 %v341, 7
    %v343 = vsub.s32 0, %v342
    %v344 = vrot.slane %v214, %v343
    %v345 = vlaneseq
    %v346 = vshrl.u32 %v345, 7
    %v347 = vsub.s32 0, %v346
    %v348 = vrot.slane %v197, %v347
    %v349 = vlaneseq
    %v350 = vshrl.u32 %v349, 7
    %v351 = vsub.s32 0, %v350
    %v352 = vrot.slane %v211, %v351
    %v353 = vlaneseq
    %v354 = vshrl.u32 %v353, 7
    %v355 = vsub.s32 0, %v354
    %v356 = vrot.slane %v213, %v355
    %v357 = vlaneseq
    %v358 = vshrl.u32 %v357, 7
    %v359 = vsub.s32 0, %v358
    %v360 = vrot.slane %v215, %v359
    %v361 = vlaneseq
    %v362 = vshrl.u32 %v361, 7
    %v363 = vsub.s32 0, %v362
    %v364 = vrot.slane %v239, %v363
    %v365 = vlaneseq
    %v366 = vshrl.u32 %v365, 7
    %v367 = vsub.s32 0, %v366
    %v368 = vrot.slane %v253, %v367
    %v369 = vlaneseq
    %v370 = vshrl.u32 %v369, 7
    %v371 = vsub.s32 0, %v370
    %v372 = vrot.slane %v261, %v371
    %v373 = vlaneseq
    %v374 = vshrl.u32 %v373, 7
    %v375 = vsub.s32 0, %v374
    %v376 = vrot.slane %v263, %v375
    %v377 = vlaneseq
    %v378 = vshrl.u32 %v377, 7
    %v379 = vsub.s32 0, %v378
    %v380 = vrot.slane %v246, %v379
    %v381 = vlaneseq
    %v382 = vshrl.u32 %v381, 7
    %v383 = vsub.s32 0, %v382
    %v384 = vrot.slane %v260, %v383
    %v385 = vlaneseq
    %v386 = vshrl.u32 %v385, 7
    %v387 = vsub.s32 0, %v386
    %v388 = vrot.slane %v262, %v387
    %v389 = vlaneseq
    %v390 = vshrl.u32 %v389, 7
    %v391 = vsub.s32 0, %v390
    %v392 = vrot.slane %v264, %v391
    %v425 = vmul.f32 %v268, %v16
    %v426 = vmul.f32 %v272, %v17
    %v427 = vmul.f32 %v276, %v18
    %v428 = vmul.f32 %v280, %v19
    %v429 = vmul.f32 %v284, %v20
    %v430 = vmul.f32 %v288, %v21
    %v431 = vmul.f32 %v292, %v22
    %v432 = vmul.f32 %v296, %v23
    %v433 = vmul.f32 %v300, %v24
    %v434 = vmul.f32 %v304, %v25
    %v435 = vmul.f32 %v308, %v26
    %v436 = vmul.f32 %v312, %v27
    %v437 = vmul.f32 %v316, %v28
    %v438 = vmul.f32 %v320, %v29
    %v439 = vmul.f32 %v324, %v30
    %v440 = vmul.f32 %v328, %v31
    %v441 = vmul.f32 %v332, %v32
    %v442 = vmul.f32 %v336, %v33
    %v443 = vmul.f32 %v340, %v34
    %v444 = vmul.f32 %v344, %v35
    %v445 = vmul.f32 %v348, %v36
    %v446 = vmul.f32 %v352, %v37
    %v447 = vmul.f32 %v356, %v38
    %v448 = vmul.f32 %v360, %v39
    %v449 = vmul.f32 %v364, %v40
    %v450 = vmul.f32 %v368, %v41
    %v451 = vmul.f32 %v372, %v42
    %v452 = vmul.f32 %v376, %v43
    %v453 = vmul.f32 %v380, %v44
    %v454 = vmul.f32 %v384, %v45
    %v455 = vmul.f32 %v388, %v46
    %v456 = vmul.f32 %v392, %v47
    %vm457 = vcmask 129024
    %v458 = vsel %vm457, %v425, 0.0
    %459 = vadd.xlane.f32.xlu0 %v458
    %v460 = vpop.xlane.xlu0 %459
    %v461 = vsel %vm457, %v426, 0.0
    %462 = vadd.xlane.f32.xlu0 %v461
    %v463 = vpop.xlane.xlu0 %462
    %v464 = vsel %vm457, %v427, 0.0
    %465 = vadd.xlane.f32.xlu0 %v464
    %v466 = vpop.xlane.xlu0 %465
    %v467 = vsel %vm457, %v428, 0.0
    %468 = vadd.xlane.f32.xlu0 %v467
    %v469 = vpop.xlane.xlu0 %468
    %v470 = vsel %vm457, %v429, 0.0
    %471 = vadd.xlane.f32.xlu0 %v470
    %v472 = vpop.xlane.xlu0 %471
    %v473 = vsel %vm457, %v430, 0.0
    %474 = vadd.xlane.f32.xlu0 %v473
    %v475 = vpop.xlane.xlu0 %474
    %v476 = vsel %vm457, %v431, 0.0
    %477 = vadd.xlane.f32.xlu0 %v476
    %v478 = vpop.xlane.xlu0 %477
    %v479 = vsel %vm457, %v432, 0.0
    %480 = vadd.xlane.f32.xlu0 %v479
    %v481 = vpop.xlane.xlu0 %480
    %v482 = vsel %vm457, %v433, 0.0
    %483 = vadd.xlane.f32.xlu0 %v482
    %v484 = vpop.xlane.xlu0 %483
    %v485 = vsel %vm457, %v434, 0.0
    %486 = vadd.xlane.f32.xlu0 %v485
    %v487 = vpop.xlane.xlu0 %486
    %v488 = vsel %vm457, %v435, 0.0
    %489 = vadd.xlane.f32.xlu0 %v488
    %v490 = vpop.xlane.xlu0 %489
    %v491 = vsel %vm457, %v436, 0.0
    %492 = vadd.xlane.f32.xlu0 %v491
    %v493 = vpop.xlane.xlu0 %492
    %v494 = vsel %vm457, %v437, 0.0
    %495 = vadd.xlane.f32.xlu0 %v494
    %v496 = vpop.xlane.xlu0 %495
    %v497 = vsel %vm457, %v438, 0.0
    %498 = vadd.xlane.f32.xlu0 %v497
    %v499 = vpop.xlane.xlu0 %498
    %v500 = vsel %vm457, %v439, 0.0
    %501 = vadd.xlane.f32.xlu0 %v500
    %v502 = vpop.xlane.xlu0 %501
    %v503 = vsel %vm457, %v440, 0.0
    %504 = vadd.xlane.f32.xlu0 %v503
    %v505 = vpop.xlane.xlu0 %504
    %v506 = vsel %vm457, %v441, 0.0
    %507 = vadd.xlane.f32.xlu0 %v506
    %v508 = vpop.xlane.xlu0 %507
    %v509 = vsel %vm457, %v442, 0.0
    %510 = vadd.xlane.f32.xlu0 %v509
    %v511 = vpop.xlane.xlu0 %510
    %v512 = vsel %vm457, %v443, 0.0
    %513 = vadd.xlane.f32.xlu0 %v512
    %v514 = vpop.xlane.xlu0 %513
    %v515 = vsel %vm457, %v444, 0.0
    %516 = vadd.xlane.f32.xlu0 %v515
    %v517 = vpop.xlane.xlu0 %516
    %v518 = vsel %vm457, %v445, 0.0
    %519 = vadd.xlane.f32.xlu0 %v518
    %v520 = vpop.xlane.xlu0 %519
    %v521 = vsel %vm457, %v446, 0.0
    %522 = vadd.xlane.f32.xlu0 %v521
    %v523 = vpop.xlane.xlu0 %522
    %v524 = vsel %vm457, %v447, 0.0
    %525 = vadd.xlane.f32.xlu0 %v524
    %v526 = vpop.xlane.xlu0 %525
    %v527 = vsel %vm457, %v448, 0.0
    %528 = vadd.xlane.f32.xlu0 %v527
    %v529 = vpop.xlane.xlu0 %528
    %v530 = vsel %vm457, %v449, 0.0
    %531 = vadd.xlane.f32.xlu0 %v530
    %v532 = vpop.xlane.xlu0 %531
    %v533 = vsel %vm457, %v450, 0.0
    %534 = vadd.xlane.f32.xlu0 %v533
    %v535 = vpop.xlane.xlu0 %534
    %v536 = vsel %vm457, %v451, 0.0
    %537 = vadd.xlane.f32.xlu0 %v536
    %v538 = vpop.xlane.xlu0 %537
    %v539 = vsel %vm457, %v452, 0.0
    %540 = vadd.xlane.f32.xlu0 %v539
    %v541 = vpop.xlane.xlu0 %540
    %v542 = vsel %vm457, %v453, 0.0
    %543 = vadd.xlane.f32.xlu0 %v542
    %v544 = vpop.xlane.xlu0 %543
    %v545 = vsel %vm457, %v454, 0.0
    %546 = vadd.xlane.f32.xlu0 %v545
    %v547 = vpop.xlane.xlu0 %546
    %v548 = vsel %vm457, %v455, 0.0
    %549 = vadd.xlane.f32.xlu0 %v548
    %v550 = vpop.xlane.xlu0 %549
    %v551 = vsel %vm457, %v456, 0.0
    %552 = vadd.xlane.f32.xlu0 %v551
    %v553 = vpop.xlane.xlu0 %552
    %v555 = vsel %vm52, %v16, 0
    %557 = vmatprep.subr.mxu0 0.0
    %558 = vmatpush1.xpose.msra.mxu0 %v555
    %559 = vmatprep.subr.mxu0 0.0
    %560 = vmatpush1.xpose.msra.mxu0 0.0
    %561 = vmatprep.subr.mxu0 0.0
    %562 = vmatpush1.xpose.msra.mxu0 0.0
    %563 = vmatprep.subr.mxu0 0.0
    %564 = vmatpush1.xpose.msra.mxu0 0.0
    %565 = vmatprep.subr.mxu0 0.0
    %566 = vmatpush1.xpose.msra.mxu0 0.0
    %567 = vmatprep.subr.mxu0 0.0
    %568 = vmatpush1.xpose.msra.mxu0 0.0
    %569 = vmatprep.subr.mxu0 0.0
    %570 = vmatpush1.xpose.msra.mxu0 0.0
    %571 = vmatprep.subr.mxu0 0.0
    %572 = vmatpush1.xpose.msra.mxu0 0.0
    %573 = vmatprep.subr.mxu0 0.0
    %574 = vmatpush1.xpose.msra.mxu0 0.0
    %575 = vmatprep.subr.mxu0 0.0
    %576 = vmatpush1.xpose.msra.mxu0 0.0
    %577 = vmatprep.subr.mxu0 0.0
    %578 = vmatpush1.xpose.msra.mxu0 0.0
    %579 = vmatprep.subr.mxu0 0.0
    %580 = vmatpush1.xpose.msra.mxu0 0.0
    %581 = vmatprep.subr.mxu0 0.0
    %582 = vmatpush1.xpose.msra.mxu0 0.0
    %583 = vmatprep.subr.mxu0 0.0
    %584 = vmatpush1.xpose.msra.mxu0 0.0
    %585 = vmatprep.subr.mxu0 0.0
    %586 = vmatpush1.xpose.msra.mxu0 0.0
    %587 = vmatprep.subr.mxu0 0.0
    %588 = vmatpush1.xpose.msra.mxu0 0.0
    %589 = vmatprep.subr.mxu0 0.0
    %590 = vmatpush1.xpose.msra.mxu0 0.0
    %591 = vmatprep.subr.mxu0 0.0
    %592 = vmatpush1.xpose.msra.mxu0 0.0
    %593 = vmatprep.subr.mxu0 0.0
    %594 = vmatpush1.xpose.msra.mxu0 0.0
    %595 = vmatprep.subr.mxu0 0.0
    %596 = vmatpush1.xpose.msra.mxu0 0.0
    %597 = vmatprep.subr.mxu0 0.0
    %598 = vmatpush1.xpose.msra.mxu0 0.0
    %599 = vmatprep.subr.mxu0 0.0
    %600 = vmatpush1.xpose.msra.mxu0 0.0
    %601 = vmatprep.subr.mxu0 0.0
    %602 = vmatpush1.xpose.msra.mxu0 0.0
    %603 = vmatprep.subr.mxu0 0.0
    %604 = vmatpush1.xpose.msra.mxu0 0.0
    %605 = vmatprep.subr.mxu0 0.0
    %606 = vmatpush1.xpose.msra.mxu0 0.0
    %607 = vmatprep.subr.mxu0 0.0
    %608 = vmatpush1.xpose.msra.mxu0 0.0
    %609 = vmatprep.subr.mxu0 0.0
    %610 = vmatpush1.xpose.msra.mxu0 0.0
    %611 = vmatprep.subr.mxu0 0.0
    %612 = vmatpush1.xpose.msra.mxu0 0.0
    %613 = vmatprep.subr.mxu0 0.0
    %614 = vmatpush1.xpose.msra.mxu0 0.0
    %615 = vmatprep.subr.mxu0 0.0
    %616 = vmatpush1.xpose.msra.mxu0 0.0
    %617 = vmatprep.subr.mxu0 0.0
    %618 = vmatpush1.xpose.msra.mxu0 0.0
    %619 = vmatprep.subr.mxu0 0.0
    %620 = vmatpush1.xpose.msra.mxu0 0.0
    %621 = vmatprep.mubr.f32.mxu0 0.0
    %622 = vmatmul.mubr.f32.gmra.mrb[0].mxu0 %v555
    %v623 = vpop.f32.mrb[0].mxu0
    %v624 = vadd.f32 0.0, %v623
    %v625 = vpop.f32.mrb[0].mxu0
    %626 = vdwg.mxu0
    %v628 = vsel %vm52, %v17, 0
    %630 = vmatprep.subr.mxu0 0.0
    %631 = vmatpush1.xpose.msra.mxu0 %v628
    %632 = vmatprep.subr.mxu0 0.0
    %633 = vmatpush1.xpose.msra.mxu0 0.0
    %634 = vmatprep.subr.mxu0 0.0
    %635 = vmatpush1.xpose.msra.mxu0 0.0
    %636 = vmatprep.subr.mxu0 0.0
    %637 = vmatpush1.xpose.msra.mxu0 0.0
    %638 = vmatprep.subr.mxu0 0.0
    %639 = vmatpush1.xpose.msra.mxu0 0.0
    %640 = vmatprep.subr.mxu0 0.0
    %641 = vmatpush1.xpose.msra.mxu0 0.0
    %642 = vmatprep.subr.mxu0 0.0
    %643 = vmatpush1.xpose.msra.mxu0 0.0
    %644 = vmatprep.subr.mxu0 0.0
    %645 = vmatpush1.xpose.msra.mxu0 0.0
    %646 = vmatprep.subr.mxu0 0.0
    %647 = vmatpush1.xpose.msra.mxu0 0.0
    %648 = vmatprep.subr.mxu0 0.0
    %649 = vmatpush1.xpose.msra.mxu0 0.0
    %650 = vmatprep.subr.mxu0 0.0
    %651 = vmatpush1.xpose.msra.mxu0 0.0
    %652 = vmatprep.subr.mxu0 0.0
    %653 = vmatpush1.xpose.msra.mxu0 0.0
    %654 = vmatprep.subr.mxu0 0.0
    %655 = vmatpush1.xpose.msra.mxu0 0.0
    %656 = vmatprep.subr.mxu0 0.0
    %657 = vmatpush1.xpose.msra.mxu0 0.0
    %658 = vmatprep.subr.mxu0 0.0
    %659 = vmatpush1.xpose.msra.mxu0 0.0
    %660 = vmatprep.subr.mxu0 0.0
    %661 = vmatpush1.xpose.msra.mxu0 0.0
    %662 = vmatprep.subr.mxu0 0.0
    %663 = vmatpush1.xpose.msra.mxu0 0.0
    %664 = vmatprep.subr.mxu0 0.0
    %665 = vmatpush1.xpose.msra.mxu0 0.0
    %666 = vmatprep.subr.mxu0 0.0
    %667 = vmatpush1.xpose.msra.mxu0 0.0
    %668 = vmatprep.subr.mxu0 0.0
    %669 = vmatpush1.xpose.msra.mxu0 0.0
    %670 = vmatprep.subr.mxu0 0.0
    %671 = vmatpush1.xpose.msra.mxu0 0.0
    %672 = vmatprep.subr.mxu0 0.0
    %673 = vmatpush1.xpose.msra.mxu0 0.0
    %674 = vmatprep.subr.mxu0 0.0
    %675 = vmatpush1.xpose.msra.mxu0 0.0
    %676 = vmatprep.subr.mxu0 0.0
    %677 = vmatpush1.xpose.msra.mxu0 0.0
    %678 = vmatprep.subr.mxu0 0.0
    %679 = vmatpush1.xpose.msra.mxu0 0.0
    %680 = vmatprep.subr.mxu0 0.0
    %681 = vmatpush1.xpose.msra.mxu0 0.0
    %682 = vmatprep.subr.mxu0 0.0
    %683 = vmatpush1.xpose.msra.mxu0 0.0
    %684 = vmatprep.subr.mxu0 0.0
    %685 = vmatpush1.xpose.msra.mxu0 0.0
    %686 = vmatprep.subr.mxu0 0.0
    %687 = vmatpush1.xpose.msra.mxu0 0.0
    %688 = vmatprep.subr.mxu0 0.0
    %689 = vmatpush1.xpose.msra.mxu0 0.0
    %690 = vmatprep.subr.mxu0 0.0
    %691 = vmatpush1.xpose.msra.mxu0 0.0
    %692 = vmatprep.subr.mxu0 0.0
    %693 = vmatpush1.xpose.msra.mxu0 0.0
    %694 = vmatprep.mubr.f32.mxu0 0.0
    %695 = vmatmul.mubr.f32.gmra.mrb[0].mxu0 %v628
    %v696 = vpop.f32.mrb[0].mxu0
    %v697 = vadd.f32 0.0, %v696
    %v698 = vpop.f32.mrb[0].mxu0
    %699 = vdwg.mxu0
    %v701 = vsel %vm52, %v18, 0
    %703 = vmatprep.subr.mxu0 0.0
    %704 = vmatpush1.xpose.msra.mxu0 %v701
    %705 = vmatprep.subr.mxu0 0.0
    %706 = vmatpush1.xpose.msra.mxu0 0.0
    %707 = vmatprep.subr.mxu0 0.0
    %708 = vmatpush1.xpose.msra.mxu0 0.0
    %709 = vmatprep.subr.mxu0 0.0
    %710 = vmatpush1.xpose.msra.mxu0 0.0
    %711 = vmatprep.subr.mxu0 0.0
    %712 = vmatpush1.xpose.msra.mxu0 0.0
    %713 = vmatprep.subr.mxu0 0.0
    %714 = vmatpush1.xpose.msra.mxu0 0.0
    %715 = vmatprep.subr.mxu0 0.0
    %716 = vmatpush1.xpose.msra.mxu0 0.0
    %717 = vmatprep.subr.mxu0 0.0
    %718 = vmatpush1.xpose.msra.mxu0 0.0
    %719 = vmatprep.subr.mxu0 0.0
    %720 = vmatpush1.xpose.msra.mxu0 0.0
    %721 = vmatprep.subr.mxu0 0.0
    %722 = vmatpush1.xpose.msra.mxu0 0.0
    %723 = vmatprep.subr.mxu0 0.0
    %724 = vmatpush1.xpose.msra.mxu0 0.0
    %725 = vmatprep.subr.mxu0 0.0
    %726 = vmatpush1.xpose.msra.mxu0 0.0
    %727 = vmatprep.subr.mxu0 0.0
    %728 = vmatpush1.xpose.msra.mxu0 0.0
    %729 = vmatprep.subr.mxu0 0.0
    %730 = vmatpush1.xpose.msra.mxu0 0.0
    %731 = vmatprep.subr.mxu0 0.0
    %732 = vmatpush1.xpose.msra.mxu0 0.0
    %733 = vmatprep.subr.mxu0 0.0
    %734 = vmatpush1.xpose.msra.mxu0 0.0
    %735 = vmatprep.subr.mxu0 0.0
    %736 = vmatpush1.xpose.msra.mxu0 0.0
    %737 = vmatprep.subr.mxu0 0.0
    %738 = vmatpush1.xpose.msra.mxu0 0.0
    %739 = vmatprep.subr.mxu0 0.0
    %740 = vmatpush1.xpose.msra.mxu0 0.0
    %741 = vmatprep.subr.mxu0 0.0
    %742 = vmatpush1.xpose.msra.mxu0 0.0
    %743 = vmatprep.subr.mxu0 0.0
    %744 = vmatpush1.xpose.msra.mxu0 0.0
    %745 = vmatprep.subr.mxu0 0.0
    %746 = vmatpush1.xpose.msra.mxu0 0.0
    %747 = vmatprep.subr.mxu0 0.0
    %748 = vmatpush1.xpose.msra.mxu0 0.0
    %749 = vmatprep.subr.mxu0 0.0
    %750 = vmatpush1.xpose.msra.mxu0 0.0
    %751 = vmatprep.subr.mxu0 0.0
    %752 = vmatpush1.xpose.msra.mxu0 0.0
    %753 = vmatprep.subr.mxu0 0.0
    %754 = vmatpush1.xpose.msra.mxu0 0.0
    %755 = vmatprep.subr.mxu0 0.0
    %756 = vmatpush1.xpose.msra.mxu0 0.0
    %757 = vmatprep.subr.mxu0 0.0
    %758 = vmatpush1.xpose.msra.mxu0 0.0
    %759 = vmatprep.subr.mxu0 0.0
    %760 = vmatpush1.xpose.msra.mxu0 0.0
    %761 = vmatprep.subr.mxu0 0.0
    %762 = vmatpush1.xpose.msra.mxu0 0.0
    %763 = vmatprep.subr.mxu0 0.0
    %764 = vmatpush1.xpose.msra.mxu0 0.0
    %765 = vmatprep.subr.mxu0 0.0
    %766 = vmatpush1.xpose.msra.mxu0 0.0
    %767 = vmatprep.mubr.f32.mxu0 0.0
    %768 = vmatmul.mubr.f32.gmra.mrb[0].mxu0 %v701
    %v769 = vpop.f32.mrb[0].mxu0
    %v770 = vadd.f32 0.0, %v769
    %v771 = vpop.f32.mrb[0].mxu0
    %772 = vdwg.mxu0
    %v774 = vsel %vm52, %v19, 0
    %776 = vmatprep.subr.mxu0 0.0
    %777 = vmatpush1.xpose.msra.mxu0 %v774
    %778 = vmatprep.subr.mxu0 0.0
    %779 = vmatpush1.xpose.msra.mxu0 0.0
    %780 = vmatprep.subr.mxu0 0.0
    %781 = vmatpush1.xpose.msra.mxu0 0.0
    %782 = vmatprep.subr.mxu0 0.0
    %783 = vmatpush1.xpose.msra.mxu0 0.0
    %784 = vmatprep.subr.mxu0 0.0
    %785 = vmatpush1.xpose.msra.mxu0 0.0
    %786 = vmatprep.subr.mxu0 0.0
    %787 = vmatpush1.xpose.msra.mxu0 0.0
    %788 = vmatprep.subr.mxu0 0.0
    %789 = vmatpush1.xpose.msra.mxu0 0.0
    %790 = vmatprep.subr.mxu0 0.0
    %791 = vmatpush1.xpose.msra.mxu0 0.0
    %792 = vmatprep.subr.mxu0 0.0
    %793 = vmatpush1.xpose.msra.mxu0 0.0
    %794 = vmatprep.subr.mxu0 0.0
    %795 = vmatpush1.xpose.msra.mxu0 0.0
    %796 = vmatprep.subr.mxu0 0.0
    %797 = vmatpush1.xpose.msra.mxu0 0.0
    %798 = vmatprep.subr.mxu0 0.0
    %799 = vmatpush1.xpose.msra.mxu0 0.0
    %800 = vmatprep.subr.mxu0 0.0
    %801 = vmatpush1.xpose.msra.mxu0 0.0
    %802 = vmatprep.subr.mxu0 0.0
    %803 = vmatpush1.xpose.msra.mxu0 0.0
    %804 = vmatprep.subr.mxu0 0.0
    %805 = vmatpush1.xpose.msra.mxu0 0.0
    %806 = vmatprep.subr.mxu0 0.0
    %807 = vmatpush1.xpose.msra.mxu0 0.0
    %808 = vmatprep.subr.mxu0 0.0
    %809 = vmatpush1.xpose.msra.mxu0 0.0
    %810 = vmatprep.subr.mxu0 0.0
    %811 = vmatpush1.xpose.msra.mxu0 0.0
    %812 = vmatprep.subr.mxu0 0.0
    %813 = vmatpush1.xpose.msra.mxu0 0.0
    %814 = vmatprep.subr.mxu0 0.0
    %815 = vmatpush1.xpose.msra.mxu0 0.0
    %816 = vmatprep.subr.mxu0 0.0
    %817 = vmatpush1.xpose.msra.mxu0 0.0
    %818 = vmatprep.subr.mxu0 0.0
    %819 = vmatpush1.xpose.msra.mxu0 0.0
    %820 = vmatprep.subr.mxu0 0.0
    %821 = vmatpush1.xpose.msra.mxu0 0.0
    %822 = vmatprep.subr.mxu0 0.0
    %823 = vmatpush1.xpose.msra.mxu0 0.0
    %824 = vmatprep.subr.mxu0 0.0
    %825 = vmatpush1.xpose.msra.mxu0 0.0
    %826 = vmatprep.subr.mxu0 0.0
    %827 = vmatpush1.xpose.msra.mxu0 0.0
    %828 = vmatprep.subr.mxu0 0.0
    %829 = vmatpush1.xpose.msra.mxu0 0.0
    %830 = vmatprep.subr.mxu0 0.0
    %831 = vmatpush1.xpose.msra.mxu0 0.0
    %832 = vmatprep.subr.mxu0 0.0
    %833 = vmatpush1.xpose.msra.mxu0 0.0
    %834 = vmatprep.subr.mxu0 0.0
    %835 = vmatpush1.xpose.msra.mxu0 0.0
    %836 = vmatprep.subr.mxu0 0.0
    %837 = vmatpush1.xpose.msra.mxu0 0.0
    %838 = vmatprep.subr.mxu0 0.0
    %839 = vmatpush1.xpose.msra.mxu0 0.0
    %840 = vmatprep.mubr.f32.mxu0 0.0
    %841 = vmatmul.mubr.f32.gmra.mrb[0].mxu0 %v774
    %v842 = vpop.f32.mrb[0].mxu0
    %v843 = vadd.f32 0.0, %v842
    %v844 = vpop.f32.mrb[0].mxu0
    %845 = vdwg.mxu0
    %v847 = vsel %vm52, %v20, 0
    %849 = vmatprep.subr.mxu0 0.0
    %850 = vmatpush1.xpose.msra.mxu0 %v847
    %851 = vmatprep.subr.mxu0 0.0
    %852 = vmatpush1.xpose.msra.mxu0 0.0
    %853 = vmatprep.subr.mxu0 0.0
    %854 = vmatpush1.xpose.msra.mxu0 0.0
    %855 = vmatprep.subr.mxu0 0.0
    %856 = vmatpush1.xpose.msra.mxu0 0.0
    %857 = vmatprep.subr.mxu0 0.0
    %858 = vmatpush1.xpose.msra.mxu0 0.0
    %859 = vmatprep.subr.mxu0 0.0
    %860 = vmatpush1.xpose.msra.mxu0 0.0
    %861 = vmatprep.subr.mxu0 0.0
    %862 = vmatpush1.xpose.msra.mxu0 0.0
    %863 = vmatprep.subr.mxu0 0.0
    %864 = vmatpush1.xpose.msra.mxu0 0.0
    %865 = vmatprep.subr.mxu0 0.0
    %866 = vmatpush1.xpose.msra.mxu0 0.0
    %867 = vmatprep.subr.mxu0 0.0
    %868 = vmatpush1.xpose.msra.mxu0 0.0
    %869 = vmatprep.subr.mxu0 0.0
    %870 = vmatpush1.xpose.msra.mxu0 0.0
    %871 = vmatprep.subr.mxu0 0.0
    %872 = vmatpush1.xpose.msra.mxu0 0.0
    %873 = vmatprep.subr.mxu0 0.0
    %874 = vmatpush1.xpose.msra.mxu0 0.0
    %875 = vmatprep.subr.mxu0 0.0
    %876 = vmatpush1.xpose.msra.mxu0 0.0
    %877 = vmatprep.subr.mxu0 0.0
    %878 = vmatpush1.xpose.msra.mxu0 0.0
    %879 = vmatprep.subr.mxu0 0.0
    %880 = vmatpush1.xpose.msra.mxu0 0.0
    %881 = vmatprep.subr.mxu0 0.0
    %882 = vmatpush1.xpose.msra.mxu0 0.0
    %883 = vmatprep.subr.mxu0 0.0
    %884 = vmatpush1.xpose.msra.mxu0 0.0
    %885 = vmatprep.subr.mxu0 0.0
    %886 = vmatpush1.xpose.msra.mxu0 0.0
    %887 = vmatprep.subr.mxu0 0.0
    %888 = vmatpush1.xpose.msra.mxu0 0.0
    %889 = vmatprep.subr.mxu0 0.0
    %890 = vmatpush1.xpose.msra.mxu0 0.0
    %891 = vmatprep.subr.mxu0 0.0
    %892 = vmatpush1.xpose.msra.mxu0 0.0
    %893 = vmatprep.subr.mxu0 0.0
    %894 = vmatpush1.xpose.msra.mxu0 0.0
    %895 = vmatprep.subr.mxu0 0.0
    %896 = vmatpush1.xpose.msra.mxu0 0.0
    %897 = vmatprep.subr.mxu0 0.0
    %898 = vmatpush1.xpose.msra.mxu0 0.0
    %899 = vmatprep.subr.mxu0 0.0
    %900 = vmatpush1.xpose.msra.mxu0 0.0
    %901 = vmatprep.subr.mxu0 0.0
    %902 = vmatpush1.xpose.msra.mxu0 0.0
    %903 = vmatprep.subr.mxu0 0.0
    %904 = vmatpush1.xpose.msra.mxu0 0.0
    %905 = vmatprep.subr.mxu0 0.0
    %906 = vmatpush1.xpose.msra.mxu0 0.0
    %907 = vmatprep.subr.mxu0 0.0
    %908 = vmatpush1.xpose.msra.mxu0 0.0
    %909 = vmatprep.subr.mxu0 0.0
    %910 = vmatpush1.xpose.msra.mxu0 0.0
    %911 = vmatprep.subr.mxu0 0.0
    %912 = vmatpush1.xpose.msra.mxu0 0.0
    %913 = vmatprep.mubr.f32.mxu0 0.0
    %914 = vmatmul.mubr.f32.gmra.mrb[0].mxu0 %v847
    %v915 = vpop.f32.mrb[0].mxu0
    %v916 = vadd.f32 0.0, %v915
    %v917 = vpop.f32.mrb[0].mxu0
    %918 = vdwg.mxu0
    %v920 = vsel %vm52, %v21, 0
    %922 = vmatprep.subr.mxu0 0.0
    %923 = vmatpush1.xpose.msra.mxu0 %v920
    %924 = vmatprep.subr.mxu0 0.0
    %925 = vmatpush1.xpose.msra.mxu0 0.0
    %926 = vmatprep.subr.mxu0 0.0
    %927 = vmatpush1.xpose.msra.mxu0 0.0
    %928 = vmatprep.subr.mxu0 0.0
    %929 = vmatpush1.xpose.msra.mxu0 0.0
    %930 = vmatprep.subr.mxu0 0.0
    %931 = vmatpush1.xpose.msra.mxu0 0.0
    %932 = vmatprep.subr.mxu0 0.0
    %933 = vmatpush1.xpose.msra.mxu0 0.0
    %934 = vmatprep.subr.mxu0 0.0
    %935 = vmatpush1.xpose.msra.mxu0 0.0
    %936 = vmatprep.subr.mxu0 0.0
    %937 = vmatpush1.xpose.msra.mxu0 0.0
    %938 = vmatprep.subr.mxu0 0.0
    %939 = vmatpush1.xpose.msra.mxu0 0.0
    %940 = vmatprep.subr.mxu0 0.0
    %941 = vmatpush1.xpose.msra.mxu0 0.0
    %942 = vmatprep.subr.mxu0 0.0
    %943 = vmatpush1.xpose.msra.mxu0 0.0
    %944 = vmatprep.subr.mxu0 0.0
    %945 = vmatpush1.xpose.msra.mxu0 0.0
    %946 = vmatprep.subr.mxu0 0.0
    %947 = vmatpush1.xpose.msra.mxu0 0.0
    %948 = vmatprep.subr.mxu0 0.0
    %949 = vmatpush1.xpose.msra.mxu0 0.0
    %950 = vmatprep.subr.mxu0 0.0
    %951 = vmatpush1.xpose.msra.mxu0 0.0
    %952 = vmatprep.subr.mxu0 0.0
    %953 = vmatpush1.xpose.msra.mxu0 0.0
    %954 = vmatprep.subr.mxu0 0.0
    %955 = vmatpush1.xpose.msra.mxu0 0.0
    %956 = vmatprep.subr.mxu0 0.0
    %957 = vmatpush1.xpose.msra.mxu0 0.0
    %958 = vmatprep.subr.mxu0 0.0
    %959 = vmatpush1.xpose.msra.mxu0 0.0
    %960 = vmatprep.subr.mxu0 0.0
    %961 = vmatpush1.xpose.msra.mxu0 0.0
    %962 = vmatprep.subr.mxu0 0.0
    %963 = vmatpush1.xpose.msra.mxu0 0.0
    %964 = vmatprep.subr.mxu0 0.0
    %965 = vmatpush1.xpose.msra.mxu0 0.0
    %966 = vmatprep.subr.mxu0 0.0
    %967 = vmatpush1.xpose.msra.mxu0 0.0
    %968 = vmatprep.subr.mxu0 0.0
    %969 = vmatpush1.xpose.msra.mxu0 0.0
    %970 = vmatprep.subr.mxu0 0.0
    %971 = vmatpush1.xpose.msra.mxu0 0.0
    %972 = vmatprep.subr.mxu0 0.0
    %973 = vmatpush1.xpose.msra.mxu0 0.0
    %974 = vmatprep.subr.mxu0 0.0
    %975 = vmatpush1.xpose.msra.mxu0 0.0
    %976 = vmatprep.subr.mxu0 0.0
    %977 = vmatpush1.xpose.msra.mxu0 0.0
    %978 = vmatprep.subr.mxu0 0.0
    %979 = vmatpush1.xpose.msra.mxu0 0.0
    %980 = vmatprep.subr.mxu0 0.0
    %981 = vmatpush1.xpose.msra.mxu0 0.0
    %982 = vmatprep.subr.mxu0 0.0
    %983 = vmatpush1.xpose.msra.mxu0 0.0
    %984 = vmatprep.subr.mxu0 0.0
    %985 = vmatpush1.xpose.msra.mxu0 0.0
    %986 = vmatprep.mubr.f32.mxu0 0.0
    %987 = vmatmul.mubr.f32.gmra.mrb[0].mxu0 %v920
    %v988 = vpop.f32.mrb[0].mxu0
    %v989 = vadd.f32 0.0, %v988
    %v990 = vpop.f32.mrb[0].mxu0
    %991 = vdwg.mxu0
    %v993 = vsel %vm52, %v22, 0
    %995 = vmatprep.subr.mxu0 0.0
    %996 = vmatpush1.xpose.msra.mxu0 %v993
    %997 = vmatprep.subr.mxu0 0.0
    %998 = vmatpush1.xpose.msra.mxu0 0.0
    %999 = vmatprep.subr.mxu0 0.0
    %1000 = vmatpush1.xpose.msra.mxu0 0.0
    %1001 = vmatprep.subr.mxu0 0.0
    %1002 = vmatpush1.xpose.msra.mxu0 0.0
    %1003 = vmatprep.subr.mxu0 0.0
    %1004 = vmatpush1.xpose.msra.mxu0 0.0
    %1005 = vmatprep.subr.mxu0 0.0
    %1006 = vmatpush1.xpose.msra.mxu0 0.0
    %1007 = vmatprep.subr.mxu0 0.0
    %1008 = vmatpush1.xpose.msra.mxu0 0.0
    %1009 = vmatprep.subr.mxu0 0.0
    %1010 = vmatpush1.xpose.msra.mxu0 0.0
    %1011 = vmatprep.subr.mxu0 0.0
    %1012 = vmatpush1.xpose.msra.mxu0 0.0
    %1013 = vmatprep.subr.mxu0 0.0
    %1014 = vmatpush1.xpose.msra.mxu0 0.0
    %1015 = vmatprep.subr.mxu0 0.0
    %1016 = vmatpush1.xpose.msra.mxu0 0.0
    %1017 = vmatprep.subr.mxu0 0.0
    %1018 = vmatpush1.xpose.msra.mxu0 0.0
    %1019 = vmatprep.subr.mxu0 0.0
    %1020 = vmatpush1.xpose.msra.mxu0 0.0
    %1021 = vmatprep.subr.mxu0 0.0
    %1022 = vmatpush1.xpose.msra.mxu0 0.0
    %1023 = vmatprep.subr.mxu0 0.0
    %1024 = vmatpush1.xpose.msra.mxu0 0.0
    %1025 = vmatprep.subr.mxu0 0.0
    %1026 = vmatpush1.xpose.msra.mxu0 0.0
    %1027 = vmatprep.subr.mxu0 0.0
    %1028 = vmatpush1.xpose.msra.mxu0 0.0
    %1029 = vmatprep.subr.mxu0 0.0
    %1030 = vmatpush1.xpose.msra.mxu0 0.0
    %1031 = vmatprep.subr.mxu0 0.0
    %1032 = vmatpush1.xpose.msra.mxu0 0.0
    %1033 = vmatprep.subr.mxu0 0.0
    %1034 = vmatpush1.xpose.msra.mxu0 0.0
    %1035 = vmatprep.subr.mxu0 0.0
    %1036 = vmatpush1.xpose.msra.mxu0 0.0
    %1037 = vmatprep.subr.mxu0 0.0
    %1038 = vmatpush1.xpose.msra.mxu0 0.0
    %1039 = vmatprep.subr.mxu0 0.0
    %1040 = vmatpush1.xpose.msra.mxu0 0.0
    %1041 = vmatprep.subr.mxu0 0.0
    %1042 = vmatpush1.xpose.msra.mxu0 0.0
    %1043 = vmatprep.subr.mxu0 0.0
    %1044 = vmatpush1.xpose.msra.mxu0 0.0
    %1045 = vmatprep.subr.mxu0 0.0
    %1046 = vmatpush1.xpose.msra.mxu0 0.0
    %1047 = vmatprep.subr.mxu0 0.0
    %1048 = vmatpush1.xpose.msra.mxu0 0.0
    %1049 = vmatprep.subr.mxu0 0.0
    %1050 = vmatpush1.xpose.msra.mxu0 0.0
    %1051 = vmatprep.subr.mxu0 0.0
    %1052 = vmatpush1.xpose.msra.mxu0 0.0
    %1053 = vmatprep.subr.mxu0 0.0
    %1054 = vmatpush1.xpose.msra.mxu0 0.0
    %1055 = vmatprep.subr.mxu0 0.0
    %1056 = vmatpush1.xpose.msra.mxu0 0.0
    %1057 = vmatprep.subr.mxu0 0.0
    %1058 = vmatpush1.xpose.msra.mxu0 0.0
    %1059 = vmatprep.mubr.f32.mxu0 0.0
    %1060 = vmatmul.mubr.f32.gmra.mrb[0].mxu0 %v993
    %v1061 = vpop.f32.mrb[0].mxu0
    %v1062 = vadd.f32 0.0, %v1061
    %v1063 = vpop.f32.mrb[0].mxu0
    %1064 = vdwg.mxu0
    %v1066 = vsel %vm52, %v23, 0
    %1068 = vmatprep.subr.mxu0 0.0
    %1069 = vmatpush1.xpose.msra.mxu0 %v1066
    %1070 = vmatprep.subr.mxu0 0.0
    %1071 = vmatpush1.xpose.msra.mxu0 0.0
    %1072 = vmatprep.subr.mxu0 0.0
    %1073 = vmatpush1.xpose.msra.mxu0 0.0
    %1074 = vmatprep.subr.mxu0 0.0
    %1075 = vmatpush1.xpose.msra.mxu0 0.0
    %1076 = vmatprep.subr.mxu0 0.0
    %1077 = vmatpush1.xpose.msra.mxu0 0.0
    %1078 = vmatprep.subr.mxu0 0.0
    %1079 = vmatpush1.xpose.msra.mxu0 0.0
    %1080 = vmatprep.subr.mxu0 0.0
    %1081 = vmatpush1.xpose.msra.mxu0 0.0
    %1082 = vmatprep.subr.mxu0 0.0
    %1083 = vmatpush1.xpose.msra.mxu0 0.0
    %1084 = vmatprep.subr.mxu0 0.0
    %1085 = vmatpush1.xpose.msra.mxu0 0.0
    %1086 = vmatprep.subr.mxu0 0.0
    %1087 = vmatpush1.xpose.msra.mxu0 0.0
    %1088 = vmatprep.subr.mxu0 0.0
    %1089 = vmatpush1.xpose.msra.mxu0 0.0
    %1090 = vmatprep.subr.mxu0 0.0
    %1091 = vmatpush1.xpose.msra.mxu0 0.0
    %1092 = vmatprep.subr.mxu0 0.0
    %1093 = vmatpush1.xpose.msra.mxu0 0.0
    %1094 = vmatprep.subr.mxu0 0.0
    %1095 = vmatpush1.xpose.msra.mxu0 0.0
    %1096 = vmatprep.subr.mxu0 0.0
    %1097 = vmatpush1.xpose.msra.mxu0 0.0
    %1098 = vmatprep.subr.mxu0 0.0
    %1099 = vmatpush1.xpose.msra.mxu0 0.0
    %1100 = vmatprep.subr.mxu0 0.0
    %1101 = vmatpush1.xpose.msra.mxu0 0.0
    %1102 = vmatprep.subr.mxu0 0.0
    %1103 = vmatpush1.xpose.msra.mxu0 0.0
    %1104 = vmatprep.subr.mxu0 0.0
    %1105 = vmatpush1.xpose.msra.mxu0 0.0
    %1106 = vmatprep.subr.mxu0 0.0
    %1107 = vmatpush1.xpose.msra.mxu0 0.0
    %1108 = vmatprep.subr.mxu0 0.0
    %1109 = vmatpush1.xpose.msra.mxu0 0.0
    %1110 = vmatprep.subr.mxu0 0.0
    %1111 = vmatpush1.xpose.msra.mxu0 0.0
    %1112 = vmatprep.subr.mxu0 0.0
    %1113 = vmatpush1.xpose.msra.mxu0 0.0
    %1114 = vmatprep.subr.mxu0 0.0
    %1115 = vmatpush1.xpose.msra.mxu0 0.0
    %1116 = vmatprep.subr.mxu0 0.0
    %1117 = vmatpush1.xpose.msra.mxu0 0.0
    %1118 = vmatprep.subr.mxu0 0.0
    %1119 = vmatpush1.xpose.msra.mxu0 0.0
    %1120 = vmatprep.subr.mxu0 0.0
    %1121 = vmatpush1.xpose.msra.mxu0 0.0
    %1122 = vmatprep.subr.mxu0 0.0
    %1123 = vmatpush1.xpose.msra.mxu0 0.0
    %1124 = vmatprep.subr.mxu0 0.0
    %1125 = vmatpush1.xpose.msra.mxu0 0.0
    %1126 = vmatprep.subr.mxu0 0.0
    %1127 = vmatpush1.xpose.msra.mxu0 0.0
    %1128 = vmatprep.subr.mxu0 0.0
    %1129 = vmatpush1.xpose.msra.mxu0 0.0
    %1130 = vmatprep.subr.mxu0 0.0
    %1131 = vmatpush1.xpose.msra.mxu0 0.0
    %1132 = vmatprep.mubr.f32.mxu0 0.0
    %1133 = vmatmul.mubr.f32.gmra.mrb[0].mxu0 %v1066
    %v1134 = vpop.f32.mrb[0].mxu0
    %v1135 = vadd.f32 0.0, %v1134
    %v1136 = vpop.f32.mrb[0].mxu0
    %1137 = vdwg.mxu0
    %v1139 = vsel %vm52, %v24, 0
    %1141 = vmatprep.subr.mxu0 0.0
    %1142 = vmatpush1.xpose.msra.mxu0 %v1139
    %1143 = vmatprep.subr.mxu0 0.0
    %1144 = vmatpush1.xpose.msra.mxu0 0.0
    %1145 = vmatprep.subr.mxu0 0.0
    %1146 = vmatpush1.xpose.msra.mxu0 0.0
    %1147 = vmatprep.subr.mxu0 0.0
    %1148 = vmatpush1.xpose.msra.mxu0 0.0
    %1149 = vmatprep.subr.mxu0 0.0
    %1150 = vmatpush1.xpose.msra.mxu0 0.0
    %1151 = vmatprep.subr.mxu0 0.0
    %1152 = vmatpush1.xpose.msra.mxu0 0.0
    %1153 = vmatprep.subr.mxu0 0.0
    %1154 = vmatpush1.xpose.msra.mxu0 0.0
    %1155 = vmatprep.subr.mxu0 0.0
    %1156 = vmatpush1.xpose.msra.mxu0 0.0
    %1157 = vmatprep.subr.mxu0 0.0
    %1158 = vmatpush1.xpose.msra.mxu0 0.0
    %1159 = vmatprep.subr.mxu0 0.0
    %1160 = vmatpush1.xpose.msra.mxu0 0.0
    %1161 = vmatprep.subr.mxu0 0.0
    %1162 = vmatpush1.xpose.msra.mxu0 0.0
    %1163 = vmatprep.subr.mxu0 0.0
    %1164 = vmatpush1.xpose.msra.mxu0 0.0
    %1165 = vmatprep.subr.mxu0 0.0
    %1166 = vmatpush1.xpose.msra.mxu0 0.0
    %1167 = vmatprep.subr.mxu0 0.0
    %1168 = vmatpush1.xpose.msra.mxu0 0.0
    %1169 = vmatprep.subr.mxu0 0.0
    %1170 = vmatpush1.xpose.msra.mxu0 0.0
    %1171 = vmatprep.subr.mxu0 0.0
    %1172 = vmatpush1.xpose.msra.mxu0 0.0
    %1173 = vmatprep.subr.mxu0 0.0
    %1174 = vmatpush1.xpose.msra.mxu0 0.0
    %1175 = vmatprep.subr.mxu0 0.0
    %1176 = vmatpush1.xpose.msra.mxu0 0.0
    %1177 = vmatprep.subr.mxu0 0.0
    %1178 = vmatpush1.xpose.msra.mxu0 0.0
    %1179 = vmatprep.subr.mxu0 0.0
    %1180 = vmatpush1.xpose.msra.mxu0 0.0
    %1181 = vmatprep.subr.mxu0 0.0
    %1182 = vmatpush1.xpose.msra.mxu0 0.0
    %1183 = vmatprep.subr.mxu0 0.0
    %1184 = vmatpush1.xpose.msra.mxu0 0.0
    %1185 = vmatprep.subr.mxu0 0.0
    %1186 = vmatpush1.xpose.msra.mxu0 0.0
    %1187 = vmatprep.subr.mxu0 0.0
    %1188 = vmatpush1.xpose.msra.mxu0 0.0
    %1189 = vmatprep.subr.mxu0 0.0
    %1190 = vmatpush1.xpose.msra.mxu0 0.0
    %1191 = vmatprep.subr.mxu0 0.0
    %1192 = vmatpush1.xpose.msra.mxu0 0.0
    %1193 = vmatprep.subr.mxu0 0.0
    %1194 = vmatpush1.xpose.msra.mxu0 0.0
    %1195 = vmatprep.subr.mxu0 0.0
    %1196 = vmatpush1.xpose.msra.mxu0 0.0
    %1197 = vmatprep.subr.mxu0 0.0
    %1198 = vmatpush1.xpose.msra.mxu0 0.0
    %1199 = vmatprep.subr.mxu0 0.0
    %1200 = vmatpush1.xpose.msra.mxu0 0.0
    %1201 = vmatprep.subr.mxu0 0.0
    %1202 = vmatpush1.xpose.msra.mxu0 0.0
    %1203 = vmatprep.subr.mxu0 0.0
    %1204 = vmatpush1.xpose.msra.mxu0 0.0
    %1205 = vmatprep.mubr.f32.mxu0 0.0
    %1206 = vmatmul.mubr.f32.gmra.mrb[0].mxu0 %v1139
    %v1207 = vpop.f32.mrb[0].mxu0
    %v1208 = vadd.f32 0.0, %v1207
    %v1209 = vpop.f32.mrb[0].mxu0
    %1210 = vdwg.mxu0
    %v1212 = vsel %vm52, %v25, 0
    %1214 = vmatprep.subr.mxu0 0.0
    %1215 = vmatpush1.xpose.msra.mxu0 %v1212
    %1216 = vmatprep.subr.mxu0 0.0
    %1217 = vmatpush1.xpose.msra.mxu0 0.0
    %1218 = vmatprep.subr.mxu0 0.0
    %1219 = vmatpush1.xpose.msra.mxu0 0.0
    %1220 = vmatprep.subr.mxu0 0.0
    %1221 = vmatpush1.xpose.msra.mxu0 0.0
    %1222 = vmatprep.subr.mxu0 0.0
    %1223 = vmatpush1.xpose.msra.mxu0 0.0
    %1224 = vmatprep.subr.mxu0 0.0
    %1225 = vmatpush1.xpose.msra.mxu0 0.0
    %1226 = vmatprep.subr.mxu0 0.0
    %1227 = vmatpush1.xpose.msra.mxu0 0.0
    %1228 = vmatprep.subr.mxu0 0.0
    %1229 = vmatpush1.xpose.msra.mxu0 0.0
    %1230 = vmatprep.subr.mxu0 0.0
    %1231 = vmatpush1.xpose.msra.mxu0 0.0
    %1232 = vmatprep.subr.mxu0 0.0
    %1233 = vmatpush1.xpose.msra.mxu0 0.0
    %1234 = vmatprep.subr.mxu0 0.0
    %1235 = vmatpush1.xpose.msra.mxu0 0.0
    %1236 = vmatprep.subr.mxu0 0.0
    %1237 = vmatpush1.xpose.msra.mxu0 0.0
    %1238 = vmatprep.subr.mxu0 0.0
    %1239 = vmatpush1.xpose.msra.mxu0 0.0
    %1240 = vmatprep.subr.mxu0 0.0
    %1241 = vmatpush1.xpose.msra.mxu0 0.0
    %1242 = vmatprep.subr.mxu0 0.0
    %1243 = vmatpush1.xpose.msra.mxu0 0.0
    %1244 = vmatprep.subr.mxu0 0.0
    %1245 = vmatpush1.xpose.msra.mxu0 0.0
    %1246 = vmatprep.subr.mxu0 0.0
    %1247 = vmatpush1.xpose.msra.mxu0 0.0
    %1248 = vmatprep.subr.mxu0 0.0
    %1249 = vmatpush1.xpose.msra.mxu0 0.0
    %1250 = vmatprep.subr.mxu0 0.0
    %1251 = vmatpush1.xpose.msra.mxu0 0.0
    %1252 = vmatprep.subr.mxu0 0.0
    %1253 = vmatpush1.xpose.msra.mxu0 0.0
    %1254 = vmatprep.subr.mxu0 0.0
    %1255 = vmatpush1.xpose.msra.mxu0 0.0
    %1256 = vmatprep.subr.mxu0 0.0
    %1257 = vmatpush1.xpose.msra.mxu0 0.0
    %1258 = vmatprep.subr.mxu0 0.0
    %1259 = vmatpush1.xpose.msra.mxu0 0.0
    %1260 = vmatprep.subr.mxu0 0.0
    %1261 = vmatpush1.xpose.msra.mxu0 0.0
    %1262 = vmatprep.subr.mxu0 0.0
    %1263 = vmatpush1.xpose.msra.mxu0 0.0
    %1264 = vmatprep.subr.mxu0 0.0
    %1265 = vmatpush1.xpose.msra.mxu0 0.0
    %1266 = vmatprep.subr.mxu0 0.0
    %1267 = vmatpush1.xpose.msra.mxu0 0.0
    %1268 = vmatprep.subr.mxu0 0.0
    %1269 = vmatpush1.xpose.msra.mxu0 0.0
    %1270 = vmatprep.subr.mxu0 0.0
    %1271 = vmatpush1.xpose.msra.mxu0 0.0
    %1272 = vmatprep.subr.mxu0 0.0
    %1273 = vmatpush1.xpose.msra.mxu0 0.0
    %1274 = vmatprep.subr.mxu0 0.0
    %1275 = vmatpush1.xpose.msra.mxu0 0.0
    %1276 = vmatprep.subr.mxu0 0.0
    %1277 = vmatpush1.xpose.msra.mxu0 0.0
    %1278 = vmatprep.mubr.f32.mxu0 0.0
    %1279 = vmatmul.mubr.f32.gmra.mrb[0].mxu0 %v1212
    %v1280 = vpop.f32.mrb[0].mxu0
    %v1281 = vadd.f32 0.0, %v1280
    %v1282 = vpop.f32.mrb[0].mxu0
    %1283 = vdwg.mxu0
    %v1285 = vsel %vm52, %v26, 0
    %1287 = vmatprep.subr.mxu0 0.0
    %1288 = vmatpush1.xpose.msra.mxu0 %v1285
    %1289 = vmatprep.subr.mxu0 0.0
    %1290 = vmatpush1.xpose.msra.mxu0 0.0
    %1291 = vmatprep.subr.mxu0 0.0
    %1292 = vmatpush1.xpose.msra.mxu0 0.0
    %1293 = vmatprep.subr.mxu0 0.0
    %1294 = vmatpush1.xpose.msra.mxu0 0.0
    %1295 = vmatprep.subr.mxu0 0.0
    %1296 = vmatpush1.xpose.msra.mxu0 0.0
    %1297 = vmatprep.subr.mxu0 0.0
    %1298 = vmatpush1.xpose.msra.mxu0 0.0
    %1299 = vmatprep.subr.mxu0 0.0
    %1300 = vmatpush1.xpose.msra.mxu0 0.0
    %1301 = vmatprep.subr.mxu0 0.0
    %1302 = vmatpush1.xpose.msra.mxu0 0.0
    %1303 = vmatprep.subr.mxu0 0.0
    %1304 = vmatpush1.xpose.msra.mxu0 0.0
    %1305 = vmatprep.subr.mxu0 0.0
    %1306 = vmatpush1.xpose.msra.mxu0 0.0
    %1307 = vmatprep.subr.mxu0 0.0
    %1308 = vmatpush1.xpose.msra.mxu0 0.0
    %1309 = vmatprep.subr.mxu0 0.0
    %1310 = vmatpush1.xpose.msra.mxu0 0.0
    %1311 = vmatprep.subr.mxu0 0.0
    %1312 = vmatpush1.xpose.msra.mxu0 0.0
    %1313 = vmatprep.subr.mxu0 0.0
    %1314 = vmatpush1.xpose.msra.mxu0 0.0
    %1315 = vmatprep.subr.mxu0 0.0
    %1316 = vmatpush1.xpose.msra.mxu0 0.0
    %1317 = vmatprep.subr.mxu0 0.0
    %1318 = vmatpush1.xpose.msra.mxu0 0.0
    %1319 = vmatprep.subr.mxu0 0.0
    %1320 = vmatpush1.xpose.msra.mxu0 0.0
    %1321 = vmatprep.subr.mxu0 0.0
    %1322 = vmatpush1.xpose.msra.mxu0 0.0
    %1323 = vmatprep.subr.mxu0 0.0
    %1324 = vmatpush1.xpose.msra.mxu0 0.0
    %1325 = vmatprep.subr.mxu0 0.0
    %1326 = vmatpush1.xpose.msra.mxu0 0.0
    %1327 = vmatprep.subr.mxu0 0.0
    %1328 = vmatpush1.xpose.msra.mxu0 0.0
    %1329 = vmatprep.subr.mxu0 0.0
    %1330 = vmatpush1.xpose.msra.mxu0 0.0
    %1331 = vmatprep.subr.mxu0 0.0
    %1332 = vmatpush1.xpose.msra.mxu0 0.0
    %1333 = vmatprep.subr.mxu0 0.0
    %1334 = vmatpush1.xpose.msra.mxu0 0.0
    %1335 = vmatprep.subr.mxu0 0.0
    %1336 = vmatpush1.xpose.msra.mxu0 0.0
    %1337 = vmatprep.subr.mxu0 0.0
    %1338 = vmatpush1.xpose.msra.mxu0 0.0
    %1339 = vmatprep.subr.mxu0 0.0
    %1340 = vmatpush1.xpose.msra.mxu0 0.0
    %1341 = vmatprep.subr.mxu0 0.0
    %1342 = vmatpush1.xpose.msra.mxu0 0.0
    %1343 = vmatprep.subr.mxu0 0.0
    %1344 = vmatpush1.xpose.msra.mxu0 0.0
    %1345 = vmatprep.subr.mxu0 0.0
    %1346 = vmatpush1.xpose.msra.mxu0 0.0
    %1347 = vmatprep.subr.mxu0 0.0
    %1348 = vmatpush1.xpose.msra.mxu0 0.0
    %1349 = vmatprep.subr.mxu0 0.0
    %1350 = vmatpush1.xpose.msra.mxu0 0.0
    %1351 = vmatprep.mubr.f32.mxu0 0.0
    %1352 = vmatmul.mubr.f32.gmra.mrb[0].mxu0 %v1285
    %v1353 = vpop.f32.mrb[0].mxu0
    %v1354 = vadd.f32 0.0, %v1353
    %v1355 = vpop.f32.mrb[0].mxu0
    %1356 = vdwg.mxu0
    %v1358 = vsel %vm52, %v27, 0
    %1360 = vmatprep.subr.mxu0 0.0
    %1361 = vmatpush1.xpose.msra.mxu0 %v1358
    %1362 = vmatprep.subr.mxu0 0.0
    %1363 = vmatpush1.xpose.msra.mxu0 0.0
    %1364 = vmatprep.subr.mxu0 0.0
    %1365 = vmatpush1.xpose.msra.mxu0 0.0
    %1366 = vmatprep.subr.mxu0 0.0
    %1367 = vmatpush1.xpose.msra.mxu0 0.0
    %1368 = vmatprep.subr.mxu0 0.0
    %1369 = vmatpush1.xpose.msra.mxu0 0.0
    %1370 = vmatprep.subr.mxu0 0.0
    %1371 = vmatpush1.xpose.msra.mxu0 0.0
    %1372 = vmatprep.subr.mxu0 0.0
    %1373 = vmatpush1.xpose.msra.mxu0 0.0
    %1374 = vmatprep.subr.mxu0 0.0
    %1375 = vmatpush1.xpose.msra.mxu0 0.0
    %1376 = vmatprep.subr.mxu0 0.0
    %1377 = vmatpush1.xpose.msra.mxu0 0.0
    %1378 = vmatprep.subr.mxu0 0.0
    %1379 = vmatpush1.xpose.msra.mxu0 0.0
    %1380 = vmatprep.subr.mxu0 0.0
    %1381 = vmatpush1.xpose.msra.mxu0 0.0
    %1382 = vmatprep.subr.mxu0 0.0
    %1383 = vmatpush1.xpose.msra.mxu0 0.0
    %1384 = vmatprep.subr.mxu0 0.0
    %1385 = vmatpush1.xpose.msra.mxu0 0.0
    %1386 = vmatprep.subr.mxu0 0.0
    %1387 = vmatpush1.xpose.msra.mxu0 0.0
    %1388 = vmatprep.subr.mxu0 0.0
    %1389 = vmatpush1.xpose.msra.mxu0 0.0
    %1390 = vmatprep.subr.mxu0 0.0
    %1391 = vmatpush1.xpose.msra.mxu0 0.0
    %1392 = vmatprep.subr.mxu0 0.0
    %1393 = vmatpush1.xpose.msra.mxu0 0.0
    %1394 = vmatprep.subr.mxu0 0.0
    %1395 = vmatpush1.xpose.msra.mxu0 0.0
    %1396 = vmatprep.subr.mxu0 0.0
    %1397 = vmatpush1.xpose.msra.mxu0 0.0
    %1398 = vmatprep.subr.mxu0 0.0
    %1399 = vmatpush1.xpose.msra.mxu0 0.0
    %1400 = vmatprep.subr.mxu0 0.0
    %1401 = vmatpush1.xpose.msra.mxu0 0.0
    %1402 = vmatprep.subr.mxu0 0.0
    %1403 = vmatpush1.xpose.msra.mxu0 0.0
    %1404 = vmatprep.subr.mxu0 0.0
    %1405 = vmatpush1.xpose.msra.mxu0 0.0
    %1406 = vmatprep.subr.mxu0 0.0
    %1407 = vmatpush1.xpose.msra.mxu0 0.0
    %1408 = vmatprep.subr.mxu0 0.0
    %1409 = vmatpush1.xpose.msra.mxu0 0.0
    %1410 = vmatprep.subr.mxu0 0.0
    %1411 = vmatpush1.xpose.msra.mxu0 0.0
    %1412 = vmatprep.subr.mxu0 0.0
    %1413 = vmatpush1.xpose.msra.mxu0 0.0
    %1414 = vmatprep.subr.mxu0 0.0
    %1415 = vmatpush1.xpose.msra.mxu0 0.0
    %1416 = vmatprep.subr.mxu0 0.0
    %1417 = vmatpush1.xpose.msra.mxu0 0.0
    %1418 = vmatprep.subr.mxu0 0.0
    %1419 = vmatpush1.xpose.msra.mxu0 0.0
    %1420 = vmatprep.subr.mxu0 0.0
    %1421 = vmatpush1.xpose.msra.mxu0 0.0
    %1422 = vmatprep.subr.mxu0 0.0
    %1423 = vmatpush1.xpose.msra.mxu0 0.0
    %1424 = vmatprep.mubr.f32.mxu0 0.0
    %1425 = vmatmul.mubr.f32.gmra.mrb[0].mxu0 %v1358
    %v1426 = vpop.f32.mrb[0].mxu0
    %v1427 = vadd.f32 0.0, %v1426
    %v1428 = vpop.f32.mrb[0].mxu0
    %1429 = vdwg.mxu0
    %v1431 = vsel %vm52, %v28, 0
    %1433 = vmatprep.subr.mxu0 0.0
    %1434 = vmatpush1.xpose.msra.mxu0 %v1431
    %1435 = vmatprep.subr.mxu0 0.0
    %1436 = vmatpush1.xpose.msra.mxu0 0.0
    %1437 = vmatprep.subr.mxu0 0.0
    %1438 = vmatpush1.xpose.msra.mxu0 0.0
    %1439 = vmatprep.subr.mxu0 0.0
    %1440 = vmatpush1.xpose.msra.mxu0 0.0
    %1441 = vmatprep.subr.mxu0 0.0
    %1442 = vmatpush1.xpose.msra.mxu0 0.0
    %1443 = vmatprep.subr.mxu0 0.0
    %1444 = vmatpush1.xpose.msra.mxu0 0.0
    %1445 = vmatprep.subr.mxu0 0.0
    %1446 = vmatpush1.xpose.msra.mxu0 0.0
    %1447 = vmatprep.subr.mxu0 0.0
    %1448 = vmatpush1.xpose.msra.mxu0 0.0
    %1449 = vmatprep.subr.mxu0 0.0
    %1450 = vmatpush1.xpose.msra.mxu0 0.0
    %1451 = vmatprep.subr.mxu0 0.0
    %1452 = vmatpush1.xpose.msra.mxu0 0.0
    %1453 = vmatprep.subr.mxu0 0.0
    %1454 = vmatpush1.xpose.msra.mxu0 0.0
    %1455 = vmatprep.subr.mxu0 0.0
    %1456 = vmatpush1.xpose.msra.mxu0 0.0
    %1457 = vmatprep.subr.mxu0 0.0
    %1458 = vmatpush1.xpose.msra.mxu0 0.0
    %1459 = vmatprep.subr.mxu0 0.0
    %1460 = vmatpush1.xpose.msra.mxu0 0.0
    %1461 = vmatprep.subr.mxu0 0.0
    %1462 = vmatpush1.xpose.msra.mxu0 0.0
    %1463 = vmatprep.subr.mxu0 0.0
    %1464 = vmatpush1.xpose.msra.mxu0 0.0
    %1465 = vmatprep.subr.mxu0 0.0
    %1466 = vmatpush1.xpose.msra.mxu0 0.0
    %1467 = vmatprep.subr.mxu0 0.0
    %1468 = vmatpush1.xpose.msra.mxu0 0.0
    %1469 = vmatprep.subr.mxu0 0.0
    %1470 = vmatpush1.xpose.msra.mxu0 0.0
    %1471 = vmatprep.subr.mxu0 0.0
    %1472 = vmatpush1.xpose.msra.mxu0 0.0
    %1473 = vmatprep.subr.mxu0 0.0
    %1474 = vmatpush1.xpose.msra.mxu0 0.0
    %1475 = vmatprep.subr.mxu0 0.0
    %1476 = vmatpush1.xpose.msra.mxu0 0.0
    %1477 = vmatprep.subr.mxu0 0.0
    %1478 = vmatpush1.xpose.msra.mxu0 0.0
    %1479 = vmatprep.subr.mxu0 0.0
    %1480 = vmatpush1.xpose.msra.mxu0 0.0
    %1481 = vmatprep.subr.mxu0 0.0
    %1482 = vmatpush1.xpose.msra.mxu0 0.0
    %1483 = vmatprep.subr.mxu0 0.0
    %1484 = vmatpush1.xpose.msra.mxu0 0.0
    %1485 = vmatprep.subr.mxu0 0.0
    %1486 = vmatpush1.xpose.msra.mxu0 0.0
    %1487 = vmatprep.subr.mxu0 0.0
    %1488 = vmatpush1.xpose.msra.mxu0 0.0
    %1489 = vmatprep.subr.mxu0 0.0
    %1490 = vmatpush1.xpose.msra.mxu0 0.0
    %1491 = vmatprep.subr.mxu0 0.0
    %1492 = vmatpush1.xpose.msra.mxu0 0.0
    %1493 = vmatprep.subr.mxu0 0.0
    %1494 = vmatpush1.xpose.msra.mxu0 0.0
    %1495 = vmatprep.subr.mxu0 0.0
    %1496 = vmatpush1.xpose.msra.mxu0 0.0
    %1497 = vmatprep.mubr.f32.mxu0 0.0
    %1498 = vmatmul.mubr.f32.gmra.mrb[0].mxu0 %v1431
    %v1499 = vpop.f32.mrb[0].mxu0
    %v1500 = vadd.f32 0.0, %v1499
    %v1501 = vpop.f32.mrb[0].mxu0
    %1502 = vdwg.mxu0
    %v1504 = vsel %vm52, %v29, 0
    %1506 = vmatprep.subr.mxu0 0.0
    %1507 = vmatpush1.xpose.msra.mxu0 %v1504
    %1508 = vmatprep.subr.mxu0 0.0
    %1509 = vmatpush1.xpose.msra.mxu0 0.0
    %1510 = vmatprep.subr.mxu0 0.0
    %1511 = vmatpush1.xpose.msra.mxu0 0.0
    %1512 = vmatprep.subr.mxu0 0.0
    %1513 = vmatpush1.xpose.msra.mxu0 0.0
    %1514 = vmatprep.subr.mxu0 0.0
    %1515 = vmatpush1.xpose.msra.mxu0 0.0
    %1516 = vmatprep.subr.mxu0 0.0
    %1517 = vmatpush1.xpose.msra.mxu0 0.0
    %1518 = vmatprep.subr.mxu0 0.0
    %1519 = vmatpush1.xpose.msra.mxu0 0.0
    %1520 = vmatprep.subr.mxu0 0.0
    %1521 = vmatpush1.xpose.msra.mxu0 0.0
    %1522 = vmatprep.subr.mxu0 0.0
    %1523 = vmatpush1.xpose.msra.mxu0 0.0
    %1524 = vmatprep.subr.mxu0 0.0
    %1525 = vmatpush1.xpose.msra.mxu0 0.0
    %1526 = vmatprep.subr.mxu0 0.0
    %1527 = vmatpush1.xpose.msra.mxu0 0.0
    %1528 = vmatprep.subr.mxu0 0.0
    %1529 = vmatpush1.xpose.msra.mxu0 0.0
    %1530 = vmatprep.subr.mxu0 0.0
    %1531 = vmatpush1.xpose.msra.mxu0 0.0
    %1532 = vmatprep.subr.mxu0 0.0
    %1533 = vmatpush1.xpose.msra.mxu0 0.0
    %1534 = vmatprep.subr.mxu0 0.0
    %1535 = vmatpush1.xpose.msra.mxu0 0.0
    %1536 = vmatprep.subr.mxu0 0.0
    %1537 = vmatpush1.xpose.msra.mxu0 0.0
    %1538 = vmatprep.subr.mxu0 0.0
    %1539 = vmatpush1.xpose.msra.mxu0 0.0
    %1540 = vmatprep.subr.mxu0 0.0
    %1541 = vmatpush1.xpose.msra.mxu0 0.0
    %1542 = vmatprep.subr.mxu0 0.0
    %1543 = vmatpush1.xpose.msra.mxu0 0.0
    %1544 = vmatprep.subr.mxu0 0.0
    %1545 = vmatpush1.xpose.msra.mxu0 0.0
    %1546 = vmatprep.subr.mxu0 0.0
    %1547 = vmatpush1.xpose.msra.mxu0 0.0
    %1548 = vmatprep.subr.mxu0 0.0
    %1549 = vmatpush1.xpose.msra.mxu0 0.0
    %1550 = vmatprep.subr.mxu0 0.0
    %1551 = vmatpush1.xpose.msra.mxu0 0.0
    %1552 = vmatprep.subr.mxu0 0.0
    %1553 = vmatpush1.xpose.msra.mxu0 0.0
    %1554 = vmatprep.subr.mxu0 0.0
    %1555 = vmatpush1.xpose.msra.mxu0 0.0
    %1556 = vmatprep.subr.mxu0 0.0
    %1557 = vmatpush1.xpose.msra.mxu0 0.0
    %1558 = vmatprep.subr.mxu0 0.0
    %1559 = vmatpush1.xpose.msra.mxu0 0.0
    %1560 = vmatprep.subr.mxu0 0.0
    %1561 = vmatpush1.xpose.msra.mxu0 0.0
    %1562 = vmatprep.subr.mxu0 0.0
    %1563 = vmatpush1.xpose.msra.mxu0 0.0
    %1564 = vmatprep.subr.mxu0 0.0
    %1565 = vmatpush1.xpose.msra.mxu0 0.0
    %1566 = vmatprep.subr.mxu0 0.0
    %1567 = vmatpush1.xpose.msra.mxu0 0.0
    %1568 = vmatprep.subr.mxu0 0.0
    %1569 = vmatpush1.xpose.msra.mxu0 0.0
    %1570 = vmatprep.mubr.f32.mxu0 0.0
    %1571 = vmatmul.mubr.f32.gmra.mrb[0].mxu0 %v1504
    %v1572 = vpop.f32.mrb[0].mxu0
    %v1573 = vadd.f32 0.0, %v1572
    %v1574 = vpop.f32.mrb[0].mxu0
    %1575 = vdwg.mxu0
    %v1577 = vsel %vm52, %v30, 0
    %1579 = vmatprep.subr.mxu0 0.0
    %1580 = vmatpush1.xpose.msra.mxu0 %v1577
    %1581 = vmatprep.subr.mxu0 0.0
    %1582 = vmatpush1.xpose.msra.mxu0 0.0
    %1583 = vmatprep.subr.mxu0 0.0
    %1584 = vmatpush1.xpose.msra.mxu0 0.0
    %1585 = vmatprep.subr.mxu0 0.0
    %1586 = vmatpush1.xpose.msra.mxu0 0.0
    %1587 = vmatprep.subr.mxu0 0.0
    %1588 = vmatpush1.xpose.msra.mxu0 0.0
    %1589 = vmatprep.subr.mxu0 0.0
    %1590 = vmatpush1.xpose.msra.mxu0 0.0
    %1591 = vmatprep.subr.mxu0 0.0
    %1592 = vmatpush1.xpose.msra.mxu0 0.0
    %1593 = vmatprep.subr.mxu0 0.0
    %1594 = vmatpush1.xpose.msra.mxu0 0.0
    %1595 = vmatprep.subr.mxu0 0.0
    %1596 = vmatpush1.xpose.msra.mxu0 0.0
    %1597 = vmatprep.subr.mxu0 0.0
    %1598 = vmatpush1.xpose.msra.mxu0 0.0
    %1599 = vmatprep.subr.mxu0 0.0
    %1600 = vmatpush1.xpose.msra.mxu0 0.0
    %1601 = vmatprep.subr.mxu0 0.0
    %1602 = vmatpush1.xpose.msra.mxu0 0.0
    %1603 = vmatprep.subr.mxu0 0.0
    %1604 = vmatpush1.xpose.msra.mxu0 0.0
    %1605 = vmatprep.subr.mxu0 0.0
    %1606 = vmatpush1.xpose.msra.mxu0 0.0
    %1607 = vmatprep.subr.mxu0 0.0
    %1608 = vmatpush1.xpose.msra.mxu0 0.0
    %1609 = vmatprep.subr.mxu0 0.0
    %1610 = vmatpush1.xpose.msra.mxu0 0.0
    %1611 = vmatprep.subr.mxu0 0.0
    %1612 = vmatpush1.xpose.msra.mxu0 0.0
    %1613 = vmatprep.subr.mxu0 0.0
    %1614 = vmatpush1.xpose.msra.mxu0 0.0
    %1615 = vmatprep.subr.mxu0 0.0
    %1616 = vmatpush1.xpose.msra.mxu0 0.0
    %1617 = vmatprep.subr.mxu0 0.0
    %1618 = vmatpush1.xpose.msra.mxu0 0.0
    %1619 = vmatprep.subr.mxu0 0.0
    %1620 = vmatpush1.xpose.msra.mxu0 0.0
    %1621 = vmatprep.subr.mxu0 0.0
    %1622 = vmatpush1.xpose.msra.mxu0 0.0
    %1623 = vmatprep.subr.mxu0 0.0
    %1624 = vmatpush1.xpose.msra.mxu0 0.0
    %1625 = vmatprep.subr.mxu0 0.0
    %1626 = vmatpush1.xpose.msra.mxu0 0.0
    %1627 = vmatprep.subr.mxu0 0.0
    %1628 = vmatpush1.xpose.msra.mxu0 0.0
    %1629 = vmatprep.subr.mxu0 0.0
    %1630 = vmatpush1.xpose.msra.mxu0 0.0
    %1631 = vmatprep.subr.mxu0 0.0
    %1632 = vmatpush1.xpose.msra.mxu0 0.0
    %1633 = vmatprep.subr.mxu0 0.0
    %1634 = vmatpush1.xpose.msra.mxu0 0.0
    %1635 = vmatprep.subr.mxu0 0.0
    %1636 = vmatpush1.xpose.msra.mxu0 0.0
    %1637 = vmatprep.subr.mxu0 0.0
    %1638 = vmatpush1.xpose.msra.mxu0 0.0
    %1639 = vmatprep.subr.mxu0 0.0
    %1640 = vmatpush1.xpose.msra.mxu0 0.0
    %1641 = vmatprep.subr.mxu0 0.0
    %1642 = vmatpush1.xpose.msra.mxu0 0.0
    %1643 = vmatprep.mubr.f32.mxu0 0.0
    %1644 = vmatmul.mubr.f32.gmra.mrb[0].mxu0 %v1577
    %v1645 = vpop.f32.mrb[0].mxu0
    %v1646 = vadd.f32 0.0, %v1645
    %v1647 = vpop.f32.mrb[0].mxu0
    %1648 = vdwg.mxu0
    %v1650 = vsel %vm52, %v31, 0
    %1652 = vmatprep.subr.mxu0 0.0
    %1653 = vmatpush1.xpose.msra.mxu0 %v1650
    %1654 = vmatprep.subr.mxu0 0.0
    %1655 = vmatpush1.xpose.msra.mxu0 0.0
    %1656 = vmatprep.subr.mxu0 0.0
    %1657 = vmatpush1.xpose.msra.mxu0 0.0
    %1658 = vmatprep.subr.mxu0 0.0
    %1659 = vmatpush1.xpose.msra.mxu0 0.0
    %1660 = vmatprep.subr.mxu0 0.0
    %1661 = vmatpush1.xpose.msra.mxu0 0.0
    %1662 = vmatprep.subr.mxu0 0.0
    %1663 = vmatpush1.xpose.msra.mxu0 0.0
    %1664 = vmatprep.subr.mxu0 0.0
    %1665 = vmatpush1.xpose.msra.mxu0 0.0
    %1666 = vmatprep.subr.mxu0 0.0
    %1667 = vmatpush1.xpose.msra.mxu0 0.0
    %1668 = vmatprep.subr.mxu0 0.0
    %1669 = vmatpush1.xpose.msra.mxu0 0.0
    %1670 = vmatprep.subr.mxu0 0.0
    %1671 = vmatpush1.xpose.msra.mxu0 0.0
    %1672 = vmatprep.subr.mxu0 0.0
    %1673 = vmatpush1.xpose.msra.mxu0 0.0
    %1674 = vmatprep.subr.mxu0 0.0
    %1675 = vmatpush1.xpose.msra.mxu0 0.0
    %1676 = vmatprep.subr.mxu0 0.0
    %1677 = vmatpush1.xpose.msra.mxu0 0.0
    %1678 = vmatprep.subr.mxu0 0.0
    %1679 = vmatpush1.xpose.msra.mxu0 0.0
    %1680 = vmatprep.subr.mxu0 0.0
    %1681 = vmatpush1.xpose.msra.mxu0 0.0
    %1682 = vmatprep.subr.mxu0 0.0
    %1683 = vmatpush1.xpose.msra.mxu0 0.0
    %1684 = vmatprep.subr.mxu0 0.0
    %1685 = vmatpush1.xpose.msra.mxu0 0.0
    %1686 = vmatprep.subr.mxu0 0.0
    %1687 = vmatpush1.xpose.msra.mxu0 0.0
    %1688 = vmatprep.subr.mxu0 0.0
    %1689 = vmatpush1.xpose.msra.mxu0 0.0
    %1690 = vmatprep.subr.mxu0 0.0
    %1691 = vmatpush1.xpose.msra.mxu0 0.0
    %1692 = vmatprep.subr.mxu0 0.0
    %1693 = vmatpush1.xpose.msra.mxu0 0.0
    %1694 = vmatprep.subr.mxu0 0.0
    %1695 = vmatpush1.xpose.msra.mxu0 0.0
    %1696 = vmatprep.subr.mxu0 0.0
    %1697 = vmatpush1.xpose.msra.mxu0 0.0
    %1698 = vmatprep.subr.mxu0 0.0
    %1699 = vmatpush1.xpose.msra.mxu0 0.0
    %1700 = vmatprep.subr.mxu0 0.0
    %1701 = vmatpush1.xpose.msra.mxu0 0.0
    %1702 = vmatprep.subr.mxu0 0.0
    %1703 = vmatpush1.xpose.msra.mxu0 0.0
    %1704 = vmatprep.subr.mxu0 0.0
    %1705 = vmatpush1.xpose.msra.mxu0 0.0
    %1706 = vmatprep.subr.mxu0 0.0
    %1707 = vmatpush1.xpose.msra.mxu0 0.0
    %1708 = vmatprep.subr.mxu0 0.0
    %1709 = vmatpush1.xpose.msra.mxu0 0.0
    %1710 = vmatprep.subr.mxu0 0.0
    %1711 = vmatpush1.xpose.msra.mxu0 0.0
    %1712 = vmatprep.subr.mxu0 0.0
    %1713 = vmatpush1.xpose.msra.mxu0 0.0
    %1714 = vmatprep.subr.mxu0 0.0
    %1715 = vmatpush1.xpose.msra.mxu0 0.0
    %1716 = vmatprep.mubr.f32.mxu0 0.0
    %1717 = vmatmul.mubr.f32.gmra.mrb[0].mxu0 %v1650
    %v1718 = vpop.f32.mrb[0].mxu0
    %v1719 = vadd.f32 0.0, %v1718
    %v1720 = vpop.f32.mrb[0].mxu0
    %1721 = vdwg.mxu0
    %v1723 = vsel %vm52, %v32, 0
    %1725 = vmatprep.subr.mxu0 0.0
    %1726 = vmatpush1.xpose.msra.mxu0 %v1723
    %1727 = vmatprep.subr.mxu0 0.0
    %1728 = vmatpush1.xpose.msra.mxu0 0.0
    %1729 = vmatprep.subr.mxu0 0.0
    %1730 = vmatpush1.xpose.msra.mxu0 0.0
    %1731 = vmatprep.subr.mxu0 0.0
    %1732 = vmatpush1.xpose.msra.mxu0 0.0
    %1733 = vmatprep.subr.mxu0 0.0
    %1734 = vmatpush1.xpose.msra.mxu0 0.0
    %1735 = vmatprep.subr.mxu0 0.0
    %1736 = vmatpush1.xpose.msra.mxu0 0.0
    %1737 = vmatprep.subr.mxu0 0.0
    %1738 = vmatpush1.xpose.msra.mxu0 0.0
    %1739 = vmatprep.subr.mxu0 0.0
    %1740 = vmatpush1.xpose.msra.mxu0 0.0
    %1741 = vmatprep.subr.mxu0 0.0
    %1742 = vmatpush1.xpose.msra.mxu0 0.0
    %1743 = vmatprep.subr.mxu0 0.0
    %1744 = vmatpush1.xpose.msra.mxu0 0.0
    %1745 = vmatprep.subr.mxu0 0.0
    %1746 = vmatpush1.xpose.msra.mxu0 0.0
    %1747 = vmatprep.subr.mxu0 0.0
    %1748 = vmatpush1.xpose.msra.mxu0 0.0
    %1749 = vmatprep.subr.mxu0 0.0
    %1750 = vmatpush1.xpose.msra.mxu0 0.0
    %1751 = vmatprep.subr.mxu0 0.0
    %1752 = vmatpush1.xpose.msra.mxu0 0.0
    %1753 = vmatprep.subr.mxu0 0.0
    %1754 = vmatpush1.xpose.msra.mxu0 0.0
    %1755 = vmatprep.subr.mxu0 0.0
    %1756 = vmatpush1.xpose.msra.mxu0 0.0
    %1757 = vmatprep.subr.mxu0 0.0
    %1758 = vmatpush1.xpose.msra.mxu0 0.0
    %1759 = vmatprep.subr.mxu0 0.0
    %1760 = vmatpush1.xpose.msra.mxu0 0.0
    %1761 = vmatprep.subr.mxu0 0.0
    %1762 = vmatpush1.xpose.msra.mxu0 0.0
    %1763 = vmatprep.subr.mxu0 0.0
    %1764 = vmatpush1.xpose.msra.mxu0 0.0
    %1765 = vmatprep.subr.mxu0 0.0
    %1766 = vmatpush1.xpose.msra.mxu0 0.0
    %1767 = vmatprep.subr.mxu0 0.0
    %1768 = vmatpush1.xpose.msra.mxu0 0.0
    %1769 = vmatprep.subr.mxu0 0.0
    %1770 = vmatpush1.xpose.msra.mxu0 0.0
    %1771 = vmatprep.subr.mxu0 0.0
    %1772 = vmatpush1.xpose.msra.mxu0 0.0
    %1773 = vmatprep.subr.mxu0 0.0
    %1774 = vmatpush1.xpose.msra.mxu0 0.0
    %1775 = vmatprep.subr.mxu0 0.0
    %1776 = vmatpush1.xpose.msra.mxu0 0.0
    %1777 = vmatprep.subr.mxu0 0.0
    %1778 = vmatpush1.xpose.msra.mxu0 0.0
    %1779 = vmatprep.subr.mxu0 0.0
    %1780 = vmatpush1.xpose.msra.mxu0 0.0
    %1781 = vmatprep.subr.mxu0 0.0
    %1782 = vmatpush1.xpose.msra.mxu0 0.0
    %1783 = vmatprep.subr.mxu0 0.0
    %1784 = vmatpush1.xpose.msra.mxu0 0.0
    %1785 = vmatprep.subr.mxu0 0.0
    %1786 = vmatpush1.xpose.msra.mxu0 0.0
    %1787 = vmatprep.subr.mxu0 0.0
    %1788 = vmatpush1.xpose.msra.mxu0 0.0
    %1789 = vmatprep.mubr.f32.mxu0 0.0
    %1790 = vmatmul.mubr.f32.gmra.mrb[0].mxu0 %v1723
    %v1791 = vpop.f32.mrb[0].mxu0
    %v1792 = vadd.f32 0.0, %v1791
    %v1793 = vpop.f32.mrb[0].mxu0
    %1794 = vdwg.mxu0
    %v1796 = vsel %vm52, %v33, 0
    %1798 = vmatprep.subr.mxu0 0.0
    %1799 = vmatpush1.xpose.msra.mxu0 %v1796
    %1800 = vmatprep.subr.mxu0 0.0
    %1801 = vmatpush1.xpose.msra.mxu0 0.0
    %1802 = vmatprep.subr.mxu0 0.0
    %1803 = vmatpush1.xpose.msra.mxu0 0.0
    %1804 = vmatprep.subr.mxu0 0.0
    %1805 = vmatpush1.xpose.msra.mxu0 0.0
    %1806 = vmatprep.subr.mxu0 0.0
    %1807 = vmatpush1.xpose.msra.mxu0 0.0
    %1808 = vmatprep.subr.mxu0 0.0
    %1809 = vmatpush1.xpose.msra.mxu0 0.0
    %1810 = vmatprep.subr.mxu0 0.0
    %1811 = vmatpush1.xpose.msra.mxu0 0.0
    %1812 = vmatprep.subr.mxu0 0.0
    %1813 = vmatpush1.xpose.msra.mxu0 0.0
    %1814 = vmatprep.subr.mxu0 0.0
    %1815 = vmatpush1.xpose.msra.mxu0 0.0
    %1816 = vmatprep.subr.mxu0 0.0
    %1817 = vmatpush1.xpose.msra.mxu0 0.0
    %1818 = vmatprep.subr.mxu0 0.0
    %1819 = vmatpush1.xpose.msra.mxu0 0.0
    %1820 = vmatprep.subr.mxu0 0.0
    %1821 = vmatpush1.xpose.msra.mxu0 0.0
    %1822 = vmatprep.subr.mxu0 0.0
    %1823 = vmatpush1.xpose.msra.mxu0 0.0
    %1824 = vmatprep.subr.mxu0 0.0
    %1825 = vmatpush1.xpose.msra.mxu0 0.0
    %1826 = vmatprep.subr.mxu0 0.0
    %1827 = vmatpush1.xpose.msra.mxu0 0.0
    %1828 = vmatprep.subr.mxu0 0.0
    %1829 = vmatpush1.xpose.msra.mxu0 0.0
    %1830 = vmatprep.subr.mxu0 0.0
    %1831 = vmatpush1.xpose.msra.mxu0 0.0
    %1832 = vmatprep.subr.mxu0 0.0
    %1833 = vmatpush1.xpose.msra.mxu0 0.0
    %1834 = vmatprep.subr.mxu0 0.0
    %1835 = vmatpush1.xpose.msra.mxu0 0.0
    %1836 = vmatprep.subr.mxu0 0.0
    %1837 = vmatpush1.xpose.msra.mxu0 0.0
    %1838 = vmatprep.subr.mxu0 0.0
    %1839 = vmatpush1.xpose.msra.mxu0 0.0
    %1840 = vmatprep.subr.mxu0 0.0
    %1841 = vmatpush1.xpose.msra.mxu0 0.0
    %1842 = vmatprep.subr.mxu0 0.0
    %1843 = vmatpush1.xpose.msra.mxu0 0.0
    %1844 = vmatprep.subr.mxu0 0.0
    %1845 = vmatpush1.xpose.msra.mxu0 0.0
    %1846 = vmatprep.subr.mxu0 0.0
    %1847 = vmatpush1.xpose.msra.mxu0 0.0
    %1848 = vmatprep.subr.mxu0 0.0
    %1849 = vmatpush1.xpose.msra.mxu0 0.0
    %1850 = vmatprep.subr.mxu0 0.0
    %1851 = vmatpush1.xpose.msra.mxu0 0.0
    %1852 = vmatprep.subr.mxu0 0.0
    %1853 = vmatpush1.xpose.msra.mxu0 0.0
    %1854 = vmatprep.subr.mxu0 0.0
    %1855 = vmatpush1.xpose.msra.mxu0 0.0
    %1856 = vmatprep.subr.mxu0 0.0
    %1857 = vmatpush1.xpose.msra.mxu0 0.0
    %1858 = vmatprep.subr.mxu0 0.0
    %1859 = vmatpush1.xpose.msra.mxu0 0.0
    %1860 = vmatprep.subr.mxu0 0.0
    %1861 = vmatpush1.xpose.msra.mxu0 0.0
    %1862 = vmatprep.mubr.f32.mxu0 0.0
    %1863 = vmatmul.mubr.f32.gmra.mrb[0].mxu0 %v1796
    %v1864 = vpop.f32.mrb[0].mxu0
    %v1865 = vadd.f32 0.0, %v1864
    %v1866 = vpop.f32.mrb[0].mxu0
    %1867 = vdwg.mxu0
    %v1869 = vsel %vm52, %v34, 0
    %1871 = vmatprep.subr.mxu0 0.0
    %1872 = vmatpush1.xpose.msra.mxu0 %v1869
    %1873 = vmatprep.subr.mxu0 0.0
    %1874 = vmatpush1.xpose.msra.mxu0 0.0
    %1875 = vmatprep.subr.mxu0 0.0
    %1876 = vmatpush1.xpose.msra.mxu0 0.0
    %1877 = vmatprep.subr.mxu0 0.0
    %1878 = vmatpush1.xpose.msra.mxu0 0.0
    %1879 = vmatprep.subr.mxu0 0.0
    %1880 = vmatpush1.xpose.msra.mxu0 0.0
    %1881 = vmatprep.subr.mxu0 0.0
    %1882 = vmatpush1.xpose.msra.mxu0 0.0
    %1883 = vmatprep.subr.mxu0 0.0
    %1884 = vmatpush1.xpose.msra.mxu0 0.0
    %1885 = vmatprep.subr.mxu0 0.0
    %1886 = vmatpush1.xpose.msra.mxu0 0.0
    %1887 = vmatprep.subr.mxu0 0.0
    %1888 = vmatpush1.xpose.msra.mxu0 0.0
    %1889 = vmatprep.subr.mxu0 0.0
    %1890 = vmatpush1.xpose.msra.mxu0 0.0
    %1891 = vmatprep.subr.mxu0 0.0
    %1892 = vmatpush1.xpose.msra.mxu0 0.0
    %1893 = vmatprep.subr.mxu0 0.0
    %1894 = vmatpush1.xpose.msra.mxu0 0.0
    %1895 = vmatprep.subr.mxu0 0.0
    %1896 = vmatpush1.xpose.msra.mxu0 0.0
    %1897 = vmatprep.subr.mxu0 0.0
    %1898 = vmatpush1.xpose.msra.mxu0 0.0
    %1899 = vmatprep.subr.mxu0 0.0
    %1900 = vmatpush1.xpose.msra.mxu0 0.0
    %1901 = vmatprep.subr.mxu0 0.0
    %1902 = vmatpush1.xpose.msra.mxu0 0.0
    %1903 = vmatprep.subr.mxu0 0.0
    %1904 = vmatpush1.xpose.msra.mxu0 0.0
    %1905 = vmatprep.subr.mxu0 0.0
    %1906 = vmatpush1.xpose.msra.mxu0 0.0
    %1907 = vmatprep.subr.mxu0 0.0
    %1908 = vmatpush1.xpose.msra.mxu0 0.0
    %1909 = vmatprep.subr.mxu0 0.0
    %1910 = vmatpush1.xpose.msra.mxu0 0.0
    %1911 = vmatprep.subr.mxu0 0.0
    %1912 = vmatpush1.xpose.msra.mxu0 0.0
    %1913 = vmatprep.subr.mxu0 0.0
    %1914 = vmatpush1.xpose.msra.mxu0 0.0
    %1915 = vmatprep.subr.mxu0 0.0
    %1916 = vmatpush1.xpose.msra.mxu0 0.0
    %1917 = vmatprep.subr.mxu0 0.0
    %1918 = vmatpush1.xpose.msra.mxu0 0.0
    %1919 = vmatprep.subr.mxu0 0.0
    %1920 = vmatpush1.xpose.msra.mxu0 0.0
    %1921 = vmatprep.subr.mxu0 0.0
    %1922 = vmatpush1.xpose.msra.mxu0 0.0
    %1923 = vmatprep.subr.mxu0 0.0
    %1924 = vmatpush1.xpose.msra.mxu0 0.0
    %1925 = vmatprep.subr.mxu0 0.0
    %1926 = vmatpush1.xpose.msra.mxu0 0.0
    %1927 = vmatprep.subr.mxu0 0.0
    %1928 = vmatpush1.xpose.msra.mxu0 0.0
    %1929 = vmatprep.subr.mxu0 0.0
    %1930 = vmatpush1.xpose.msra.mxu0 0.0
    %1931 = vmatprep.subr.mxu0 0.0
    %1932 = vmatpush1.xpose.msra.mxu0 0.0
    %1933 = vmatprep.subr.mxu0 0.0
    %1934 = vmatpush1.xpose.msra.mxu0 0.0
    %1935 = vmatprep.mubr.f32.mxu0 0.0
    %1936 = vmatmul.mubr.f32.gmra.mrb[0].mxu0 %v1869
    %v1937 = vpop.f32.mrb[0].mxu0
    %v1938 = vadd.f32 0.0, %v1937
    %v1939 = vpop.f32.mrb[0].mxu0
    %1940 = vdwg.mxu0
    %v1942 = vsel %vm52, %v35, 0
    %1944 = vmatprep.subr.mxu0 0.0
    %1945 = vmatpush1.xpose.msra.mxu0 %v1942
    %1946 = vmatprep.subr.mxu0 0.0
    %1947 = vmatpush1.xpose.msra.mxu0 0.0
    %1948 = vmatprep.subr.mxu0 0.0
    %1949 = vmatpush1.xpose.msra.mxu0 0.0
    %1950 = vmatprep.subr.mxu0 0.0
    %1951 = vmatpush1.xpose.msra.mxu0 0.0
    %1952 = vmatprep.subr.mxu0 0.0
    %1953 = vmatpush1.xpose.msra.mxu0 0.0
    %1954 = vmatprep.subr.mxu0 0.0
    %1955 = vmatpush1.xpose.msra.mxu0 0.0
    %1956 = vmatprep.subr.mxu0 0.0
    %1957 = vmatpush1.xpose.msra.mxu0 0.0
    %1958 = vmatprep.subr.mxu0 0.0
    %1959 = vmatpush1.xpose.msra.mxu0 0.0
    %1960 = vmatprep.subr.mxu0 0.0
    %1961 = vmatpush1.xpose.msra.mxu0 0.0
    %1962 = vmatprep.subr.mxu0 0.0
    %1963 = vmatpush1.xpose.msra.mxu0 0.0
    %1964 = vmatprep.subr.mxu0 0.0
    %1965 = vmatpush1.xpose.msra.mxu0 0.0
    %1966 = vmatprep.subr.mxu0 0.0
    %1967 = vmatpush1.xpose.msra.mxu0 0.0
    %1968 = vmatprep.subr.mxu0 0.0
    %1969 = vmatpush1.xpose.msra.mxu0 0.0
    %1970 = vmatprep.subr.mxu0 0.0
    %1971 = vmatpush1.xpose.msra.mxu0 0.0
    %1972 = vmatprep.subr.mxu0 0.0
    %1973 = vmatpush1.xpose.msra.mxu0 0.0
    %1974 = vmatprep.subr.mxu0 0.0
    %1975 = vmatpush1.xpose.msra.mxu0 0.0
    %1976 = vmatprep.subr.mxu0 0.0
    %1977 = vmatpush1.xpose.msra.mxu0 0.0
    %1978 = vmatprep.subr.mxu0 0.0
    %1979 = vmatpush1.xpose.msra.mxu0 0.0
    %1980 = vmatprep.subr.mxu0 0.0
    %1981 = vmatpush1.xpose.msra.mxu0 0.0
    %1982 = vmatprep.subr.mxu0 0.0
    %1983 = vmatpush1.xpose.msra.mxu0 0.0
    %1984 = vmatprep.subr.mxu0 0.0
    %1985 = vmatpush1.xpose.msra.mxu0 0.0
    %1986 = vmatprep.subr.mxu0 0.0
    %1987 = vmatpush1.xpose.msra.mxu0 0.0
    %1988 = vmatprep.subr.mxu0 0.0
    %1989 = vmatpush1.xpose.msra.mxu0 0.0
    %1990 = vmatprep.subr.mxu0 0.0
    %1991 = vmatpush1.xpose.msra.mxu0 0.0
    %1992 = vmatprep.subr.mxu0 0.0
    %1993 = vmatpush1.xpose.msra.mxu0 0.0
    %1994 = vmatprep.subr.mxu0 0.0
    %1995 = vmatpush1.xpose.msra.mxu0 0.0
    %1996 = vmatprep.subr.mxu0 0.0
    %1997 = vmatpush1.xpose.msra.mxu0 0.0
    %1998 = vmatprep.subr.mxu0 0.0
    %1999 = vmatpush1.xpose.msra.mxu0 0.0
    %2000 = vmatprep.subr.mxu0 0.0
    %2001 = vmatpush1.xpose.msra.mxu0 0.0
    %2002 = vmatprep.subr.mxu0 0.0
    %2003 = vmatpush1.xpose.msra.mxu0 0.0
    %2004 = vmatprep.subr.mxu0 0.0
    %2005 = vmatpush1.xpose.msra.mxu0 0.0
    %2006 = vmatprep.subr.mxu0 0.0
    %2007 = vmatpush1.xpose.msra.mxu0 0.0
    %2008 = vmatprep.mubr.f32.mxu0 0.0
    %2009 = vmatmul.mubr.f32.gmra.mrb[0].mxu0 %v1942
    %v2010 = vpop.f32.mrb[0].mxu0
    %v2011 = vadd.f32 0.0, %v2010
    %v2012 = vpop.f32.mrb[0].mxu0
    %2013 = vdwg.mxu0
    %v2015 = vsel %vm52, %v36, 0
    %2017 = vmatprep.subr.mxu0 0.0
    %2018 = vmatpush1.xpose.msra.mxu0 %v2015
    %2019 = vmatprep.subr.mxu0 0.0
    %2020 = vmatpush1.xpose.msra.mxu0 0.0
    %2021 = vmatprep.subr.mxu0 0.0
    %2022 = vmatpush1.xpose.msra.mxu0 0.0
    %2023 = vmatprep.subr.mxu0 0.0
    %2024 = vmatpush1.xpose.msra.mxu0 0.0
    %2025 = vmatprep.subr.mxu0 0.0
    %2026 = vmatpush1.xpose.msra.mxu0 0.0
    %2027 = vmatprep.subr.mxu0 0.0
    %2028 = vmatpush1.xpose.msra.mxu0 0.0
    %2029 = vmatprep.subr.mxu0 0.0
    %2030 = vmatpush1.xpose.msra.mxu0 0.0
    %2031 = vmatprep.subr.mxu0 0.0
    %2032 = vmatpush1.xpose.msra.mxu0 0.0
    %2033 = vmatprep.subr.mxu0 0.0
    %2034 = vmatpush1.xpose.msra.mxu0 0.0
    %2035 = vmatprep.subr.mxu0 0.0
    %2036 = vmatpush1.xpose.msra.mxu0 0.0
    %2037 = vmatprep.subr.mxu0 0.0
    %2038 = vmatpush1.xpose.msra.mxu0 0.0
    %2039 = vmatprep.subr.mxu0 0.0
    %2040 = vmatpush1.xpose.msra.mxu0 0.0
    %2041 = vmatprep.subr.mxu0 0.0
    %2042 = vmatpush1.xpose.msra.mxu0 0.0
    %2043 = vmatprep.subr.mxu0 0.0
    %2044 = vmatpush1.xpose.msra.mxu0 0.0
    %2045 = vmatprep.subr.mxu0 0.0
    %2046 = vmatpush1.xpose.msra.mxu0 0.0
    %2047 = vmatprep.subr.mxu0 0.0
    %2048 = vmatpush1.xpose.msra.mxu0 0.0
    %2049 = vmatprep.subr.mxu0 0.0
    %2050 = vmatpush1.xpose.msra.mxu0 0.0
    %2051 = vmatprep.subr.mxu0 0.0
    %2052 = vmatpush1.xpose.msra.mxu0 0.0
    %2053 = vmatprep.subr.mxu0 0.0
    %2054 = vmatpush1.xpose.msra.mxu0 0.0
    %2055 = vmatprep.subr.mxu0 0.0
    %2056 = vmatpush1.xpose.msra.mxu0 0.0
    %2057 = vmatprep.subr.mxu0 0.0
    %2058 = vmatpush1.xpose.msra.mxu0 0.0
    %2059 = vmatprep.subr.mxu0 0.0
    %2060 = vmatpush1.xpose.msra.mxu0 0.0
    %2061 = vmatprep.subr.mxu0 0.0
    %2062 = vmatpush1.xpose.msra.mxu0 0.0
    %2063 = vmatprep.subr.mxu0 0.0
    %2064 = vmatpush1.xpose.msra.mxu0 0.0
    %2065 = vmatprep.subr.mxu0 0.0
    %2066 = vmatpush1.xpose.msra.mxu0 0.0
    %2067 = vmatprep.subr.mxu0 0.0
    %2068 = vmatpush1.xpose.msra.mxu0 0.0
    %2069 = vmatprep.subr.mxu0 0.0
    %2070 = vmatpush1.xpose.msra.mxu0 0.0
    %2071 = vmatprep.subr.mxu0 0.0
    %2072 = vmatpush1.xpose.msra.mxu0 0.0
    %2073 = vmatprep.subr.mxu0 0.0
    %2074 = vmatpush1.xpose.msra.mxu0 0.0
    %2075 = vmatprep.subr.mxu0 0.0
    %2076 = vmatpush1.xpose.msra.mxu0 0.0
    %2077 = vmatprep.subr.mxu0 0.0
    %2078 = vmatpush1.xpose.msra.mxu0 0.0
    %2079 = vmatprep.subr.mxu0 0.0
    %2080 = vmatpush1.xpose.msra.mxu0 0.0
    %2081 = vmatprep.mubr.f32.mxu0 0.0
    %2082 = vmatmul.mubr.f32.gmra.mrb[0].mxu0 %v2015
    %v2083 = vpop.f32.mrb[0].mxu0
    %v2084 = vadd.f32 0.0, %v2083
    %v2085 = vpop.f32.mrb[0].mxu0
    %2086 = vdwg.mxu0
    %v2088 = vsel %vm52, %v37, 0
    %2090 = vmatprep.subr.mxu0 0.0
    %2091 = vmatpush1.xpose.msra.mxu0 %v2088
    %2092 = vmatprep.subr.mxu0 0.0
    %2093 = vmatpush1.xpose.msra.mxu0 0.0
    %2094 = vmatprep.subr.mxu0 0.0
    %2095 = vmatpush1.xpose.msra.mxu0 0.0
    %2096 = vmatprep.subr.mxu0 0.0
    %2097 = vmatpush1.xpose.msra.mxu0 0.0
    %2098 = vmatprep.subr.mxu0 0.0
    %2099 = vmatpush1.xpose.msra.mxu0 0.0
    %2100 = vmatprep.subr.mxu0 0.0
    %2101 = vmatpush1.xpose.msra.mxu0 0.0
    %2102 = vmatprep.subr.mxu0 0.0
    %2103 = vmatpush1.xpose.msra.mxu0 0.0
    %2104 = vmatprep.subr.mxu0 0.0
    %2105 = vmatpush1.xpose.msra.mxu0 0.0
    %2106 = vmatprep.subr.mxu0 0.0
    %2107 = vmatpush1.xpose.msra.mxu0 0.0
    %2108 = vmatprep.subr.mxu0 0.0
    %2109 = vmatpush1.xpose.msra.mxu0 0.0
    %2110 = vmatprep.subr.mxu0 0.0
    %2111 = vmatpush1.xpose.msra.mxu0 0.0
    %2112 = vmatprep.subr.mxu0 0.0
    %2113 = vmatpush1.xpose.msra.mxu0 0.0
    %2114 = vmatprep.subr.mxu0 0.0
    %2115 = vmatpush1.xpose.msra.mxu0 0.0
    %2116 = vmatprep.subr.mxu0 0.0
    %2117 = vmatpush1.xpose.msra.mxu0 0.0
    %2118 = vmatprep.subr.mxu0 0.0
    %2119 = vmatpush1.xpose.msra.mxu0 0.0
    %2120 = vmatprep.subr.mxu0 0.0
    %2121 = vmatpush1.xpose.msra.mxu0 0.0
    %2122 = vmatprep.subr.mxu0 0.0
    %2123 = vmatpush1.xpose.msra.mxu0 0.0
    %2124 = vmatprep.subr.mxu0 0.0
    %2125 = vmatpush1.xpose.msra.mxu0 0.0
    %2126 = vmatprep.subr.mxu0 0.0
    %2127 = vmatpush1.xpose.msra.mxu0 0.0
    %2128 = vmatprep.subr.mxu0 0.0
    %2129 = vmatpush1.xpose.msra.mxu0 0.0
    %2130 = vmatprep.subr.mxu0 0.0
    %2131 = vmatpush1.xpose.msra.mxu0 0.0
    %2132 = vmatprep.subr.mxu0 0.0
    %2133 = vmatpush1.xpose.msra.mxu0 0.0
    %2134 = vmatprep.subr.mxu0 0.0
    %2135 = vmatpush1.xpose.msra.mxu0 0.0
    %2136 = vmatprep.subr.mxu0 0.0
    %2137 = vmatpush1.xpose.msra.mxu0 0.0
    %2138 = vmatprep.subr.mxu0 0.0
    %2139 = vmatpush1.xpose.msra.mxu0 0.0
    %2140 = vmatprep.subr.mxu0 0.0
    %2141 = vmatpush1.xpose.msra.mxu0 0.0
    %2142 = vmatprep.subr.mxu0 0.0
    %2143 = vmatpush1.xpose.msra.mxu0 0.0
    %2144 = vmatprep.subr.mxu0 0.0
    %2145 = vmatpush1.xpose.msra.mxu0 0.0
    %2146 = vmatprep.subr.mxu0 0.0
    %2147 = vmatpush1.xpose.msra.mxu0 0.0
    %2148 = vmatprep.subr.mxu0 0.0
    %2149 = vmatpush1.xpose.msra.mxu0 0.0
    %2150 = vmatprep.subr.mxu0 0.0
    %2151 = vmatpush1.xpose.msra.mxu0 0.0
    %2152 = vmatprep.subr.mxu0 0.0
    %2153 = vmatpush1.xpose.msra.mxu0 0.0
    %2154 = vmatprep.mubr.f32.mxu0 0.0
    %2155 = vmatmul.mubr.f32.gmra.mrb[0].mxu0 %v2088
    %v2156 = vpop.f32.mrb[0].mxu0
    %v2157 = vadd.f32 0.0, %v2156
    %v2158 = vpop.f32.mrb[0].mxu0
    %2159 = vdwg.mxu0
    %v2161 = vsel %vm52, %v38, 0
    %2163 = vmatprep.subr.mxu0 0.0
    %2164 = vmatpush1.xpose.msra.mxu0 %v2161
    %2165 = vmatprep.subr.mxu0 0.0
    %2166 = vmatpush1.xpose.msra.mxu0 0.0
    %2167 = vmatprep.subr.mxu0 0.0
    %2168 = vmatpush1.xpose.msra.mxu0 0.0
    %2169 = vmatprep.subr.mxu0 0.0
    %2170 = vmatpush1.xpose.msra.mxu0 0.0
    %2171 = vmatprep.subr.mxu0 0.0
    %2172 = vmatpush1.xpose.msra.mxu0 0.0
    %2173 = vmatprep.subr.mxu0 0.0
    %2174 = vmatpush1.xpose.msra.mxu0 0.0
    %2175 = vmatprep.subr.mxu0 0.0
    %2176 = vmatpush1.xpose.msra.mxu0 0.0
    %2177 = vmatprep.subr.mxu0 0.0
    %2178 = vmatpush1.xpose.msra.mxu0 0.0
    %2179 = vmatprep.subr.mxu0 0.0
    %2180 = vmatpush1.xpose.msra.mxu0 0.0
    %2181 = vmatprep.subr.mxu0 0.0
    %2182 = vmatpush1.xpose.msra.mxu0 0.0
    %2183 = vmatprep.subr.mxu0 0.0
    %2184 = vmatpush1.xpose.msra.mxu0 0.0
    %2185 = vmatprep.subr.mxu0 0.0
    %2186 = vmatpush1.xpose.msra.mxu0 0.0
    %2187 = vmatprep.subr.mxu0 0.0
    %2188 = vmatpush1.xpose.msra.mxu0 0.0
    %2189 = vmatprep.subr.mxu0 0.0
    %2190 = vmatpush1.xpose.msra.mxu0 0.0
    %2191 = vmatprep.subr.mxu0 0.0
    %2192 = vmatpush1.xpose.msra.mxu0 0.0
    %2193 = vmatprep.subr.mxu0 0.0
    %2194 = vmatpush1.xpose.msra.mxu0 0.0
    %2195 = vmatprep.subr.mxu0 0.0
    %2196 = vmatpush1.xpose.msra.mxu0 0.0
    %2197 = vmatprep.subr.mxu0 0.0
    %2198 = vmatpush1.xpose.msra.mxu0 0.0
    %2199 = vmatprep.subr.mxu0 0.0
    %2200 = vmatpush1.xpose.msra.mxu0 0.0
    %2201 = vmatprep.subr.mxu0 0.0
    %2202 = vmatpush1.xpose.msra.mxu0 0.0
    %2203 = vmatprep.subr.mxu0 0.0
    %2204 = vmatpush1.xpose.msra.mxu0 0.0
    %2205 = vmatprep.subr.mxu0 0.0
    %2206 = vmatpush1.xpose.msra.mxu0 0.0
    %2207 = vmatprep.subr.mxu0 0.0
    %2208 = vmatpush1.xpose.msra.mxu0 0.0
    %2209 = vmatprep.subr.mxu0 0.0
    %2210 = vmatpush1.xpose.msra.mxu0 0.0
    %2211 = vmatprep.subr.mxu0 0.0
    %2212 = vmatpush1.xpose.msra.mxu0 0.0
    %2213 = vmatprep.subr.mxu0 0.0
    %2214 = vmatpush1.xpose.msra.mxu0 0.0
    %2215 = vmatprep.subr.mxu0 0.0
    %2216 = vmatpush1.xpose.msra.mxu0 0.0
    %2217 = vmatprep.subr.mxu0 0.0
    %2218 = vmatpush1.xpose.msra.mxu0 0.0
    %2219 = vmatprep.subr.mxu0 0.0
    %2220 = vmatpush1.xpose.msra.mxu0 0.0
    %2221 = vmatprep.subr.mxu0 0.0
    %2222 = vmatpush1.xpose.msra.mxu0 0.0
    %2223 = vmatprep.subr.mxu0 0.0
    %2224 = vmatpush1.xpose.msra.mxu0 0.0
    %2225 = vmatprep.subr.mxu0 0.0
    %2226 = vmatpush1.xpose.msra.mxu0 0.0
    %2227 = vmatprep.mubr.f32.mxu0 0.0
    %2228 = vmatmul.mubr.f32.gmra.mrb[0].mxu0 %v2161
    %v2229 = vpop.f32.mrb[0].mxu0
    %v2230 = vadd.f32 0.0, %v2229
    %v2231 = vpop.f32.mrb[0].mxu0
    %2232 = vdwg.mxu0
    %v2234 = vsel %vm52, %v39, 0
    %2236 = vmatprep.subr.mxu0 0.0
    %2237 = vmatpush1.xpose.msra.mxu0 %v2234
    %2238 = vmatprep.subr.mxu0 0.0
    %2239 = vmatpush1.xpose.msra.mxu0 0.0
    %2240 = vmatprep.subr.mxu0 0.0
    %2241 = vmatpush1.xpose.msra.mxu0 0.0
    %2242 = vmatprep.subr.mxu0 0.0
    %2243 = vmatpush1.xpose.msra.mxu0 0.0
    %2244 = vmatprep.subr.mxu0 0.0
    %2245 = vmatpush1.xpose.msra.mxu0 0.0
    %2246 = vmatprep.subr.mxu0 0.0
    %2247 = vmatpush1.xpose.msra.mxu0 0.0
    %2248 = vmatprep.subr.mxu0 0.0
    %2249 = vmatpush1.xpose.msra.mxu0 0.0
    %2250 = vmatprep.subr.mxu0 0.0
    %2251 = vmatpush1.xpose.msra.mxu0 0.0
    %2252 = vmatprep.subr.mxu0 0.0
    %2253 = vmatpush1.xpose.msra.mxu0 0.0
    %2254 = vmatprep.subr.mxu0 0.0
    %2255 = vmatpush1.xpose.msra.mxu0 0.0
    %2256 = vmatprep.subr.mxu0 0.0
    %2257 = vmatpush1.xpose.msra.mxu0 0.0
    %2258 = vmatprep.subr.mxu0 0.0
    %2259 = vmatpush1.xpose.msra.mxu0 0.0
    %2260 = vmatprep.subr.mxu0 0.0
    %2261 = vmatpush1.xpose.msra.mxu0 0.0
    %2262 = vmatprep.subr.mxu0 0.0
    %2263 = vmatpush1.xpose.msra.mxu0 0.0
    %2264 = vmatprep.subr.mxu0 0.0
    %2265 = vmatpush1.xpose.msra.mxu0 0.0
    %2266 = vmatprep.subr.mxu0 0.0
    %2267 = vmatpush1.xpose.msra.mxu0 0.0
    %2268 = vmatprep.subr.mxu0 0.0
    %2269 = vmatpush1.xpose.msra.mxu0 0.0
    %2270 = vmatprep.subr.mxu0 0.0
    %2271 = vmatpush1.xpose.msra.mxu0 0.0
    %2272 = vmatprep.subr.mxu0 0.0
    %2273 = vmatpush1.xpose.msra.mxu0 0.0
    %2274 = vmatprep.subr.mxu0 0.0
    %2275 = vmatpush1.xpose.msra.mxu0 0.0
    %2276 = vmatprep.subr.mxu0 0.0
    %2277 = vmatpush1.xpose.msra.mxu0 0.0
    %2278 = vmatprep.subr.mxu0 0.0
    %2279 = vmatpush1.xpose.msra.mxu0 0.0
    %2280 = vmatprep.subr.mxu0 0.0
    %2281 = vmatpush1.xpose.msra.mxu0 0.0
    %2282 = vmatprep.subr.mxu0 0.0
    %2283 = vmatpush1.xpose.msra.mxu0 0.0
    %2284 = vmatprep.subr.mxu0 0.0
    %2285 = vmatpush1.xpose.msra.mxu0 0.0
    %2286 = vmatprep.subr.mxu0 0.0
    %2287 = vmatpush1.xpose.msra.mxu0 0.0
    %2288 = vmatprep.subr.mxu0 0.0
    %2289 = vmatpush1.xpose.msra.mxu0 0.0
    %2290 = vmatprep.subr.mxu0 0.0
    %2291 = vmatpush1.xpose.msra.mxu0 0.0
    %2292 = vmatprep.subr.mxu0 0.0
    %2293 = vmatpush1.xpose.msra.mxu0 0.0
    %2294 = vmatprep.subr.mxu0 0.0
    %2295 = vmatpush1.xpose.msra.mxu0 0.0
    %2296 = vmatprep.subr.mxu0 0.0
    %2297 = vmatpush1.xpose.msra.mxu0 0.0
    %2298 = vmatprep.subr.mxu0 0.0
    %2299 = vmatpush1.xpose.msra.mxu0 0.0
    %2300 = vmatprep.mubr.f32.mxu0 0.0
    %2301 = vmatmul.mubr.f32.gmra.mrb[0].mxu0 %v2234
    %v2302 = vpop.f32.mrb[0].mxu0
    %v2303 = vadd.f32 0.0, %v2302
    %v2304 = vpop.f32.mrb[0].mxu0
    %2305 = vdwg.mxu0
    %v2307 = vsel %vm52, %v40, 0
    %2309 = vmatprep.subr.mxu0 0.0
    %2310 = vmatpush1.xpose.msra.mxu0 %v2307
    %2311 = vmatprep.subr.mxu0 0.0
    %2312 = vmatpush1.xpose.msra.mxu0 0.0
    %2313 = vmatprep.subr.mxu0 0.0
    %2314 = vmatpush1.xpose.msra.mxu0 0.0
    %2315 = vmatprep.subr.mxu0 0.0
    %2316 = vmatpush1.xpose.msra.mxu0 0.0
    %2317 = vmatprep.subr.mxu0 0.0
    %2318 = vmatpush1.xpose.msra.mxu0 0.0
    %2319 = vmatprep.subr.mxu0 0.0
    %2320 = vmatpush1.xpose.msra.mxu0 0.0
    %2321 = vmatprep.subr.mxu0 0.0
    %2322 = vmatpush1.xpose.msra.mxu0 0.0
    %2323 = vmatprep.subr.mxu0 0.0
    %2324 = vmatpush1.xpose.msra.mxu0 0.0
    %2325 = vmatprep.subr.mxu0 0.0
    %2326 = vmatpush1.xpose.msra.mxu0 0.0
    %2327 = vmatprep.subr.mxu0 0.0
    %2328 = vmatpush1.xpose.msra.mxu0 0.0
    %2329 = vmatprep.subr.mxu0 0.0
    %2330 = vmatpush1.xpose.msra.mxu0 0.0
    %2331 = vmatprep.subr.mxu0 0.0
    %2332 = vmatpush1.xpose.msra.mxu0 0.0
    %2333 = vmatprep.subr.mxu0 0.0
    %2334 = vmatpush1.xpose.msra.mxu0 0.0
    %2335 = vmatprep.subr.mxu0 0.0
    %2336 = vmatpush1.xpose.msra.mxu0 0.0
    %2337 = vmatprep.subr.mxu0 0.0
    %2338 = vmatpush1.xpose.msra.mxu0 0.0
    %2339 = vmatprep.subr.mxu0 0.0
    %2340 = vmatpush1.xpose.msra.mxu0 0.0
    %2341 = vmatprep.subr.mxu0 0.0
    %2342 = vmatpush1.xpose.msra.mxu0 0.0
    %2343 = vmatprep.subr.mxu0 0.0
    %2344 = vmatpush1.xpose.msra.mxu0 0.0
    %2345 = vmatprep.subr.mxu0 0.0
    %2346 = vmatpush1.xpose.msra.mxu0 0.0
    %2347 = vmatprep.subr.mxu0 0.0
    %2348 = vmatpush1.xpose.msra.mxu0 0.0
    %2349 = vmatprep.subr.mxu0 0.0
    %2350 = vmatpush1.xpose.msra.mxu0 0.0
    %2351 = vmatprep.subr.mxu0 0.0
    %2352 = vmatpush1.xpose.msra.mxu0 0.0
    %2353 = vmatprep.subr.mxu0 0.0
    %2354 = vmatpush1.xpose.msra.mxu0 0.0
    %2355 = vmatprep.subr.mxu0 0.0
    %2356 = vmatpush1.xpose.msra.mxu0 0.0
    %2357 = vmatprep.subr.mxu0 0.0
    %2358 = vmatpush1.xpose.msra.mxu0 0.0
    %2359 = vmatprep.subr.mxu0 0.0
    %2360 = vmatpush1.xpose.msra.mxu0 0.0
    %2361 = vmatprep.subr.mxu0 0.0
    %2362 = vmatpush1.xpose.msra.mxu0 0.0
    %2363 = vmatprep.subr.mxu0 0.0
    %2364 = vmatpush1.xpose.msra.mxu0 0.0
    %2365 = vmatprep.subr.mxu0 0.0
    %2366 = vmatpush1.xpose.msra.mxu0 0.0
    %2367 = vmatprep.subr.mxu0 0.0
    %2368 = vmatpush1.xpose.msra.mxu0 0.0
    %2369 = vmatprep.subr.mxu0 0.0
    %2370 = vmatpush1.xpose.msra.mxu0 0.0
    %2371 = vmatprep.subr.mxu0 0.0
    %2372 = vmatpush1.xpose.msra.mxu0 0.0
    %2373 = vmatprep.mubr.f32.mxu0 0.0
    %2374 = vmatmul.mubr.f32.gmra.mrb[0].mxu0 %v2307
    %v2375 = vpop.f32.mrb[0].mxu0
    %v2376 = vadd.f32 0.0, %v2375
    %v2377 = vpop.f32.mrb[0].mxu0
    %2378 = vdwg.mxu0
    %v2380 = vsel %vm52, %v41, 0
    %2382 = vmatprep.subr.mxu0 0.0
    %2383 = vmatpush1.xpose.msra.mxu0 %v2380
    %2384 = vmatprep.subr.mxu0 0.0
    %2385 = vmatpush1.xpose.msra.mxu0 0.0
    %2386 = vmatprep.subr.mxu0 0.0
    %2387 = vmatpush1.xpose.msra.mxu0 0.0
    %2388 = vmatprep.subr.mxu0 0.0
    %2389 = vmatpush1.xpose.msra.mxu0 0.0
    %2390 = vmatprep.subr.mxu0 0.0
    %2391 = vmatpush1.xpose.msra.mxu0 0.0
    %2392 = vmatprep.subr.mxu0 0.0
    %2393 = vmatpush1.xpose.msra.mxu0 0.0
    %2394 = vmatprep.subr.mxu0 0.0
    %2395 = vmatpush1.xpose.msra.mxu0 0.0
    %2396 = vmatprep.subr.mxu0 0.0
    %2397 = vmatpush1.xpose.msra.mxu0 0.0
    %2398 = vmatprep.subr.mxu0 0.0
    %2399 = vmatpush1.xpose.msra.mxu0 0.0
    %2400 = vmatprep.subr.mxu0 0.0
    %2401 = vmatpush1.xpose.msra.mxu0 0.0
    %2402 = vmatprep.subr.mxu0 0.0
    %2403 = vmatpush1.xpose.msra.mxu0 0.0
    %2404 = vmatprep.subr.mxu0 0.0
    %2405 = vmatpush1.xpose.msra.mxu0 0.0
    %2406 = vmatprep.subr.mxu0 0.0
    %2407 = vmatpush1.xpose.msra.mxu0 0.0
    %2408 = vmatprep.subr.mxu0 0.0
    %2409 = vmatpush1.xpose.msra.mxu0 0.0
    %2410 = vmatprep.subr.mxu0 0.0
    %2411 = vmatpush1.xpose.msra.mxu0 0.0
    %2412 = vmatprep.subr.mxu0 0.0
    %2413 = vmatpush1.xpose.msra.mxu0 0.0
    %2414 = vmatprep.subr.mxu0 0.0
    %2415 = vmatpush1.xpose.msra.mxu0 0.0
    %2416 = vmatprep.subr.mxu0 0.0
    %2417 = vmatpush1.xpose.msra.mxu0 0.0
    %2418 = vmatprep.subr.mxu0 0.0
    %2419 = vmatpush1.xpose.msra.mxu0 0.0
    %2420 = vmatprep.subr.mxu0 0.0
    %2421 = vmatpush1.xpose.msra.mxu0 0.0
    %2422 = vmatprep.subr.mxu0 0.0
    %2423 = vmatpush1.xpose.msra.mxu0 0.0
    %2424 = vmatprep.subr.mxu0 0.0
    %2425 = vmatpush1.xpose.msra.mxu0 0.0
    %2426 = vmatprep.subr.mxu0 0.0
    %2427 = vmatpush1.xpose.msra.mxu0 0.0
    %2428 = vmatprep.subr.mxu0 0.0
    %2429 = vmatpush1.xpose.msra.mxu0 0.0
    %2430 = vmatprep.subr.mxu0 0.0
    %2431 = vmatpush1.xpose.msra.mxu0 0.0
    %2432 = vmatprep.subr.mxu0 0.0
    %2433 = vmatpush1.xpose.msra.mxu0 0.0
    %2434 = vmatprep.subr.mxu0 0.0
    %2435 = vmatpush1.xpose.msra.mxu0 0.0
    %2436 = vmatprep.subr.mxu0 0.0
    %2437 = vmatpush1.xpose.msra.mxu0 0.0
    %2438 = vmatprep.subr.mxu0 0.0
    %2439 = vmatpush1.xpose.msra.mxu0 0.0
    %2440 = vmatprep.subr.mxu0 0.0
    %2441 = vmatpush1.xpose.msra.mxu0 0.0
    %2442 = vmatprep.subr.mxu0 0.0
    %2443 = vmatpush1.xpose.msra.mxu0 0.0
    %2444 = vmatprep.subr.mxu0 0.0
    %2445 = vmatpush1.xpose.msra.mxu0 0.0
    %2446 = vmatprep.mubr.f32.mxu0 0.0
    %2447 = vmatmul.mubr.f32.gmra.mrb[0].mxu0 %v2380
    %v2448 = vpop.f32.mrb[0].mxu0
    %v2449 = vadd.f32 0.0, %v2448
    %v2450 = vpop.f32.mrb[0].mxu0
    %2451 = vdwg.mxu0
    %v2453 = vsel %vm52, %v42, 0
    %2455 = vmatprep.subr.mxu0 0.0
    %2456 = vmatpush1.xpose.msra.mxu0 %v2453
    %2457 = vmatprep.subr.mxu0 0.0
    %2458 = vmatpush1.xpose.msra.mxu0 0.0
    %2459 = vmatprep.subr.mxu0 0.0
    %2460 = vmatpush1.xpose.msra.mxu0 0.0
    %2461 = vmatprep.subr.mxu0 0.0
    %2462 = vmatpush1.xpose.msra.mxu0 0.0
    %2463 = vmatprep.subr.mxu0 0.0
    %2464 = vmatpush1.xpose.msra.mxu0 0.0
    %2465 = vmatprep.subr.mxu0 0.0
    %2466 = vmatpush1.xpose.msra.mxu0 0.0
    %2467 = vmatprep.subr.mxu0 0.0
    %2468 = vmatpush1.xpose.msra.mxu0 0.0
    %2469 = vmatprep.subr.mxu0 0.0
    %2470 = vmatpush1.xpose.msra.mxu0 0.0
    %2471 = vmatprep.subr.mxu0 0.0
    %2472 = vmatpush1.xpose.msra.mxu0 0.0
    %2473 = vmatprep.subr.mxu0 0.0
    %2474 = vmatpush1.xpose.msra.mxu0 0.0
    %2475 = vmatprep.subr.mxu0 0.0
    %2476 = vmatpush1.xpose.msra.mxu0 0.0
    %2477 = vmatprep.subr.mxu0 0.0
    %2478 = vmatpush1.xpose.msra.mxu0 0.0
    %2479 = vmatprep.subr.mxu0 0.0
    %2480 = vmatpush1.xpose.msra.mxu0 0.0
    %2481 = vmatprep.subr.mxu0 0.0
    %2482 = vmatpush1.xpose.msra.mxu0 0.0
    %2483 = vmatprep.subr.mxu0 0.0
    %2484 = vmatpush1.xpose.msra.mxu0 0.0
    %2485 = vmatprep.subr.mxu0 0.0
    %2486 = vmatpush1.xpose.msra.mxu0 0.0
    %2487 = vmatprep.subr.mxu0 0.0
    %2488 = vmatpush1.xpose.msra.mxu0 0.0
    %2489 = vmatprep.subr.mxu0 0.0
    %2490 = vmatpush1.xpose.msra.mxu0 0.0
    %2491 = vmatprep.subr.mxu0 0.0
    %2492 = vmatpush1.xpose.msra.mxu0 0.0
    %2493 = vmatprep.subr.mxu0 0.0
    %2494 = vmatpush1.xpose.msra.mxu0 0.0
    %2495 = vmatprep.subr.mxu0 0.0
    %2496 = vmatpush1.xpose.msra.mxu0 0.0
    %2497 = vmatprep.subr.mxu0 0.0
    %2498 = vmatpush1.xpose.msra.mxu0 0.0
    %2499 = vmatprep.subr.mxu0 0.0
    %2500 = vmatpush1.xpose.msra.mxu0 0.0
    %2501 = vmatprep.subr.mxu0 0.0
    %2502 = vmatpush1.xpose.msra.mxu0 0.0
    %2503 = vmatprep.subr.mxu0 0.0
    %2504 = vmatpush1.xpose.msra.mxu0 0.0
    %2505 = vmatprep.subr.mxu0 0.0
    %2506 = vmatpush1.xpose.msra.mxu0 0.0
    %2507 = vmatprep.subr.mxu0 0.0
    %2508 = vmatpush1.xpose.msra.mxu0 0.0
    %2509 = vmatprep.subr.mxu0 0.0
    %2510 = vmatpush1.xpose.msra.mxu0 0.0
    %2511 = vmatprep.subr.mxu0 0.0
    %2512 = vmatpush1.xpose.msra.mxu0 0.0
    %2513 = vmatprep.subr.mxu0 0.0
    %2514 = vmatpush1.xpose.msra.mxu0 0.0
    %2515 = vmatprep.subr.mxu0 0.0
    %2516 = vmatpush1.xpose.msra.mxu0 0.0
    %2517 = vmatprep.subr.mxu0 0.0
    %2518 = vmatpush1.xpose.msra.mxu0 0.0
    %2519 = vmatprep.mubr.f32.mxu0 0.0
    %2520 = vmatmul.mubr.f32.gmra.mrb[0].mxu0 %v2453
    %v2521 = vpop.f32.mrb[0].mxu0
    %v2522 = vadd.f32 0.0, %v2521
    %v2523 = vpop.f32.mrb[0].mxu0
    %2524 = vdwg.mxu0
    %v2526 = vsel %vm52, %v43, 0
    %2528 = vmatprep.subr.mxu0 0.0
    %2529 = vmatpush1.xpose.msra.mxu0 %v2526
    %2530 = vmatprep.subr.mxu0 0.0
    %2531 = vmatpush1.xpose.msra.mxu0 0.0
    %2532 = vmatprep.subr.mxu0 0.0
    %2533 = vmatpush1.xpose.msra.mxu0 0.0
    %2534 = vmatprep.subr.mxu0 0.0
    %2535 = vmatpush1.xpose.msra.mxu0 0.0
    %2536 = vmatprep.subr.mxu0 0.0
    %2537 = vmatpush1.xpose.msra.mxu0 0.0
    %2538 = vmatprep.subr.mxu0 0.0
    %2539 = vmatpush1.xpose.msra.mxu0 0.0
    %2540 = vmatprep.subr.mxu0 0.0
    %2541 = vmatpush1.xpose.msra.mxu0 0.0
    %2542 = vmatprep.subr.mxu0 0.0
    %2543 = vmatpush1.xpose.msra.mxu0 0.0
    %2544 = vmatprep.subr.mxu0 0.0
    %2545 = vmatpush1.xpose.msra.mxu0 0.0
    %2546 = vmatprep.subr.mxu0 0.0
    %2547 = vmatpush1.xpose.msra.mxu0 0.0
    %2548 = vmatprep.subr.mxu0 0.0
    %2549 = vmatpush1.xpose.msra.mxu0 0.0
    %2550 = vmatprep.subr.mxu0 0.0
    %2551 = vmatpush1.xpose.msra.mxu0 0.0
    %2552 = vmatprep.subr.mxu0 0.0
    %2553 = vmatpush1.xpose.msra.mxu0 0.0
    %2554 = vmatprep.subr.mxu0 0.0
    %2555 = vmatpush1.xpose.msra.mxu0 0.0
    %2556 = vmatprep.subr.mxu0 0.0
    %2557 = vmatpush1.xpose.msra.mxu0 0.0
    %2558 = vmatprep.subr.mxu0 0.0
    %2559 = vmatpush1.xpose.msra.mxu0 0.0
    %2560 = vmatprep.subr.mxu0 0.0
    %2561 = vmatpush1.xpose.msra.mxu0 0.0
    %2562 = vmatprep.subr.mxu0 0.0
    %2563 = vmatpush1.xpose.msra.mxu0 0.0
    %2564 = vmatprep.subr.mxu0 0.0
    %2565 = vmatpush1.xpose.msra.mxu0 0.0
    %2566 = vmatprep.subr.mxu0 0.0
    %2567 = vmatpush1.xpose.msra.mxu0 0.0
    %2568 = vmatprep.subr.mxu0 0.0
    %2569 = vmatpush1.xpose.msra.mxu0 0.0
    %2570 = vmatprep.subr.mxu0 0.0
    %2571 = vmatpush1.xpose.msra.mxu0 0.0
    %2572 = vmatprep.subr.mxu0 0.0
    %2573 = vmatpush1.xpose.msra.mxu0 0.0
    %2574 = vmatprep.subr.mxu0 0.0
    %2575 = vmatpush1.xpose.msra.mxu0 0.0
    %2576 = vmatprep.subr.mxu0 0.0
    %2577 = vmatpush1.xpose.msra.mxu0 0.0
    %2578 = vmatprep.subr.mxu0 0.0
    %2579 = vmatpush1.xpose.msra.mxu0 0.0
    %2580 = vmatprep.subr.mxu0 0.0
    %2581 = vmatpush1.xpose.msra.mxu0 0.0
    %2582 = vmatprep.subr.mxu0 0.0
    %2583 = vmatpush1.xpose.msra.mxu0 0.0
    %2584 = vmatprep.subr.mxu0 0.0
    %2585 = vmatpush1.xpose.msra.mxu0 0.0
    %2586 = vmatprep.subr.mxu0 0.0
    %2587 = vmatpush1.xpose.msra.mxu0 0.0
    %2588 = vmatprep.subr.mxu0 0.0
    %2589 = vmatpush1.xpose.msra.mxu0 0.0
    %2590 = vmatprep.subr.mxu0 0.0
    %2591 = vmatpush1.xpose.msra.mxu0 0.0
    %2592 = vmatprep.mubr.f32.mxu0 0.0
    %2593 = vmatmul.mubr.f32.gmra.mrb[0].mxu0 %v2526
    %v2594 = vpop.f32.mrb[0].mxu0
    %v2595 = vadd.f32 0.0, %v2594
    %v2596 = vpop.f32.mrb[0].mxu0
    %2597 = vdwg.mxu0
    %v2599 = vsel %vm52, %v44, 0
    %2601 = vmatprep.subr.mxu0 0.0
    %2602 = vmatpush1.xpose.msra.mxu0 %v2599
    %2603 = vmatprep.subr.mxu0 0.0
    %2604 = vmatpush1.xpose.msra.mxu0 0.0
    %2605 = vmatprep.subr.mxu0 0.0
    %2606 = vmatpush1.xpose.msra.mxu0 0.0
    %2607 = vmatprep.subr.mxu0 0.0
    %2608 = vmatpush1.xpose.msra.mxu0 0.0
    %2609 = vmatprep.subr.mxu0 0.0
    %2610 = vmatpush1.xpose.msra.mxu0 0.0
    %2611 = vmatprep.subr.mxu0 0.0
    %2612 = vmatpush1.xpose.msra.mxu0 0.0
    %2613 = vmatprep.subr.mxu0 0.0
    %2614 = vmatpush1.xpose.msra.mxu0 0.0
    %2615 = vmatprep.subr.mxu0 0.0
    %2616 = vmatpush1.xpose.msra.mxu0 0.0
    %2617 = vmatprep.subr.mxu0 0.0
    %2618 = vmatpush1.xpose.msra.mxu0 0.0
    %2619 = vmatprep.subr.mxu0 0.0
    %2620 = vmatpush1.xpose.msra.mxu0 0.0
    %2621 = vmatprep.subr.mxu0 0.0
    %2622 = vmatpush1.xpose.msra.mxu0 0.0
    %2623 = vmatprep.subr.mxu0 0.0
    %2624 = vmatpush1.xpose.msra.mxu0 0.0
    %2625 = vmatprep.subr.mxu0 0.0
    %2626 = vmatpush1.xpose.msra.mxu0 0.0
    %2627 = vmatprep.subr.mxu0 0.0
    %2628 = vmatpush1.xpose.msra.mxu0 0.0
    %2629 = vmatprep.subr.mxu0 0.0
    %2630 = vmatpush1.xpose.msra.mxu0 0.0
    %2631 = vmatprep.subr.mxu0 0.0
    %2632 = vmatpush1.xpose.msra.mxu0 0.0
    %2633 = vmatprep.subr.mxu0 0.0
    %2634 = vmatpush1.xpose.msra.mxu0 0.0
    %2635 = vmatprep.subr.mxu0 0.0
    %2636 = vmatpush1.xpose.msra.mxu0 0.0
    %2637 = vmatprep.subr.mxu0 0.0
    %2638 = vmatpush1.xpose.msra.mxu0 0.0
    %2639 = vmatprep.subr.mxu0 0.0
    %2640 = vmatpush1.xpose.msra.mxu0 0.0
    %2641 = vmatprep.subr.mxu0 0.0
    %2642 = vmatpush1.xpose.msra.mxu0 0.0
    %2643 = vmatprep.subr.mxu0 0.0
    %2644 = vmatpush1.xpose.msra.mxu0 0.0
    %2645 = vmatprep.subr.mxu0 0.0
    %2646 = vmatpush1.xpose.msra.mxu0 0.0
    %2647 = vmatprep.subr.mxu0 0.0
    %2648 = vmatpush1.xpose.msra.mxu0 0.0
    %2649 = vmatprep.subr.mxu0 0.0
    %2650 = vmatpush1.xpose.msra.mxu0 0.0
    %2651 = vmatprep.subr.mxu0 0.0
    %2652 = vmatpush1.xpose.msra.mxu0 0.0
    %2653 = vmatprep.subr.mxu0 0.0
    %2654 = vmatpush1.xpose.msra.mxu0 0.0
    %2655 = vmatprep.subr.mxu0 0.0
    %2656 = vmatpush1.xpose.msra.mxu0 0.0
    %2657 = vmatprep.subr.mxu0 0.0
    %2658 = vmatpush1.xpose.msra.mxu0 0.0
    %2659 = vmatprep.subr.mxu0 0.0
    %2660 = vmatpush1.xpose.msra.mxu0 0.0
    %2661 = vmatprep.subr.mxu0 0.0
    %2662 = vmatpush1.xpose.msra.mxu0 0.0
    %2663 = vmatprep.subr.mxu0 0.0
    %2664 = vmatpush1.xpose.msra.mxu0 0.0
    %2665 = vmatprep.mubr.f32.mxu0 0.0
    %2666 = vmatmul.mubr.f32.gmra.mrb[0].mxu0 %v2599
    %v2667 = vpop.f32.mrb[0].mxu0
    %v2668 = vadd.f32 0.0, %v2667
    %v2669 = vpop.f32.mrb[0].mxu0
    %2670 = vdwg.mxu0
    %v2672 = vsel %vm52, %v45, 0
    %2674 = vmatprep.subr.mxu0 0.0
    %2675 = vmatpush1.xpose.msra.mxu0 %v2672
    %2676 = vmatprep.subr.mxu0 0.0
    %2677 = vmatpush1.xpose.msra.mxu0 0.0
    %2678 = vmatprep.subr.mxu0 0.0
    %2679 = vmatpush1.xpose.msra.mxu0 0.0
    %2680 = vmatprep.subr.mxu0 0.0
    %2681 = vmatpush1.xpose.msra.mxu0 0.0
    %2682 = vmatprep.subr.mxu0 0.0
    %2683 = vmatpush1.xpose.msra.mxu0 0.0
    %2684 = vmatprep.subr.mxu0 0.0
    %2685 = vmatpush1.xpose.msra.mxu0 0.0
    %2686 = vmatprep.subr.mxu0 0.0
    %2687 = vmatpush1.xpose.msra.mxu0 0.0
    %2688 = vmatprep.subr.mxu0 0.0
    %2689 = vmatpush1.xpose.msra.mxu0 0.0
    %2690 = vmatprep.subr.mxu0 0.0
    %2691 = vmatpush1.xpose.msra.mxu0 0.0
    %2692 = vmatprep.subr.mxu0 0.0
    %2693 = vmatpush1.xpose.msra.mxu0 0.0
    %2694 = vmatprep.subr.mxu0 0.0
    %2695 = vmatpush1.xpose.msra.mxu0 0.0
    %2696 = vmatprep.subr.mxu0 0.0
    %2697 = vmatpush1.xpose.msra.mxu0 0.0
    %2698 = vmatprep.subr.mxu0 0.0
    %2699 = vmatpush1.xpose.msra.mxu0 0.0
    %2700 = vmatprep.subr.mxu0 0.0
    %2701 = vmatpush1.xpose.msra.mxu0 0.0
    %2702 = vmatprep.subr.mxu0 0.0
    %2703 = vmatpush1.xpose.msra.mxu0 0.0
    %2704 = vmatprep.subr.mxu0 0.0
    %2705 = vmatpush1.xpose.msra.mxu0 0.0
    %2706 = vmatprep.subr.mxu0 0.0
    %2707 = vmatpush1.xpose.msra.mxu0 0.0
    %2708 = vmatprep.subr.mxu0 0.0
    %2709 = vmatpush1.xpose.msra.mxu0 0.0
    %2710 = vmatprep.subr.mxu0 0.0
    %2711 = vmatpush1.xpose.msra.mxu0 0.0
    %2712 = vmatprep.subr.mxu0 0.0
    %2713 = vmatpush1.xpose.msra.mxu0 0.0
    %2714 = vmatprep.subr.mxu0 0.0
    %2715 = vmatpush1.xpose.msra.mxu0 0.0
    %2716 = vmatprep.subr.mxu0 0.0
    %2717 = vmatpush1.xpose.msra.mxu0 0.0
    %2718 = vmatprep.subr.mxu0 0.0
    %2719 = vmatpush1.xpose.msra.mxu0 0.0
    %2720 = vmatprep.subr.mxu0 0.0
    %2721 = vmatpush1.xpose.msra.mxu0 0.0
    %2722 = vmatprep.subr.mxu0 0.0
    %2723 = vmatpush1.xpose.msra.mxu0 0.0
    %2724 = vmatprep.subr.mxu0 0.0
    %2725 = vmatpush1.xpose.msra.mxu0 0.0
    %2726 = vmatprep.subr.mxu0 0.0
    %2727 = vmatpush1.xpose.msra.mxu0 0.0
    %2728 = vmatprep.subr.mxu0 0.0
    %2729 = vmatpush1.xpose.msra.mxu0 0.0
    %2730 = vmatprep.subr.mxu0 0.0
    %2731 = vmatpush1.xpose.msra.mxu0 0.0
    %2732 = vmatprep.subr.mxu0 0.0
    %2733 = vmatpush1.xpose.msra.mxu0 0.0
    %2734 = vmatprep.subr.mxu0 0.0
    %2735 = vmatpush1.xpose.msra.mxu0 0.0
    %2736 = vmatprep.subr.mxu0 0.0
    %2737 = vmatpush1.xpose.msra.mxu0 0.0
    %2738 = vmatprep.mubr.f32.mxu0 0.0
    %2739 = vmatmul.mubr.f32.gmra.mrb[0].mxu0 %v2672
    %v2740 = vpop.f32.mrb[0].mxu0
    %v2741 = vadd.f32 0.0, %v2740
    %v2742 = vpop.f32.mrb[0].mxu0
    %2743 = vdwg.mxu0
    %v2745 = vsel %vm52, %v46, 0
    %2747 = vmatprep.subr.mxu0 0.0
    %2748 = vmatpush1.xpose.msra.mxu0 %v2745
    %2749 = vmatprep.subr.mxu0 0.0
    %2750 = vmatpush1.xpose.msra.mxu0 0.0
    %2751 = vmatprep.subr.mxu0 0.0
    %2752 = vmatpush1.xpose.msra.mxu0 0.0
    %2753 = vmatprep.subr.mxu0 0.0
    %2754 = vmatpush1.xpose.msra.mxu0 0.0
    %2755 = vmatprep.subr.mxu0 0.0
    %2756 = vmatpush1.xpose.msra.mxu0 0.0
    %2757 = vmatprep.subr.mxu0 0.0
    %2758 = vmatpush1.xpose.msra.mxu0 0.0
    %2759 = vmatprep.subr.mxu0 0.0
    %2760 = vmatpush1.xpose.msra.mxu0 0.0
    %2761 = vmatprep.subr.mxu0 0.0
    %2762 = vmatpush1.xpose.msra.mxu0 0.0
    %2763 = vmatprep.subr.mxu0 0.0
    %2764 = vmatpush1.xpose.msra.mxu0 0.0
    %2765 = vmatprep.subr.mxu0 0.0
    %2766 = vmatpush1.xpose.msra.mxu0 0.0
    %2767 = vmatprep.subr.mxu0 0.0
    %2768 = vmatpush1.xpose.msra.mxu0 0.0
    %2769 = vmatprep.subr.mxu0 0.0
    %2770 = vmatpush1.xpose.msra.mxu0 0.0
    %2771 = vmatprep.subr.mxu0 0.0
    %2772 = vmatpush1.xpose.msra.mxu0 0.0
    %2773 = vmatprep.subr.mxu0 0.0
    %2774 = vmatpush1.xpose.msra.mxu0 0.0
    %2775 = vmatprep.subr.mxu0 0.0
    %2776 = vmatpush1.xpose.msra.mxu0 0.0
    %2777 = vmatprep.subr.mxu0 0.0
    %2778 = vmatpush1.xpose.msra.mxu0 0.0
    %2779 = vmatprep.subr.mxu0 0.0
    %2780 = vmatpush1.xpose.msra.mxu0 0.0
    %2781 = vmatprep.subr.mxu0 0.0
    %2782 = vmatpush1.xpose.msra.mxu0 0.0
    %2783 = vmatprep.subr.mxu0 0.0
    %2784 = vmatpush1.xpose.msra.mxu0 0.0
    %2785 = vmatprep.subr.mxu0 0.0
    %2786 = vmatpush1.xpose.msra.mxu0 0.0
    %2787 = vmatprep.subr.mxu0 0.0
    %2788 = vmatpush1.xpose.msra.mxu0 0.0
    %2789 = vmatprep.subr.mxu0 0.0
    %2790 = vmatpush1.xpose.msra.mxu0 0.0
    %2791 = vmatprep.subr.mxu0 0.0
    %2792 = vmatpush1.xpose.msra.mxu0 0.0
    %2793 = vmatprep.subr.mxu0 0.0
    %2794 = vmatpush1.xpose.msra.mxu0 0.0
    %2795 = vmatprep.subr.mxu0 0.0
    %2796 = vmatpush1.xpose.msra.mxu0 0.0
    %2797 = vmatprep.subr.mxu0 0.0
    %2798 = vmatpush1.xpose.msra.mxu0 0.0
    %2799 = vmatprep.subr.mxu0 0.0
    %2800 = vmatpush1.xpose.msra.mxu0 0.0
    %2801 = vmatprep.subr.mxu0 0.0
    %2802 = vmatpush1.xpose.msra.mxu0 0.0
    %2803 = vmatprep.subr.mxu0 0.0
    %2804 = vmatpush1.xpose.msra.mxu0 0.0
    %2805 = vmatprep.subr.mxu0 0.0
    %2806 = vmatpush1.xpose.msra.mxu0 0.0
    %2807 = vmatprep.subr.mxu0 0.0
    %2808 = vmatpush1.xpose.msra.mxu0 0.0
    %2809 = vmatprep.subr.mxu0 0.0
    %2810 = vmatpush1.xpose.msra.mxu0 0.0
    %2811 = vmatprep.mubr.f32.mxu0 0.0
    %2812 = vmatmul.mubr.f32.gmra.mrb[0].mxu0 %v2745
    %v2813 = vpop.f32.mrb[0].mxu0
    %v2814 = vadd.f32 0.0, %v2813
    %v2815 = vpop.f32.mrb[0].mxu0
    %2816 = vdwg.mxu0
    %v2818 = vsel %vm52, %v47, 0
    %2820 = vmatprep.subr.mxu0 0.0
    %2821 = vmatpush1.xpose.msra.mxu0 %v2818
    %2822 = vmatprep.subr.mxu0 0.0
    %2823 = vmatpush1.xpose.msra.mxu0 0.0
    %2824 = vmatprep.subr.mxu0 0.0
    %2825 = vmatpush1.xpose.msra.mxu0 0.0
    %2826 = vmatprep.subr.mxu0 0.0
    %2827 = vmatpush1.xpose.msra.mxu0 0.0
    %2828 = vmatprep.subr.mxu0 0.0
    %2829 = vmatpush1.xpose.msra.mxu0 0.0
    %2830 = vmatprep.subr.mxu0 0.0
    %2831 = vmatpush1.xpose.msra.mxu0 0.0
    %2832 = vmatprep.subr.mxu0 0.0
    %2833 = vmatpush1.xpose.msra.mxu0 0.0
    %2834 = vmatprep.subr.mxu0 0.0
    %2835 = vmatpush1.xpose.msra.mxu0 0.0
    %2836 = vmatprep.subr.mxu0 0.0
    %2837 = vmatpush1.xpose.msra.mxu0 0.0
    %2838 = vmatprep.subr.mxu0 0.0
    %2839 = vmatpush1.xpose.msra.mxu0 0.0
    %2840 = vmatprep.subr.mxu0 0.0
    %2841 = vmatpush1.xpose.msra.mxu0 0.0
    %2842 = vmatprep.subr.mxu0 0.0
    %2843 = vmatpush1.xpose.msra.mxu0 0.0
    %2844 = vmatprep.subr.mxu0 0.0
    %2845 = vmatpush1.xpose.msra.mxu0 0.0
    %2846 = vmatprep.subr.mxu0 0.0
    %2847 = vmatpush1.xpose.msra.mxu0 0.0
    %2848 = vmatprep.subr.mxu0 0.0
    %2849 = vmatpush1.xpose.msra.mxu0 0.0
    %2850 = vmatprep.subr.mxu0 0.0
    %2851 = vmatpush1.xpose.msra.mxu0 0.0
    %2852 = vmatprep.subr.mxu0 0.0
    %2853 = vmatpush1.xpose.msra.mxu0 0.0
    %2854 = vmatprep.subr.mxu0 0.0
    %2855 = vmatpush1.xpose.msra.mxu0 0.0
    %2856 = vmatprep.subr.mxu0 0.0
    %2857 = vmatpush1.xpose.msra.mxu0 0.0
    %2858 = vmatprep.subr.mxu0 0.0
    %2859 = vmatpush1.xpose.msra.mxu0 0.0
    %2860 = vmatprep.subr.mxu0 0.0
    %2861 = vmatpush1.xpose.msra.mxu0 0.0
    %2862 = vmatprep.subr.mxu0 0.0
    %2863 = vmatpush1.xpose.msra.mxu0 0.0
    %2864 = vmatprep.subr.mxu0 0.0
    %2865 = vmatpush1.xpose.msra.mxu0 0.0
    %2866 = vmatprep.subr.mxu0 0.0
    %2867 = vmatpush1.xpose.msra.mxu0 0.0
    %2868 = vmatprep.subr.mxu0 0.0
    %2869 = vmatpush1.xpose.msra.mxu0 0.0
    %2870 = vmatprep.subr.mxu0 0.0
    %2871 = vmatpush1.xpose.msra.mxu0 0.0
    %2872 = vmatprep.subr.mxu0 0.0
    %2873 = vmatpush1.xpose.msra.mxu0 0.0
    %2874 = vmatprep.subr.mxu0 0.0
    %2875 = vmatpush1.xpose.msra.mxu0 0.0
    %2876 = vmatprep.subr.mxu0 0.0
    %2877 = vmatpush1.xpose.msra.mxu0 0.0
    %2878 = vmatprep.subr.mxu0 0.0
    %2879 = vmatpush1.xpose.msra.mxu0 0.0
    %2880 = vmatprep.subr.mxu0 0.0
    %2881 = vmatpush1.xpose.msra.mxu0 0.0
    %2882 = vmatprep.subr.mxu0 0.0
    %2883 = vmatpush1.xpose.msra.mxu0 0.0
    %2884 = vmatprep.mubr.f32.mxu0 0.0
    %2885 = vmatmul.mubr.f32.gmra.mrb[0].mxu0 %v2818
    %v2886 = vpop.f32.mrb[0].mxu0
    %v2887 = vadd.f32 0.0, %v2886
    %v2888 = vpop.f32.mrb[0].mxu0
    %2889 = vdwg.mxu0
    %2890 = vst.msk [vmem:[#allocation2] sm:$0xff] %vm52, %v12
    %2891 = vst.msk [vmem:[#allocation2 + $0x8] sm:$0xff] %vm52, %v13
    %2892 = vst.msk [vmem:[#allocation2 + $0x10] sm:$0xff] %vm52, %v14
    %2893 = vst.msk [vmem:[#allocation2 + $0x18] sm:$0xff] %vm52, %v15
    %vm2894 = vcmask 138368
    %2895 = vst.msk [vmem:[#allocation2] sm:$0xff] %vm2894, %v55
    %2896 = vst.msk [vmem:[#allocation2 + $0x8] sm:$0xff] %vm2894, %v58
    %2897 = vst.msk [vmem:[#allocation2 + $0x10] sm:$0xff] %vm2894, %v61
    %2898 = vst.msk [vmem:[#allocation2 + $0x18] sm:$0xff] %vm2894, %v64
    %v2931 = vlaneseq
    %v2932 = vand.u32 %v2931, 127
    %v2933 = vadd.s32 %v2932, 4294967279
    %v2934 = vlaneseq
    %v2935 = vshrl.u32 %v2934, 7
    %v2936 = vsub.s32 %v2933, %v2935
    %v2937 = vrot.slane %v460, %v2936
    %v2938 = vlaneseq
    %v2939 = vshrl.u32 %v2938, 7
    %v2940 = vsub.s32 %v2933, %v2939
    %v2941 = vrot.slane %v463, %v2940
    %v2942 = vlaneseq
    %v2943 = vshrl.u32 %v2942, 7
    %v2944 = vsub.s32 %v2933, %v2943
    %v2945 = vrot.slane %v466, %v2944
    %v2946 = vlaneseq
    %v2947 = vshrl.u32 %v2946, 7
    %v2948 = vsub.s32 %v2933, %v2947
    %v2949 = vrot.slane %v469, %v2948
    %v2950 = vlaneseq
    %v2951 = vshrl.u32 %v2950, 7
    %v2952 = vsub.s32 %v2933, %v2951
    %v2953 = vrot.slane %v472, %v2952
    %v2954 = vlaneseq
    %v2955 = vshrl.u32 %v2954, 7
    %v2956 = vsub.s32 %v2933, %v2955
    %v2957 = vrot.slane %v475, %v2956
    %v2958 = vlaneseq
    %v2959 = vshrl.u32 %v2958, 7
    %v2960 = vsub.s32 %v2933, %v2959
    %v2961 = vrot.slane %v478, %v2960
    %v2962 = vlaneseq
    %v2963 = vshrl.u32 %v2962, 7
    %v2964 = vsub.s32 %v2933, %v2963
    %v2965 = vrot.slane %v481, %v2964
    %v2966 = vlaneseq
    %v2967 = vshrl.u32 %v2966, 7
    %v2968 = vsub.s32 %v2933, %v2967
    %v2969 = vrot.slane %v484, %v2968
    %v2970 = vlaneseq
    %v2971 = vshrl.u32 %v2970, 7
    %v2972 = vsub.s32 %v2933, %v2971
    %v2973 = vrot.slane %v487, %v2972
    %v2974 = vlaneseq
    %v2975 = vshrl.u32 %v2974, 7
    %v2976 = vsub.s32 %v2933, %v2975
    %v2977 = vrot.slane %v490, %v2976
    %v2978 = vlaneseq
    %v2979 = vshrl.u32 %v2978, 7
    %v2980 = vsub.s32 %v2933, %v2979
    %v2981 = vrot.slane %v493, %v2980
    %v2982 = vlaneseq
    %v2983 = vshrl.u32 %v2982, 7
    %v2984 = vsub.s32 %v2933, %v2983
    %v2985 = vrot.slane %v496, %v2984
    %v2986 = vlaneseq
    %v2987 = vshrl.u32 %v2986, 7
    %v2988 = vsub.s32 %v2933, %v2987
    %v2989 = vrot.slane %v499, %v2988
    %v2990 = vlaneseq
    %v2991 = vshrl.u32 %v2990, 7
    %v2992 = vsub.s32 %v2933, %v2991
    %v2993 = vrot.slane %v502, %v2992
    %v2994 = vlaneseq
    %v2995 = vshrl.u32 %v2994, 7
    %v2996 = vsub.s32 %v2933, %v2995
    %v2997 = vrot.slane %v505, %v2996
    %v2998 = vlaneseq
    %v2999 = vshrl.u32 %v2998, 7
    %v3000 = vsub.s32 %v2933, %v2999
    %v3001 = vrot.slane %v508, %v3000
    %v3002 = vlaneseq
    %v3003 = vshrl.u32 %v3002, 7
    %v3004 = vsub.s32 %v2933, %v3003
    %v3005 = vrot.slane %v511, %v3004
    %v3006 = vlaneseq
    %v3007 = vshrl.u32 %v3006, 7
    %v3008 = vsub.s32 %v2933, %v3007
    %v3009 = vrot.slane %v514, %v3008
    %v3010 = vlaneseq
    %v3011 = vshrl.u32 %v3010, 7
    %v3012 = vsub.s32 %v2933, %v3011
    %v3013 = vrot.slane %v517, %v3012
    %v3014 = vlaneseq
    %v3015 = vshrl.u32 %v3014, 7
    %v3016 = vsub.s32 %v2933, %v3015
    %v3017 = vrot.slane %v520, %v3016
    %v3018 = vlaneseq
    %v3019 = vshrl.u32 %v3018, 7
    %v3020 = vsub.s32 %v2933, %v3019
    %v3021 = vrot.slane %v523, %v3020
    %v3022 = vlaneseq
    %v3023 = vshrl.u32 %v3022, 7
    %v3024 = vsub.s32 %v2933, %v3023
    %v3025 = vrot.slane %v526, %v3024
    %v3026 = vlaneseq
    %v3027 = vshrl.u32 %v3026, 7
    %v3028 = vsub.s32 %v2933, %v3027
    %v3029 = vrot.slane %v529, %v3028
    %v3030 = vlaneseq
    %v3031 = vshrl.u32 %v3030, 7
    %v3032 = vsub.s32 %v2933, %v3031
    %v3033 = vrot.slane %v532, %v3032
    %v3034 = vlaneseq
    %v3035 = vshrl.u32 %v3034, 7
    %v3036 = vsub.s32 %v2933, %v3035
    %v3037 = vrot.slane %v535, %v3036
    %v3038 = vlaneseq
    %v3039 = vshrl.u32 %v3038, 7
    %v3040 = vsub.s32 %v2933, %v3039
    %v3041 = vrot.slane %v538, %v3040
    %v3042 = vlaneseq
    %v3043 = vshrl.u32 %v3042, 7
    %v3044 = vsub.s32 %v2933, %v3043
    %v3045 = vrot.slane %v541, %v3044
    %v3046 = vlaneseq
    %v3047 = vshrl.u32 %v3046, 7
    %v3048 = vsub.s32 %v2933, %v3047
    %v3049 = vrot.slane %v544, %v3048
    %v3050 = vlaneseq
    %v3051 = vshrl.u32 %v3050, 7
    %v3052 = vsub.s32 %v2933, %v3051
    %v3053 = vrot.slane %v547, %v3052
    %v3054 = vlaneseq
    %v3055 = vshrl.u32 %v3054, 7
    %v3056 = vsub.s32 %v2933, %v3055
    %v3057 = vrot.slane %v550, %v3056
    %v3058 = vlaneseq
    %v3059 = vshrl.u32 %v3058, 7
    %v3060 = vsub.s32 %v2933, %v3059
    %v3061 = vrot.slane %v553, %v3060
    %vm3062 = vcmask 1041409
    %v3063 = vsel %vm3062, %v2941, %v2937
    %vm3064 = vcmask 1042434
    %v3065 = vsel %vm3064, %v2945, %v3063
    %vm3066 = vcmask 1043459
    %v3067 = vsel %vm3066, %v2949, %v3065
    %vm3068 = vcmask 1044484
    %v3069 = vsel %vm3068, %v2953, %v3067
    %vm3070 = vcmask 1045509
    %v3071 = vsel %vm3070, %v2957, %v3069
    %vm3072 = vcmask 1046534
    %v3073 = vsel %vm3072, %v2961, %v3071
    %vm3074 = vcmask 1047559
    %v3075 = vsel %vm3074, %v2965, %v3073
    %v3076 = vsel %vm3062, %v2973, %v2969
    %v3077 = vsel %vm3064, %v2977, %v3076
    %v3078 = vsel %vm3066, %v2981, %v3077
    %v3079 = vsel %vm3068, %v2985, %v3078
    %v3080 = vsel %vm3070, %v2989, %v3079
    %v3081 = vsel %vm3072, %v2993, %v3080
    %v3082 = vsel %vm3074, %v2997, %v3081
    %v3083 = vsel %vm3062, %v3005, %v3001
    %v3084 = vsel %vm3064, %v3009, %v3083
    %v3085 = vsel %vm3066, %v3013, %v3084
    %v3086 = vsel %vm3068, %v3017, %v3085
    %v3087 = vsel %vm3070, %v3021, %v3086
    %v3088 = vsel %vm3072, %v3025, %v3087
    %v3089 = vsel %vm3074, %v3029, %v3088
    %v3090 = vsel %vm3062, %v3037, %v3033
    %v3091 = vsel %vm3064, %v3041, %v3090
    %v3092 = vsel %vm3066, %v3045, %v3091
    %v3093 = vsel %vm3068, %v3049, %v3092
    %v3094 = vsel %vm3070, %v3053, %v3093
    %v3095 = vsel %vm3072, %v3057, %v3094
    %v3096 = vsel %vm3074, %v3061, %v3095
    %vm3101 = vcmask 195720
    %3102 = vst.msk [vmem:[#allocation2] sm:$0xff] %vm3101, %v3075
    %3103 = vst.msk [vmem:[#allocation2 + $0x8] sm:$0xff] %vm3101, %v3082
    %3104 = vst.msk [vmem:[#allocation2 + $0x10] sm:$0xff] %vm3101, %v3089
    %3105 = vst.msk [vmem:[#allocation2 + $0x18] sm:$0xff] %vm3101, %v3096
    %v3138 = vrot.slane %v697, 7
    %v3139 = vsel %vm3062, %v3138, %v624
    %v3140 = vrot.slane %v770, 6
    %v3141 = vsel %vm3064, %v3140, %v3139
    %v3142 = vrot.slane %v843, 5
    %v3143 = vsel %vm3066, %v3142, %v3141
    %v3144 = vrot.slane %v916, 4
    %v3145 = vsel %vm3068, %v3144, %v3143
    %v3146 = vrot.slane %v989, 3
    %v3147 = vsel %vm3070, %v3146, %v3145
    %v3148 = vrot.slane %v1062, 2
    %v3149 = vsel %vm3072, %v3148, %v3147
    %v3150 = vrot.slane %v1135, 1
    %v3151 = vsel %vm3074, %v3150, %v3149
    %v3152 = vrot.slane %v1281, 7
    %v3153 = vsel %vm3062, %v3152, %v1208
    %v3154 = vrot.slane %v1354, 6
    %v3155 = vsel %vm3064, %v3154, %v3153
    %v3156 = vrot.slane %v1427, 5
    %v3157 = vsel %vm3066, %v3156, %v3155
    %v3158 = vrot.slane %v1500, 4
    %v3159 = vsel %vm3068, %v3158, %v3157
    %v3160 = vrot.slane %v1573, 3
    %v3161 = vsel %vm3070, %v3160, %v3159
    %v3162 = vrot.slane %v1646, 2
    %v3163 = vsel %vm3072, %v3162, %v3161
    %v3164 = vrot.slane %v1719, 1
    %v3165 = vsel %vm3074, %v3164, %v3163
    %v3166 = vrot.slane %v1865, 7
    %v3167 = vsel %vm3062, %v3166, %v1792
    %v3168 = vrot.slane %v1938, 6
    %v3169 = vsel %vm3064, %v3168, %v3167
    %v3170 = vrot.slane %v2011, 5
    %v3171 = vsel %vm3066, %v3170, %v3169
    %v3172 = vrot.slane %v2084, 4
    %v3173 = vsel %vm3068, %v3172, %v3171
    %v3174 = vrot.slane %v2157, 3
    %v3175 = vsel %vm3070, %v3174, %v3173
    %v3176 = vrot.slane %v2230, 2
    %v3177 = vsel %vm3072, %v3176, %v3175
    %v3178 = vrot.slane %v2303, 1
    %v3179 = vsel %vm3074, %v3178, %v3177
    %v3180 = vrot.slane %v2449, 7
    %v3181 = vsel %vm3062, %v3180, %v2376
    %v3182 = vrot.slane %v2522, 6
    %v3183 = vsel %vm3064, %v3182, %v3181
    %v3184 = vrot.slane %v2595, 5
    %v3185 = vsel %vm3066, %v3184, %v3183
    %v3186 = vrot.slane %v2668, 4
    %v3187 = vsel %vm3068, %v3186, %v3185
    %v3188 = vrot.slane %v2741, 3
    %v3189 = vsel %vm3070, %v3188, %v3187
    %v3190 = vrot.slane %v2814, 2
    %v3191 = vsel %vm3072, %v3190, %v3189
    %v3192 = vrot.slane %v2887, 1
    %v3193 = vsel %vm3074, %v3192, %v3191
    %3194 = vrot.lane.b32.xlu0 %v3151, 24
    %v3195 = vpop.permute.xlu0 %3194
    %3196 = vrot.lane.b32.xlu0 %v3165, 24
    %v3197 = vpop.permute.xlu0 %3196
    %3198 = vrot.lane.b32.xlu0 %v3179, 24
    %v3199 = vpop.permute.xlu0 %3198
    %3200 = vrot.lane.b32.xlu0 %v3193, 24
    %v3201 = vpop.permute.xlu0 %3200
    %vm3206 = vcmask 253120
    %3207 = vst.msk [vmem:[#allocation2] sm:$0xff] %vm3206, %v3195
    %3208 = vst.msk [vmem:[#allocation2 + $0x8] sm:$0xff] %vm3206, %v3197
    %3209 = vst.msk [vmem:[#allocation2 + $0x10] sm:$0xff] %vm3206, %v3199
    %3210 = vst.msk [vmem:[#allocation2 + $0x18] sm:$0xff] %vm3206, %v3201
    %v3211 = vsel %vm3064, %v3138, %v624
    %v3212 = vsel %vm3066, %v3140, %v3211
    %v3213 = vsel %vm3068, %v3142, %v3212
    %v3214 = vsel %vm3070, %v3144, %v3213
    %v3215 = vsel %vm3072, %v3146, %v3214
    %v3216 = vsel %vm3074, %v3148, %v3215
    %v3217 = vsel %vm3062, %v1208, %v3150
    %v3218 = vsel %vm3064, %v3152, %v3217
    %v3219 = vsel %vm3066, %v3154, %v3218
    %v3220 = vsel %vm3068, %v3156, %v3219
    %v3221 = vsel %vm3070, %v3158, %v3220
    %v3222 = vsel %vm3072, %v3160, %v3221
    %v3223 = vsel %vm3074, %v3162, %v3222
    %v3224 = vsel %vm3062, %v1792, %v3164
    %v3225 = vsel %vm3064, %v3166, %v3224
    %v3226 = vsel %vm3066, %v3168, %v3225
    %v3227 = vsel %vm3068, %v3170, %v3226
    %v3228 = vsel %vm3070, %v3172, %v3227
    %v3229 = vsel %vm3072, %v3174, %v3228
    %v3230 = vsel %vm3074, %v3176, %v3229
    %v3231 = vsel %vm3062, %v2376, %v3178
    %v3232 = vsel %vm3064, %v3180, %v3231
    %v3233 = vsel %vm3066, %v3182, %v3232
    %v3234 = vsel %vm3068, %v3184, %v3233
    %v3235 = vsel %vm3070, %v3186, %v3234
    %v3236 = vsel %vm3072, %v3188, %v3235
    %v3237 = vsel %vm3074, %v3190, %v3236
    %3238 = vrot.lane.b32.xlu0 %v3216, 30
    %v3239 = vpop.permute.xlu0 %3238
    %3240 = vrot.lane.b32.xlu0 %v3223, 30
    %v3241 = vpop.permute.xlu0 %3240
    %3242 = vrot.lane.b32.xlu0 %v3230, 30
    %v3243 = vpop.permute.xlu0 %3242
    %3244 = vrot.lane.b32.xlu0 %v3237, 30
    %v3245 = vpop.permute.xlu0 %3244
    %3246 = vrot.lane.b32.xlu0 %v3192, 30
    %v3247 = vpop.permute.xlu0 %3246
    %vm3253 = vcmask 302329
    %3254 = vst.msk [vmem:[#allocation2 - $0x1] sm:$0xfe] %vm3253, %v3239
    %vm3255 = vcmask 302328
    %3256 = vst.msk [vmem:[#allocation2 + $0x7] sm:$0xff] %vm3255, %v3241
    %3257 = vst.msk [vmem:[#allocation2 + $0xf] sm:$0xff] %vm3255, %v3243
    %3258 = vst.msk [vmem:[#allocation2 + $0x17] sm:$0xff] %vm3255, %v3245
    %vm3259 = vcmask 295160
    %3260 = vst.msk [vmem:[#allocation2 + $0x1f] sm:$0x1] %vm3259, %v3247
    %v3261 = vsel %vm3066, %v3138, %v624
    %v3262 = vsel %vm3068, %v3140, %v3261
    %v3263 = vsel %vm3070, %v3142, %v3262
    %v3264 = vsel %vm3072, %v3144, %v3263
    %v3265 = vsel %vm3074, %v3146, %v3264
    %v3266 = vsel %vm3062, %v3150, %v3148
    %v3267 = vsel %vm3064, %v1208, %v3266
    %v3268 = vsel %vm3066, %v3152, %v3267
    %v3269 = vsel %vm3068, %v3154, %v3268
    %v3270 = vsel %vm3070, %v3156, %v3269
    %v3271 = vsel %vm3072, %v3158, %v3270
    %v3272 = vsel %vm3074, %v3160, %v3271
    %v3273 = vsel %vm3062, %v3164, %v3162
    %v3274 = vsel %vm3064, %v1792, %v3273
    %v3275 = vsel %vm3066, %v3166, %v3274
    %v3276 = vsel %vm3068, %v3168, %v3275
    %v3277 = vsel %vm3070, %v3170, %v3276
    %v3278 = vsel %vm3072, %v3172, %v3277
    %v3279 = vsel %vm3074, %v3174, %v3278
    %v3280 = vsel %vm3062, %v3178, %v3176
    %v3281 = vsel %vm3064, %v2376, %v3280
    %v3282 = vsel %vm3066, %v3180, %v3281
    %v3283 = vsel %vm3068, %v3182, %v3282
    %v3284 = vsel %vm3070, %v3184, %v3283
    %v3285 = vsel %vm3072, %v3186, %v3284
    %v3286 = vsel %vm3074, %v3188, %v3285
    %v3287 = vsel %vm3062, %v3192, %v3190
    %3288 = vrot.lane.b32.xlu0 %v3265, 35
    %v3289 = vpop.permute.xlu0 %3288
    %3290 = vrot.lane.b32.xlu0 %v3272, 35
    %v3291 = vpop.permute.xlu0 %3290
    %3292 = vrot.lane.b32.xlu0 %v3279, 35
    %v3293 = vpop.permute.xlu0 %3292
    %3294 = vrot.lane.b32.xlu0 %v3286, 35
    %v3295 = vpop.permute.xlu0 %3294
    %3296 = vrot.lane.b32.xlu0 %v3287, 35
    %v3297 = vpop.permute.xlu0 %3296
    %vm3303 = vcmask 343338
    %3304 = vst.msk [vmem:[#allocation2 - $0x2] sm:$0xfc] %vm3303, %v3289
    %vm3305 = vcmask 343336
    %3306 = vst.msk [vmem:[#allocation2 + $0x6] sm:$0xff] %vm3305, %v3291
    %3307 = vst.msk [vmem:[#allocation2 + $0xe] sm:$0xff] %vm3305, %v3293
    %3308 = vst.msk [vmem:[#allocation2 + $0x16] sm:$0xff] %vm3305, %v3295
    %vm3309 = vcmask 337192
    %3310 = vst.msk [vmem:[#allocation2 + $0x1e] sm:$0x3] %vm3309, %v3297
    %v3311 = vsel %vm3068, %v3138, %v624
    %v3312 = vsel %vm3070, %v3140, %v3311
    %v3313 = vsel %vm3072, %v3142, %v3312
    %v3314 = vsel %vm3074, %v3144, %v3313
    %v3315 = vsel %vm3062, %v3148, %v3146
    %v3316 = vsel %vm3064, %v3150, %v3315
    %v3317 = vsel %vm3066, %v1208, %v3316
    %v3318 = vsel %vm3068, %v3152, %v3317
    %v3319 = vsel %vm3070, %v3154, %v3318
    %v3320 = vsel %vm3072, %v3156, %v3319
    %v3321 = vsel %vm3074, %v3158, %v3320
    %v3322 = vsel %vm3062, %v3162, %v3160
    %v3323 = vsel %vm3064, %v3164, %v3322
    %v3324 = vsel %vm3066, %v1792, %v3323
    %v3325 = vsel %vm3068, %v3166, %v3324
    %v3326 = vsel %vm3070, %v3168, %v3325
    %v3327 = vsel %vm3072, %v3170, %v3326
    %v3328 = vsel %vm3074, %v3172, %v3327
    %v3329 = vsel %vm3062, %v3176, %v3174
    %v3330 = vsel %vm3064, %v3178, %v3329
    %v3331 = vsel %vm3066, %v2376, %v3330
    %v3332 = vsel %vm3068, %v3180, %v3331
    %v3333 = vsel %vm3070, %v3182, %v3332
    %v3334 = vsel %vm3072, %v3184, %v3333
    %v3335 = vsel %vm3074, %v3186, %v3334
    %v3336 = vsel %vm3062, %v3190, %v3188
    %v3337 = vsel %vm3064, %v3192, %v3336
    %3338 = vrot.lane.b32.xlu0 %v3314, 39
    %v3339 = vpop.permute.xlu0 %3338
    %3340 = vrot.lane.b32.xlu0 %v3321, 39
    %v3341 = vpop.permute.xlu0 %3340
    %3342 = vrot.lane.b32.xlu0 %v3328, 39
    %v3343 = vpop.permute.xlu0 %3342
    %3344 = vrot.lane.b32.xlu0 %v3335, 39
    %v3345 = vpop.permute.xlu0 %3344
    %3346 = vrot.lane.b32.xlu0 %v3337, 39
    %v3347 = vpop.permute.xlu0 %3346
    %vm3353 = vcmask 376147
    %3354 = vst.msk [vmem:[#allocation2 - $0x3] sm:$0xf8] %vm3353, %v3339
    %vm3355 = vcmask 376144
    %3356 = vst.msk [vmem:[#allocation2 + $0x5] sm:$0xff] %vm3355, %v3341
    %3357 = vst.msk [vmem:[#allocation2 + $0xd] sm:$0xff] %vm3355, %v3343
    %3358 = vst.msk [vmem:[#allocation2 + $0x15] sm:$0xff] %vm3355, %v3345
    %vm3359 = vcmask 371024
    %3360 = vst.msk [vmem:[#allocation2 + $0x1d] sm:$0x7] %vm3359, %v3347
    %v3361 = vsel %vm3070, %v3138, %v624
    %v3362 = vsel %vm3072, %v3140, %v3361
    %v3363 = vsel %vm3074, %v3142, %v3362
    %v3364 = vsel %vm3062, %v3146, %v3144
    %v3365 = vsel %vm3064, %v3148, %v3364
    %v3366 = vsel %vm3066, %v3150, %v3365
    %v3367 = vsel %vm3068, %v1208, %v3366
    %v3368 = vsel %vm3070, %v3152, %v3367
    %v3369 = vsel %vm3072, %v3154, %v3368
    %v3370 = vsel %vm3074, %v3156, %v3369
    %v3371 = vsel %vm3062, %v3160, %v3158
    %v3372 = vsel %vm3064, %v3162, %v3371
    %v3373 = vsel %vm3066, %v3164, %v3372
    %v3374 = vsel %vm3068, %v1792, %v3373
    %v3375 = vsel %vm3070, %v3166, %v3374
    %v3376 = vsel %vm3072, %v3168, %v3375
    %v3377 = vsel %vm3074, %v3170, %v3376
    %v3378 = vsel %vm3062, %v3174, %v3172
    %v3379 = vsel %vm3064, %v3176, %v3378
    %v3380 = vsel %vm3066, %v3178, %v3379
    %v3381 = vsel %vm3068, %v2376, %v3380
    %v3382 = vsel %vm3070, %v3180, %v3381
    %v3383 = vsel %vm3072, %v3182, %v3382
    %v3384 = vsel %vm3074, %v3184, %v3383
    %v3385 = vsel %vm3062, %v3188, %v3186
    %v3386 = vsel %vm3064, %v3190, %v3385
    %v3387 = vsel %vm3066, %v3192, %v3386
    %3388 = vrot.lane.b32.xlu0 %v3363, 42
    %v3389 = vpop.permute.xlu0 %3388
    %3390 = vrot.lane.b32.xlu0 %v3370, 42
    %v3391 = vpop.permute.xlu0 %3390
    %3392 = vrot.lane.b32.xlu0 %v3377, 42
    %v3393 = vpop.permute.xlu0 %3392
    %3394 = vrot.lane.b32.xlu0 %v3384, 42
    %v3395 = vpop.permute.xlu0 %3394
    %3396 = vrot.lane.b32.xlu0 %v3387, 42
    %v3397 = vpop.permute.xlu0 %3396
    %vm3403 = vcmask 400756
    %3404 = vst.msk [vmem:[#allocation2 - $0x4] sm:$0xf0] %vm3403, %v3389
    %vm3405 = vcmask 400752
    %3406 = vst.msk [vmem:[#allocation2 + $0x4] sm:$0xff] %vm3405, %v3391
    %3407 = vst.msk [vmem:[#allocation2 + $0xc] sm:$0xff] %vm3405, %v3393
    %3408 = vst.msk [vmem:[#allocation2 + $0x14] sm:$0xff] %vm3405, %v3395
    %vm3409 = vcmask 396656
    %3410 = vst.msk [vmem:[#allocation2 + $0x1c] sm:$0xf] %vm3409, %v3397
    %v3411 = vsel %vm3072, %v3138, %v624
    %v3412 = vsel %vm3074, %v3140, %v3411
    %v3413 = vsel %vm3062, %v3144, %v3142
    %v3414 = vsel %vm3064, %v3146, %v3413
    %v3415 = vsel %vm3066, %v3148, %v3414
    %v3416 = vsel %vm3068, %v3150, %v3415
    %v3417 = vsel %vm3070, %v1208, %v3416
    %v3418 = vsel %vm3072, %v3152, %v3417
    %v3419 = vsel %vm3074, %v3154, %v3418
    %v3420 = vsel %vm3062, %v3158, %v3156
    %v3421 = vsel %vm3064, %v3160, %v3420
    %v3422 = vsel %vm3066, %v3162, %v3421
    %v3423 = vsel %vm3068, %v3164, %v3422
    %v3424 = vsel %vm3070, %v1792, %v3423
    %v3425 = vsel %vm3072, %v3166, %v3424
    %v3426 = vsel %vm3074, %v3168, %v3425
    %v3427 = vsel %vm3062, %v3172, %v3170
    %v3428 = vsel %vm3064, %v3174, %v3427
    %v3429 = vsel %vm3066, %v3176, %v3428
    %v3430 = vsel %vm3068, %v3178, %v3429
    %v3431 = vsel %vm3070, %v2376, %v3430
    %v3432 = vsel %vm3072, %v3180, %v3431
    %v3433 = vsel %vm3074, %v3182, %v3432
    %v3434 = vsel %vm3062, %v3186, %v3184
    %v3435 = vsel %vm3064, %v3188, %v3434
    %v3436 = vsel %vm3066, %v3190, %v3435
    %v3437 = vsel %vm3068, %v3192, %v3436
    %3438 = vrot.lane.b32.xlu0 %v3412, 44
    %v3439 = vpop.permute.xlu0 %3438
    %3440 = vrot.lane.b32.xlu0 %v3419, 44
    %v3441 = vpop.permute.xlu0 %3440
    %3442 = vrot.lane.b32.xlu0 %v3426, 44
    %v3443 = vpop.permute.xlu0 %3442
    %3444 = vrot.lane.b32.xlu0 %v3433, 44
    %v3445 = vpop.permute.xlu0 %3444
    %3446 = vrot.lane.b32.xlu0 %v3437, 44
    %v3447 = vpop.permute.xlu0 %3446
    %vm3453 = vcmask 417165
    %3454 = vst.msk [vmem:[#allocation2 - $0x5] sm:$0xe0] %vm3453, %v3439
    %vm3455 = vcmask 417160
    %3456 = vst.msk [vmem:[#allocation2 + $0x3] sm:$0xff] %vm3455, %v3441
    %3457 = vst.msk [vmem:[#allocation2 + $0xb] sm:$0xff] %vm3455, %v3443
    %3458 = vst.msk [vmem:[#allocation2 + $0x13] sm:$0xff] %vm3455, %v3445
    %vm3459 = vcmask 414088
    %3460 = vst.msk [vmem:[#allocation2 + $0x1b] sm:$0x1f] %vm3459, %v3447
    %v3461 = vsel %vm3074, %v3138, %v624
    %v3462 = vsel %vm3062, %v3142, %v3140
    %v3463 = vsel %vm3064, %v3144, %v3462
    %v3464 = vsel %vm3066, %v3146, %v3463
    %v3465 = vsel %vm3068, %v3148, %v3464
    %v3466 = vsel %vm3070, %v3150, %v3465
    %v3467 = vsel %vm3072, %v1208, %v3466
    %v3468 = vsel %vm3074, %v3152, %v3467
    %v3469 = vsel %vm3062, %v3156, %v3154
    %v3470 = vsel %vm3064, %v3158, %v3469
    %v3471 = vsel %vm3066, %v3160, %v3470
    %v3472 = vsel %vm3068, %v3162, %v3471
    %v3473 = vsel %vm3070, %v3164, %v3472
    %v3474 = vsel %vm3072, %v1792, %v3473
    %v3475 = vsel %vm3074, %v3166, %v3474
    %v3476 = vsel %vm3062, %v3170, %v3168
    %v3477 = vsel %vm3064, %v3172, %v3476
    %v3478 = vsel %vm3066, %v3174, %v3477
    %v3479 = vsel %vm3068, %v3176, %v3478
    %v3480 = vsel %vm3070, %v3178, %v3479
    %v3481 = vsel %vm3072, %v2376, %v3480
    %v3482 = vsel %vm3074, %v3180, %v3481
    %v3483 = vsel %vm3062, %v3184, %v3182
    %v3484 = vsel %vm3064, %v3186, %v3483
    %v3485 = vsel %vm3066, %v3188, %v3484
    %v3486 = vsel %vm3068, %v3190, %v3485
    %v3487 = vsel %vm3070, %v3192, %v3486
    %3488 = vrot.lane.b32.xlu0 %v3461, 45
    %v3489 = vpop.permute.xlu0 %3488
    %3490 = vrot.lane.b32.xlu0 %v3468, 45
    %v3491 = vpop.permute.xlu0 %3490
    %3492 = vrot.lane.b32.xlu0 %v3475, 45
    %v3493 = vpop.permute.xlu0 %3492
    %3494 = vrot.lane.b32.xlu0 %v3482, 45
    %v3495 = vpop.permute.xlu0 %3494
    %3496 = vrot.lane.b32.xlu0 %v3487, 45
    %v3497 = vpop.permute.xlu0 %3496
    %vm3503 = vcmask 425374
    %3504 = vst.msk [vmem:[#allocation2 - $0x6] sm:$0xc0] %vm3503, %v3489
    %vm3505 = vcmask 425368
    %3506 = vst.msk [vmem:[#allocation2 + $0x2] sm:$0xff] %vm3505, %v3491
    %3507 = vst.msk [vmem:[#allocation2 + $0xa] sm:$0xff] %vm3505, %v3493
    %3508 = vst.msk [vmem:[#allocation2 + $0x12] sm:$0xff] %vm3505, %v3495
    %vm3509 = vcmask 423320
    %3510 = vst.msk [vmem:[#allocation2 + $0x1a] sm:$0x3f] %vm3509, %v3497
    // Predicated region
    $region10: #{tpu_custom_call.1} parent=1 // pred_check
      _
    $region11: #{tpu_custom_call.1} parent=1 // pred_check_branch
      %3512 = sbr.rel (0) target = $region13
    $region12: #{tpu_custom_call.1} parent=1 // pred_region
      %s3514 = ssub.s32 512, 512
      %3515 = vsyncadd [#allocation3], %s3514
      %s3516 = sshll.u32 [#allocation2], 4
      %s3517 = int_to_ptr.vmem [resolvable:$true] %s3516
      %3522 = dma.vmem_to_hbm [thread:$0]  %s3517, 512, %s2, [#allocation3], 128, 128, 8
    $region13: #{tpu_custom_call.1} parent=1 // pred_fallthru
      _
    // Predicated region
    $region14: #{tpu_custom_call.1} parent=1 // pred_check
      _
    $region15: #{tpu_custom_call.1} parent=1 // pred_check_branch
      %3524 = sbr.rel (0) target = $region17
    $region16: #{tpu_custom_call.1} parent=1 // pred_region
      %3525 = dma.done [#allocation3], 512
    $region17: #{tpu_custom_call.1} parent=1 // pred_fallthru
      _
    %3526 = vsyncpa [#allocation3], 1

</llo_original>
